<compile_context>
chip_gen: v5e
topology: v5e:2x2
jax: 0.10.0
libtpu: 0.0.40
codegen_flags: <defaults>
</compile_context>

<pallas_src>
import math
import numpy as np

import jax
import jax.numpy as jnp
from jax.experimental import pallas as pl
from jax.experimental.pallas import tpu as pltpu

# ----------------------------- configuration -------------------------------
B = 2            # batch
IN_CHANS = 2     # channels of x (y supplies the remaining 4 - IN_CHANS)
IMG = 16         # H = W
PATCH = 4
HO = WO = IMG // PATCH
S = HO * WO      # num patches / sequence length = 16
D = 96           # embed dim (conv1 out channels, MSA hidden size)
NH = 8           # attention heads
HD = D // NH     # head dim = 12
D4 = 4 * D       # MLP hidden = 384
CP = 4 * PATCH * PATCH   # patch im2col feature size = 64
NTAP = 9         # 3x3 conv taps
LN_EPS = 1e-6


# ---------------------- fused EEBlock Pallas kernel -------------------------
def ee_block_kernel(cols_ref, wm_ref, tbig_ref, bias0_ref,
                    ln1g_ref, ln1b_ref, wqkv_ref, bqkv_ref, wo_ref, bo_ref,
                    ln2g_ref, ln2b_ref, w1t_ref, b1_ref, w2t_ref, b2_ref,
                    o_ref, y_ref):
    f32 = jnp.float32

    # ---- fused patch-embed + 3x3 grouped conv ------------------------------
    # Per-tap merged weights Wm_t = Wp @ W_t were folded on the host, so each
    # tap is a single (S, 64) @ (64, 96) matmul; the 9 results are stacked
    # into a (144, 96) VMEM slab and combined with ONE (16,144)@(144,96)
    # static spatial-selection matmul (handles the zero padding).  All bias
    # terms are precomputed into bias0 (S, 96).
    cols = cols_ref[0]                                                  # (S, 64)
    for t in range(NTAP):                                               # static unroll
        y_ref[pl.ds(t * S, S), :] = jnp.dot(cols, wm_ref[t],
                                            preferred_element_type=f32)
    seq = jnp.dot(tbig_ref[...], y_ref[...],
                  preferred_element_type=f32) + bias0_ref[...]          # (S, D)

    def layernorm(z, g, b):
        mu = jnp.mean(z, axis=-1, keepdims=True)
        var = jnp.mean(jnp.square(z - mu), axis=-1, keepdims=True)
        return (z - mu) * jax.lax.rsqrt(var + LN_EPS) * g + b

    # ---- attention sub-block -----------------------------------------------
    resid = seq
    xn = layernorm(seq, ln1g_ref[...], ln1b_ref[...])
    # fused lane-dense QKV projection: (S, 96) @ (96, 288)
    qkv = jnp.dot(xn, wqkv_ref[...], preferred_element_type=f32) + bqkv_ref[...]

    inv_sqrt_hd = 1.0 / math.sqrt(HD)
    ctx_heads = []
    for h in range(NH):                                  # static unroll
        q = qkv[:, h * HD:(h + 1) * HD]                  # (S, HD)
        k = qkv[:, D + h * HD:D + (h + 1) * HD]
        v = qkv[:, 2 * D + h * HD:2 * D + (h + 1) * HD]
        scores = jax.lax.dot_general(
            q, k, (((1,), (1,)), ((), ())),
            preferred_element_type=f32) * inv_sqrt_hd                   # (S, S)
        scores = scores - jnp.max(scores, axis=-1, keepdims=True)
        e = jnp.exp(scores)
        p_attn = e * pl.reciprocal(jnp.sum(e, axis=-1, keepdims=True), approx=True)
        ctx_heads.append(jnp.dot(p_attn, v, preferred_element_type=f32))  # (S, HD)
    ctx = jnp.concatenate(ctx_heads, axis=-1)                           # (S, D)
    attn_out = jnp.dot(ctx, wo_ref[...], preferred_element_type=f32) + bo_ref[...]
    x1 = attn_out + resid

    # ---- MLP sub-block ------------------------------------------------------
    xn2 = layernorm(x1, ln2g_ref[...], ln2b_ref[...])
    hid = jnp.dot(xn2, w1t_ref[...], preferred_element_type=f32) + b1_ref[...]
    # TODO(synk): torch uses exact erf-based GELU; tanh approximation is used
    # here (EUP tanh, max deviation ~3e-4).
    hid = 0.5 * hid * (1.0 + jnp.tanh(0.7978845608028654 *
                                      (hid + 0.044715 * hid * hid * hid)))
    mlp = jnp.dot(hid, w2t_ref[...], preferred_element_type=f32) + b2_ref[...]

    o_ref[0] = (x1 + mlp).astype(o_ref.dtype)


# ------------------------- parameter construction ---------------------------
def grouped_conv_to_dense(w, cin_total, groups):
    """w: (cout, cin_per_g, kh, kw) -> block-diagonal dense (cin_total*kh*kw, cout).
    im2col feature ordering is (cin, kh, kw)."""
    w = np.asarray(w, dtype=np.float32)
    cout, cin_g, kh, kw = w.shape
    cout_g = cout // groups
    dense = np.zeros((cin_total * kh * kw, cout), np.float32)
    for g in range(groups):
        for ci in range(cin_g):
            cin = g * cin_g + ci
            blk = w[g * cout_g:(g + 1) * cout_g, ci].reshape(cout_g, kh * kw)
            dense[cin * kh * kw:(cin + 1) * kh * kw,
                  g * cout_g:(g + 1) * cout_g] = blk.T
    return dense


def grouped_conv_to_taps(w, cin_total, groups):
    """w: (cout, cin_per_g, 3, 3) -> per-tap block-diagonal dense (9, cin_total, cout)."""
    w = np.asarray(w, dtype=np.float32)
    cout, cin_g, kh, kw = w.shape
    cout_g = cout // groups
    taps = np.zeros((kh * kw, cin_total, cout), np.float32)
    for g in range(groups):
        for ci in range(cin_g):
            cin = g * cin_g + ci
            for a in range(kh):
                for b_ in range(kw):
                    taps[a * kw + b_, cin, g * cout_g:(g + 1) * cout_g] = \
                        w[g * cout_g:(g + 1) * cout_g, ci, a, b_]
    return taps


def build_tap_selection(ho, wo):
    """T[t, p, q] = 1 iff output pixel p reads (valid, non-padded) pixel q for tap t."""
    t_sel = np.zeros((9, ho * wo, ho * wo), np.float32)
    for kh in range(3):
        for kw in range(3):
            t = kh * 3 + kw
            for i in range(ho):
                for j in range(wo):
                    si, sj = i + kh - 1, j + kw - 1
                    if 0 <= si < ho and 0 <= sj < wo:
                        t_sel[t, i * wo + j, si * wo + sj] = 1.0
    return t_sel


def init_raw_params(key):
    """Raw weights in torch layout (Conv2d: (out, in/g, kh, kw); Linear: (out, in))."""
    keys = jax.random.split(key, 16)

    def rnd(k, shape, scale=0.02):
        return (scale * jax.random.normal(k, shape)).astype(jnp.float32)

    w_conv = rnd(keys[0], (128, 4 // IN_CHANS, PATCH, PATCH), 0.1)   # Conv2d(4,128,4,4,g=2)
    b_conv = rnd(keys[1], (128,), 0.1)
    w_conv1 = rnd(keys[2], (D, 128 // 32, 3, 3), 0.1)                # Conv2d(128,96,3,g=32)
    b_conv1 = rnd(keys[3], (D,), 0.1)

    wq = rnd(keys[4], (D, D));  bq = rnd(keys[5], (D,))
    wk = rnd(keys[6], (D, D));  bk = rnd(keys[7], (D,))
    wv = rnd(keys[8], (D, D));  bv = rnd(keys[9], (D,))
    wo = rnd(keys[10], (D, D)); bo = rnd(keys[11], (D,))
    w1 = rnd(keys[12], (D4, D)); b1 = rnd(keys[13], (D4,))
    w2 = rnd(keys[14], (D, D4)); b2 = rnd(keys[15], (D,))

    return dict(w_conv=w_conv, b_conv=b_conv, w_conv1=w_conv1, b_conv1=b_conv1,
                wq=wq, bq=bq, wk=wk, bk=bk, wv=wv, bv=bv, wo=wo, bo=bo,
                w1=w1, b1=b1, w2=w2, b2=b2)


def build_kernel_params(raw):
    """Host-side exact weight folding: patch-embed conv merged into the 3x3
    grouped conv's per-tap weights; all bias terms merged into bias0."""
    wp = grouped_conv_to_dense(raw["w_conv"], 4, IN_CHANS)        # (64, 128)
    taps = grouped_conv_to_taps(raw["w_conv1"], 128, 32)          # (9, 128, 96)
    tsel = build_tap_selection(HO, WO)                            # (9, S, S)
    bp = np.asarray(raw["b_conv"], np.float32)                    # (128,)
    b1c = np.asarray(raw["b_conv1"], np.float32)                  # (96,)

    wm = np.einsum("fc,tcd->tfd", wp, taps)                       # (9, 64, 96)
    bias_tap = np.einsum("c,tcd->td", bp, taps)                   # (9, 96)
    rowmask = tsel.sum(axis=2)                                    # (9, S) in {0,1}
    bias0 = rowmask.T @ bias_tap + b1c[None, :]                   # (S, 96)
    tbig = tsel.transpose(1, 0, 2).reshape(S, NTAP * S)           # (S, 144)

    wq, wk, wv = (np.asarray(raw[n], np.float32) for n in ("wq", "wk", "wv"))
    bq, bk, bv = (np.asarray(raw[n], np.float32) for n in ("bq", "bk", "bv"))

    return dict(
        wm=jnp.asarray(wm),
        tbig=jnp.asarray(tbig),
        bias0=jnp.asarray(bias0),
        ln1g=jnp.ones((1, D), jnp.float32), ln1b=jnp.zeros((1, D), jnp.float32),
        ln2g=jnp.ones((1, D), jnp.float32), ln2b=jnp.zeros((1, D), jnp.float32),
        wqkv=jnp.asarray(np.concatenate([wq.T, wk.T, wv.T], axis=1)),   # (96, 288)
        bqkv=jnp.asarray(np.concatenate([bq, bk, bv]).reshape(1, 3 * D)),
        wo=jnp.asarray(np.asarray(raw["wo"], np.float32).T),            # (96, 96)
        bo=jnp.asarray(np.asarray(raw["bo"], np.float32).reshape(1, D)),
        w1t=jnp.asarray(np.asarray(raw["w1"], np.float32).T),           # (96, 384)
        b1=jnp.asarray(np.asarray(raw["b1"], np.float32).reshape(1, D4)),
        w2t=jnp.asarray(np.asarray(raw["w2"], np.float32).T),           # (384, 96)
        b2=jnp.asarray(np.asarray(raw["b2"], np.float32).reshape(1, D)),
    )


# ------------------------------ forward pass --------------------------------
def ee_block_forward(x, y, p):
    b = x.shape[0]
    assert x.shape[2] == IMG and x.shape[3] == IMG

    xy = jnp.concatenate([x, y], axis=1)                     # (B, 4, H, W)
    # patch im2col (feature order (cin, kh, kw)); pure layout op in the wrapper
    cols = (xy.reshape(b, 4, HO, PATCH, WO, PATCH)
              .transpose(0, 2, 4, 1, 3, 5)
              .reshape(b, S, CP))                            # (B, S, 64)

    def full_spec(shape):
        rank = len(shape)
        return pl.BlockSpec(shape, lambda i, _r=rank: (0,) * _r)

    operands = [cols, p["wm"], p["tbig"], p["bias0"],
                p["ln1g"], p["ln1b"], p["wqkv"], p["bqkv"], p["wo"], p["bo"],
                p["ln2g"], p["ln2b"], p["w1t"], p["b1"], p["w2t"], p["b2"]]
    in_specs = [pl.BlockSpec((1, S, CP), lambda i: (i, 0, 0))] + \
               [full_spec(op.shape) for op in operands[1:]]

    # self.norm is None in the default config -> skipped
    return pl.pallas_call(
        ee_block_kernel,
        out_shape=jax.ShapeDtypeStruct((b, S, D), jnp.float32),
        grid=(b,),
        in_specs=in_specs,
        out_specs=pl.BlockSpec((1, S, D), lambda i: (i, 0, 0)),
        scratch_shapes=[pltpu.VMEM((NTAP * S, D), jnp.float32)],
        compiler_params=pltpu.CompilerParams(dimension_semantics=("parallel",)),
    )(*operands)


# --------------------------- pure-JAX reference ------------------------------
def ee_block_reference(x, y, raw):
    b = x.shape[0]
    xy = jnp.concatenate([x, y], axis=1)                                 # (B,4,H,W)
    feat = jax.lax.conv_general_dilated(
        xy, raw["w_conv"], window_strides=(PATCH, PATCH), padding="VALID",
        dimension_numbers=("NCHW", "OIHW", "NCHW"),
        feature_group_count=IN_CHANS) + raw["b_conv"].reshape(1, -1, 1, 1)
    z = jax.lax.conv_general_dilated(
        feat, raw["w_conv1"], window_strides=(1, 1), padding=((1, 1), (1, 1)),
        dimension_numbers=("NCHW", "OIHW", "NCHW"),
        feature_group_count=32) + raw["b_conv1"].reshape(1, -1, 1, 1)
    seq = z.reshape(b, D, S).transpose(0, 2, 1)                          # (B,S,D)

    def ln(t):
        mu = jnp.mean(t, -1, keepdims=True)
        var = jnp.mean((t - mu) ** 2, -1, keepdims=True)
        return (t - mu) / jnp.sqrt(var + LN_EPS)

    h0 = seq
    xn = ln(seq)
    q = xn @ raw["wq"].T + raw["bq"]
    k = xn @ raw["wk"].T + raw["bk"]
    v = xn @ raw["wv"].T + raw["bv"]

    def split(t):
        return t.reshape(b, S, NH, HD).transpose(0, 2, 1, 3)             # (B,NH,S,HD)

    qh, kh, vh = split(q), split(k), split(v)
    scores = jnp.einsum("bhqd,bhkd->bhqk", qh, kh) / math.sqrt(HD)
    p_attn = jax.nn.softmax(scores, axis=-1)
    ctx = jnp.einsum("bhqk,bhkd->bhqd", p_attn, vh)
    ctx = ctx.transpose(0, 2, 1, 3).reshape(b, S, D)
    attn_out = ctx @ raw["wo"].T + raw["bo"]
    x1 = attn_out + h0

    xn2 = ln(x1)
    hid = xn2 @ raw["w1"].T + raw["b1"]
    hid = jax.nn.gelu(hid, approximate=True)
    mlp = hid @ raw["w2"].T + raw["b2"]
    return x1 + mlp


# ----------------------------------- main ------------------------------------
if __name__ == "__main__":
    root = jax.random.PRNGKey(0)
    k_params, k_x, k_y = jax.random.split(root, 3)

    raw = init_raw_params(k_params)
    params = build_kernel_params(raw)
    x = jax.random.normal(k_x, (B, IN_CHANS, IMG, IMG), jnp.float32)
    y = jax.random.normal(k_y, (B, 4 - IN_CHANS, IMG, IMG), jnp.float32)

    fwd = jax.jit(ee_block_forward)
    out = jax.block_until_ready(fwd(x, y, params))
    assert out.shape == (B, S, D)
    assert bool(jnp.all(jnp.isfinite(out)))

    ref = jax.block_until_ready(jax.jit(ee_block_reference)(x, y, raw))
    np.testing.assert_allclose(np.asarray(out), np.asarray(ref), rtol=2e-2, atol=2e-2)

    print("KERNEL_OK")
</pallas_src>

<mosaic_0001>
module attributes {stable_mosaic.version = 11 : i64} {
  func.func @ee_block_kernel(%arg0: i32, %arg1: memref<1x16x64xf32, #tpu.memory_space<vmem>>, %arg2: memref<9x64x96xf32, #tpu.memory_space<vmem>>, %arg3: memref<16x144xf32, #tpu.memory_space<vmem>>, %arg4: memref<16x96xf32, #tpu.memory_space<vmem>>, %arg5: memref<1x96xf32, #tpu.memory_space<vmem>>, %arg6: memref<1x96xf32, #tpu.memory_space<vmem>>, %arg7: memref<96x288xf32, #tpu.memory_space<vmem>>, %arg8: memref<1x288xf32, #tpu.memory_space<vmem>>, %arg9: memref<96x96xf32, #tpu.memory_space<vmem>>, %arg10: memref<1x96xf32, #tpu.memory_space<vmem>>, %arg11: memref<1x96xf32, #tpu.memory_space<vmem>>, %arg12: memref<1x96xf32, #tpu.memory_space<vmem>>, %arg13: memref<96x384xf32, #tpu.memory_space<vmem>>, %arg14: memref<1x384xf32, #tpu.memory_space<vmem>>, %arg15: memref<384x96xf32, #tpu.memory_space<vmem>>, %arg16: memref<1x96xf32, #tpu.memory_space<vmem>>, %arg17: memref<1x16x96xf32, #tpu.memory_space<vmem>>, %arg18: memref<144x96xf32, #tpu.memory_space<vmem>>) attributes {dimension_semantics = [#tpu.dimension_semantics<parallel>], iteration_bounds = array<i64: 2>, scalar_prefetch = 0 : i64, scratch_operands = 1 : i64, tpu.core_type = #tpu.core_type<tc>, window_params = [{transform_indices = @transform_0, window_bounds = array<i64: 1, 16, 64>}, {pipeline_mode = #tpu.pipeline_mode<synchronous>, transform_indices = @transform_1, window_bounds = array<i64: 9, 64, 96>}, {pipeline_mode = #tpu.pipeline_mode<synchronous>, transform_indices = @transform_2, window_bounds = array<i64: 16, 144>}, {pipeline_mode = #tpu.pipeline_mode<synchronous>, transform_indices = @transform_3, window_bounds = array<i64: 16, 96>}, {pipeline_mode = #tpu.pipeline_mode<synchronous>, transform_indices = @transform_4, window_bounds = array<i64: 1, 96>}, {pipeline_mode = #tpu.pipeline_mode<synchronous>, transform_indices = @transform_5, window_bounds = array<i64: 1, 96>}, {pipeline_mode = #tpu.pipeline_mode<synchronous>, transform_indices = @transform_6, window_bounds = array<i64: 96, 288>}, {pipeline_mode = #tpu.pipeline_mode<synchronous>, transform_indices = @transform_7, window_bounds = array<i64: 1, 288>}, {pipeline_mode = #tpu.pipeline_mode<synchronous>, transform_indices = @transform_8, window_bounds = array<i64: 96, 96>}, {pipeline_mode = #tpu.pipeline_mode<synchronous>, transform_indices = @transform_9, window_bounds = array<i64: 1, 96>}, {pipeline_mode = #tpu.pipeline_mode<synchronous>, transform_indices = @transform_10, window_bounds = array<i64: 1, 96>}, {pipeline_mode = #tpu.pipeline_mode<synchronous>, transform_indices = @transform_11, window_bounds = array<i64: 1, 96>}, {pipeline_mode = #tpu.pipeline_mode<synchronous>, transform_indices = @transform_12, window_bounds = array<i64: 96, 384>}, {pipeline_mode = #tpu.pipeline_mode<synchronous>, transform_indices = @transform_13, window_bounds = array<i64: 1, 384>}, {pipeline_mode = #tpu.pipeline_mode<synchronous>, transform_indices = @transform_14, window_bounds = array<i64: 384, 96>}, {pipeline_mode = #tpu.pipeline_mode<synchronous>, transform_indices = @transform_15, window_bounds = array<i64: 1, 96>}, {transform_indices = @transform_16, window_bounds = array<i64: 1, 16, 96>}]} {
    %c0 = arith.constant 0 : index
    %c0_0 = arith.constant 0 : index
    %c0_1 = arith.constant 0 : index
    %0 = vector.load %arg1[%c0, %c0_0, %c0_1] : memref<1x16x64xf32, #tpu.memory_space<vmem>>, vector<1x16x64xf32>
    %1 = vector.shape_cast %0 : vector<1x16x64xf32> to vector<16x64xf32>
    %c0_2 = arith.constant 0 : index
    %c0_3 = arith.constant 0 : index
    %c0_4 = arith.constant 0 : index
    %2 = vector.load %arg2[%c0_2, %c0_3, %c0_4] : memref<9x64x96xf32, #tpu.memory_space<vmem>>, vector<1x64x96xf32>
    %3 = vector.shape_cast %2 : vector<1x64x96xf32> to vector<64x96xf32>
    %cst = arith.constant dense<0.000000e+00> : vector<16x96xf32>
    %4 = tpu.matmul %1, %3, %cst {dimension_numbers = #tpu.dot_dimension_numbers<[1], [0], [0], [1], [0, 0, 1, 1], [], []>} : vector<16x64xf32>, vector<64x96xf32>, vector<16x96xf32> -> vector<16x96xf32>
    %c0_5 = arith.constant 0 : index
    %c0_6 = arith.constant 0 : index
    %5 = vector.load %arg18[%c0_5, %c0_6] : memref<144x96xf32, #tpu.memory_space<vmem>>, vector<16x96xf32>
    tpu.vector_store %arg18[%c0_5, %c0_6], %4 {strides = array<i32>} : memref<144x96xf32, #tpu.memory_space<vmem>>, vector<16x96xf32>,
    %c1 = arith.constant 1 : index
    %c0_7 = arith.constant 0 : index
    %c0_8 = arith.constant 0 : index
    %6 = vector.load %arg2[%c1, %c0_7, %c0_8] : memref<9x64x96xf32, #tpu.memory_space<vmem>>, vector<1x64x96xf32>
    %7 = vector.shape_cast %6 : vector<1x64x96xf32> to vector<64x96xf32>
    %cst_9 = arith.constant dense<0.000000e+00> : vector<16x96xf32>
    %8 = tpu.matmul %1, %7, %cst_9 {dimension_numbers = #tpu.dot_dimension_numbers<[1], [0], [0], [1], [0, 0, 1, 1], [], []>} : vector<16x64xf32>, vector<64x96xf32>, vector<16x96xf32> -> vector<16x96xf32>
    %c16 = arith.constant 16 : index
    %c0_10 = arith.constant 0 : index
    %9 = vector.load %arg18[%c16, %c0_10] : memref<144x96xf32, #tpu.memory_space<vmem>>, vector<16x96xf32>
    tpu.vector_store %arg18[%c16, %c0_10], %8 {strides = array<i32>} : memref<144x96xf32, #tpu.memory_space<vmem>>, vector<16x96xf32>,
    %c2 = arith.constant 2 : index
    %c0_11 = arith.constant 0 : index
    %c0_12 = arith.constant 0 : index
    %10 = vector.load %arg2[%c2, %c0_11, %c0_12] : memref<9x64x96xf32, #tpu.memory_space<vmem>>, vector<1x64x96xf32>
    %11 = vector.shape_cast %10 : vector<1x64x96xf32> to vector<64x96xf32>
    %cst_13 = arith.constant dense<0.000000e+00> : vector<16x96xf32>
    %12 = tpu.matmul %1, %11, %cst_13 {dimension_numbers = #tpu.dot_dimension_numbers<[1], [0], [0], [1], [0, 0, 1, 1], [], []>} : vector<16x64xf32>, vector<64x96xf32>, vector<16x96xf32> -> vector<16x96xf32>
    %c32 = arith.constant 32 : index
    %c0_14 = arith.constant 0 : index
    %13 = vector.load %arg18[%c32, %c0_14] : memref<144x96xf32, #tpu.memory_space<vmem>>, vector<16x96xf32>
    tpu.vector_store %arg18[%c32, %c0_14], %12 {strides = array<i32>} : memref<144x96xf32, #tpu.memory_space<vmem>>, vector<16x96xf32>,
    %c3 = arith.constant 3 : index
    %c0_15 = arith.constant 0 : index
    %c0_16 = arith.constant 0 : index
    %14 = vector.load %arg2[%c3, %c0_15, %c0_16] : memref<9x64x96xf32, #tpu.memory_space<vmem>>, vector<1x64x96xf32>
    %15 = vector.shape_cast %14 : vector<1x64x96xf32> to vector<64x96xf32>
    %cst_17 = arith.constant dense<0.000000e+00> : vector<16x96xf32>
    %16 = tpu.matmul %1, %15, %cst_17 {dimension_numbers = #tpu.dot_dimension_numbers<[1], [0], [0], [1], [0, 0, 1, 1], [], []>} : vector<16x64xf32>, vector<64x96xf32>, vector<16x96xf32> -> vector<16x96xf32>
    %c48 = arith.constant 48 : index
    %c0_18 = arith.constant 0 : index
    %17 = vector.load %arg18[%c48, %c0_18] : memref<144x96xf32, #tpu.memory_space<vmem>>, vector<16x96xf32>
    tpu.vector_store %arg18[%c48, %c0_18], %16 {strides = array<i32>} : memref<144x96xf32, #tpu.memory_space<vmem>>, vector<16x96xf32>,
    %c4 = arith.constant 4 : index
    %c0_19 = arith.constant 0 : index
    %c0_20 = arith.constant 0 : index
    %18 = vector.load %arg2[%c4, %c0_19, %c0_20] : memref<9x64x96xf32, #tpu.memory_space<vmem>>, vector<1x64x96xf32>
    %19 = vector.shape_cast %18 : vector<1x64x96xf32> to vector<64x96xf32>
    %cst_21 = arith.constant dense<0.000000e+00> : vector<16x96xf32>
    %20 = tpu.matmul %1, %19, %cst_21 {dimension_numbers = #tpu.dot_dimension_numbers<[1], [0], [0], [1], [0, 0, 1, 1], [], []>} : vector<16x64xf32>, vector<64x96xf32>, vector<16x96xf32> -> vector<16x96xf32>
    %c64 = arith.constant 64 : index
    %c0_22 = arith.constant 0 : index
    %21 = vector.load %arg18[%c64, %c0_22] : memref<144x96xf32, #tpu.memory_space<vmem>>, vector<16x96xf32>
    tpu.vector_store %arg18[%c64, %c0_22], %20 {strides = array<i32>} : memref<144x96xf32, #tpu.memory_space<vmem>>, vector<16x96xf32>,
    %c5 = arith.constant 5 : index
    %c0_23 = arith.constant 0 : index
    %c0_24 = arith.constant 0 : index
    %22 = vector.load %arg2[%c5, %c0_23, %c0_24] : memref<9x64x96xf32, #tpu.memory_space<vmem>>, vector<1x64x96xf32>
    %23 = vector.shape_cast %22 : vector<1x64x96xf32> to vector<64x96xf32>
    %cst_25 = arith.constant dense<0.000000e+00> : vector<16x96xf32>
    %24 = tpu.matmul %1, %23, %cst_25 {dimension_numbers = #tpu.dot_dimension_numbers<[1], [0], [0], [1], [0, 0, 1, 1], [], []>} : vector<16x64xf32>, vector<64x96xf32>, vector<16x96xf32> -> vector<16x96xf32>
    %c80 = arith.constant 80 : index
    %c0_26 = arith.constant 0 : index
    %25 = vector.load %arg18[%c80, %c0_26] : memref<144x96xf32, #tpu.memory_space<vmem>>, vector<16x96xf32>
    tpu.vector_store %arg18[%c80, %c0_26], %24 {strides = array<i32>} : memref<144x96xf32, #tpu.memory_space<vmem>>, vector<16x96xf32>,
    %c6 = arith.constant 6 : index
    %c0_27 = arith.constant 0 : index
    %c0_28 = arith.constant 0 : index
    %26 = vector.load %arg2[%c6, %c0_27, %c0_28] : memref<9x64x96xf32, #tpu.memory_space<vmem>>, vector<1x64x96xf32>
    %27 = vector.shape_cast %26 : vector<1x64x96xf32> to vector<64x96xf32>
    %cst_29 = arith.constant dense<0.000000e+00> : vector<16x96xf32>
    %28 = tpu.matmul %1, %27, %cst_29 {dimension_numbers = #tpu.dot_dimension_numbers<[1], [0], [0], [1], [0, 0, 1, 1], [], []>} : vector<16x64xf32>, vector<64x96xf32>, vector<16x96xf32> -> vector<16x96xf32>
    %c96 = arith.constant 96 : index
    %c0_30 = arith.constant 0 : index
    %29 = vector.load %arg18[%c96, %c0_30] : memref<144x96xf32, #tpu.memory_space<vmem>>, vector<16x96xf32>
    tpu.vector_store %arg18[%c96, %c0_30], %28 {strides = array<i32>} : memref<144x96xf32, #tpu.memory_space<vmem>>, vector<16x96xf32>,
    %c7 = arith.constant 7 : index
    %c0_31 = arith.constant 0 : index
    %c0_32 = arith.constant 0 : index
    %30 = vector.load %arg2[%c7, %c0_31, %c0_32] : memref<9x64x96xf32, #tpu.memory_space<vmem>>, vector<1x64x96xf32>
    %31 = vector.shape_cast %30 : vector<1x64x96xf32> to vector<64x96xf32>
    %cst_33 = arith.constant dense<0.000000e+00> : vector<16x96xf32>
    %32 = tpu.matmul %1, %31, %cst_33 {dimension_numbers = #tpu.dot_dimension_numbers<[1], [0], [0], [1], [0, 0, 1, 1], [], []>} : vector<16x64xf32>, vector<64x96xf32>, vector<16x96xf32> -> vector<16x96xf32>
    %c112 = arith.constant 112 : index
    %c0_34 = arith.constant 0 : index
    %33 = vector.load %arg18[%c112, %c0_34] : memref<144x96xf32, #tpu.memory_space<vmem>>, vector<16x96xf32>
    tpu.vector_store %arg18[%c112, %c0_34], %32 {strides = array<i32>} : memref<144x96xf32, #tpu.memory_space<vmem>>, vector<16x96xf32>,
    %c8 = arith.constant 8 : index
    %c0_35 = arith.constant 0 : index
    %c0_36 = arith.constant 0 : index
    %34 = vector.load %arg2[%c8, %c0_35, %c0_36] : memref<9x64x96xf32, #tpu.memory_space<vmem>>, vector<1x64x96xf32>
    %35 = vector.shape_cast %34 : vector<1x64x96xf32> to vector<64x96xf32>
    %cst_37 = arith.constant dense<0.000000e+00> : vector<16x96xf32>
    %36 = tpu.matmul %1, %35, %cst_37 {dimension_numbers = #tpu.dot_dimension_numbers<[1], [0], [0], [1], [0, 0, 1, 1], [], []>} : vector<16x64xf32>, vector<64x96xf32>, vector<16x96xf32> -> vector<16x96xf32>
    %c128 = arith.constant 128 : index
    %c0_38 = arith.constant 0 : index
    %37 = vector.load %arg18[%c128, %c0_38] : memref<144x96xf32, #tpu.memory_space<vmem>>, vector<16x96xf32>
    tpu.vector_store %arg18[%c128, %c0_38], %36 {strides = array<i32>} : memref<144x96xf32, #tpu.memory_space<vmem>>, vector<16x96xf32>,
    %c0_39 = arith.constant 0 : index
    %c0_40 = arith.constant 0 : index
    %38 = vector.load %arg3[%c0_39, %c0_40] : memref<16x144xf32, #tpu.memory_space<vmem>>, vector<16x144xf32>
    %c0_41 = arith.constant 0 : index
    %c0_42 = arith.constant 0 : index
    %39 = vector.load %arg18[%c0_41, %c0_42] : memref<144x96xf32, #tpu.memory_space<vmem>>, vector<144x96xf32>
    %cst_43 = arith.constant dense<0.000000e+00> : vector<16x96xf32>
    %40 = tpu.matmul %38, %39, %cst_43 {dimension_numbers = #tpu.dot_dimension_numbers<[1], [0], [0], [1], [0, 0, 1, 1], [], []>} : vector<16x144xf32>, vector<144x96xf32>, vector<16x96xf32> -> vector<16x96xf32>
    %c0_44 = arith.constant 0 : index
    %c0_45 = arith.constant 0 : index
    %41 = vector.load %arg4[%c0_44, %c0_45] : memref<16x96xf32, #tpu.memory_space<vmem>>, vector<16x96xf32>
    %42 = arith.addf %40, %41 : vector<16x96xf32>
    %c0_46 = arith.constant 0 : index
    %c0_47 = arith.constant 0 : index
    %43 = vector.load %arg5[%c0_46, %c0_47] : memref<1x96xf32, #tpu.memory_space<vmem>>, vector<1x96xf32>
    %c0_48 = arith.constant 0 : index
    %c0_49 = arith.constant 0 : index
    %44 = vector.load %arg6[%c0_48, %c0_49] : memref<1x96xf32, #tpu.memory_space<vmem>>, vector<1x96xf32>
    %cst_50 = arith.constant dense<0.000000e+00> : vector<16xf32>
    %45 = vector.multi_reduction <add>, %42, %cst_50 [1] : vector<16x96xf32> to vector<16xf32>
    %46 = vector.shape_cast %45 : vector<16xf32> to vector<16x1xf32>
    %cst_51 = arith.constant 9.600000e+01 : f32
    %47 = vector.broadcast %cst_51 : f32 to vector<16x1xf32>
    %48 = arith.divf %46, %47 : vector<16x1xf32>
    %49 = vector.broadcast %48 : vector<16x1xf32> to vector<16x96xf32>
    %50 = arith.subf %42, %49 : vector<16x96xf32>
    %51 = arith.mulf %50, %50 : vector<16x96xf32>
    %cst_52 = arith.constant dense<0.000000e+00> : vector<16xf32>
    %52 = vector.multi_reduction <add>, %51, %cst_52 [1] : vector<16x96xf32> to vector<16xf32>
    %53 = vector.shape_cast %52 : vector<16xf32> to vector<16x1xf32>
    %cst_53 = arith.constant 9.600000e+01 : f32
    %54 = vector.broadcast %cst_53 : f32 to vector<16x1xf32>
    %55 = arith.divf %53, %54 : vector<16x1xf32>
    %56 = vector.broadcast %48 : vector<16x1xf32> to vector<16x96xf32>
    %57 = arith.subf %42, %56 : vector<16x96xf32>
    %cst_54 = arith.constant 9.99999997E-7 : f32
    %58 = vector.broadcast %cst_54 : f32 to vector<16x1xf32>
    %59 = arith.addf %55, %58 : vector<16x1xf32>
    %60 = math.rsqrt %59 : vector<16x1xf32>
    %61 = vector.broadcast %60 : vector<16x1xf32> to vector<16x96xf32>
    %62 = arith.mulf %57, %61 : vector<16x96xf32>
    %63 = vector.broadcast %43 : vector<1x96xf32> to vector<16x96xf32>
    %64 = arith.mulf %62, %63 : vector<16x96xf32>
    %65 = vector.broadcast %44 : vector<1x96xf32> to vector<16x96xf32>
    %66 = arith.addf %64, %65 : vector<16x96xf32>
    %c0_55 = arith.constant 0 : index
    %c0_56 = arith.constant 0 : index
    %67 = vector.load %arg7[%c0_55, %c0_56] : memref<96x288xf32, #tpu.memory_space<vmem>>, vector<96x288xf32>
    %cst_57 = arith.constant dense<0.000000e+00> : vector<16x288xf32>
    %68 = tpu.matmul %66, %67, %cst_57 {dimension_numbers = #tpu.dot_dimension_numbers<[1], [0], [0], [1], [0, 0, 1, 1], [], []>} : vector<16x96xf32>, vector<96x288xf32>, vector<16x288xf32> -> vector<16x288xf32>
    %c0_58 = arith.constant 0 : index
    %c0_59 = arith.constant 0 : index
    %69 = vector.load %arg8[%c0_58, %c0_59] : memref<1x288xf32, #tpu.memory_space<vmem>>, vector<1x288xf32>
    %70 = vector.broadcast %69 : vector<1x288xf32> to vector<16x288xf32>
    %71 = arith.addf %68, %70 : vector<16x288xf32>
    %72 = vector.extract_strided_slice %71 {offsets = [0, 0], sizes = [16, 12], strides = [1, 1]} : vector<16x288xf32> to vector<16x12xf32>
    %73 = vector.extract_strided_slice %71 {offsets = [0, 96], sizes = [16, 12], strides = [1, 1]} : vector<16x288xf32> to vector<16x12xf32>
    %74 = vector.extract_strided_slice %71 {offsets = [0, 192], sizes = [16, 12], strides = [1, 1]} : vector<16x288xf32> to vector<16x12xf32>
    %cst_60 = arith.constant dense<0.000000e+00> : vector<16x16xf32>
    %75 = tpu.matmul %72, %73, %cst_60 {dimension_numbers = #tpu.dot_dimension_numbers<[1], [1], [0], [0], [0, 0, 1, 0], [], []>} : vector<16x12xf32>, vector<16x12xf32>, vector<16x16xf32> -> vector<16x16xf32>
    %cst_61 = arith.constant 0.288675129 : f32
    %76 = vector.broadcast %cst_61 : f32 to vector<16x16xf32>
    %77 = arith.mulf %75, %76 : vector<16x16xf32>
    %cst_62 = arith.constant dense<0xFF800000> : vector<16xf32>
    %78 = vector.multi_reduction <maximumf>, %77, %cst_62 [1] : vector<16x16xf32> to vector<16xf32>
    %79 = vector.shape_cast %78 : vector<16xf32> to vector<16x1xf32>
    %80 = vector.broadcast %79 : vector<16x1xf32> to vector<16x16xf32>
    %81 = arith.subf %77, %80 : vector<16x16xf32>
    %82 = math.exp %81 : vector<16x16xf32>
    %cst_63 = arith.constant dense<0.000000e+00> : vector<16xf32>
    %83 = vector.multi_reduction <add>, %82, %cst_63 [1] : vector<16x16xf32> to vector<16xf32>
    %84 = vector.shape_cast %83 : vector<16xf32> to vector<16x1xf32>
    %85 = tpu.reciprocal %84 {approx = true} : vector<16x1xf32> -> vector<16x1xf32>
    %86 = vector.broadcast %85 : vector<16x1xf32> to vector<16x16xf32>
    %87 = arith.mulf %82, %86 : vector<16x16xf32>
    %cst_64 = arith.constant dense<0.000000e+00> : vector<16x12xf32>
    %88 = tpu.matmul %87, %74, %cst_64 {dimension_numbers = #tpu.dot_dimension_numbers<[1], [0], [0], [1], [0, 0, 1, 1], [], []>} : vector<16x16xf32>, vector<16x12xf32>, vector<16x12xf32> -> vector<16x12xf32>
    %89 = vector.extract_strided_slice %71 {offsets = [0, 12], sizes = [16, 12], strides = [1, 1]} : vector<16x288xf32> to vector<16x12xf32>
    %90 = vector.extract_strided_slice %71 {offsets = [0, 108], sizes = [16, 12], strides = [1, 1]} : vector<16x288xf32> to vector<16x12xf32>
    %91 = vector.extract_strided_slice %71 {offsets = [0, 204], sizes = [16, 12], strides = [1, 1]} : vector<16x288xf32> to vector<16x12xf32>
    %cst_65 = arith.constant dense<0.000000e+00> : vector<16x16xf32>
    %92 = tpu.matmul %89, %90, %cst_65 {dimension_numbers = #tpu.dot_dimension_numbers<[1], [1], [0], [0], [0, 0, 1, 0], [], []>} : vector<16x12xf32>, vector<16x12xf32>, vector<16x16xf32> -> vector<16x16xf32>
    %cst_66 = arith.constant 0.288675129 : f32
    %93 = vector.broadcast %cst_66 : f32 to vector<16x16xf32>
    %94 = arith.mulf %92, %93 : vector<16x16xf32>
    %cst_67 = arith.constant dense<0xFF800000> : vector<16xf32>
    %95 = vector.multi_reduction <maximumf>, %94, %cst_67 [1] : vector<16x16xf32> to vector<16xf32>
    %96 = vector.shape_cast %95 : vector<16xf32> to vector<16x1xf32>
    %97 = vector.broadcast %96 : vector<16x1xf32> to vector<16x16xf32>
    %98 = arith.subf %94, %97 : vector<16x16xf32>
    %99 = math.exp %98 : vector<16x16xf32>
    %cst_68 = arith.constant dense<0.000000e+00> : vector<16xf32>
    %100 = vector.multi_reduction <add>, %99, %cst_68 [1] : vector<16x16xf32> to vector<16xf32>
    %101 = vector.shape_cast %100 : vector<16xf32> to vector<16x1xf32>
    %102 = tpu.reciprocal %101 {approx = true} : vector<16x1xf32> -> vector<16x1xf32>
    %103 = vector.broadcast %102 : vector<16x1xf32> to vector<16x16xf32>
    %104 = arith.mulf %99, %103 : vector<16x16xf32>
    %cst_69 = arith.constant dense<0.000000e+00> : vector<16x12xf32>
    %105 = tpu.matmul %104, %91, %cst_69 {dimension_numbers = #tpu.dot_dimension_numbers<[1], [0], [0], [1], [0, 0, 1, 1], [], []>} : vector<16x16xf32>, vector<16x12xf32>, vector<16x12xf32> -> vector<16x12xf32>
    %106 = vector.extract_strided_slice %71 {offsets = [0, 24], sizes = [16, 12], strides = [1, 1]} : vector<16x288xf32> to vector<16x12xf32>
    %107 = vector.extract_strided_slice %71 {offsets = [0, 120], sizes = [16, 12], strides = [1, 1]} : vector<16x288xf32> to vector<16x12xf32>
    %108 = vector.extract_strided_slice %71 {offsets = [0, 216], sizes = [16, 12], strides = [1, 1]} : vector<16x288xf32> to vector<16x12xf32>
    %cst_70 = arith.constant dense<0.000000e+00> : vector<16x16xf32>
    %109 = tpu.matmul %106, %107, %cst_70 {dimension_numbers = #tpu.dot_dimension_numbers<[1], [1], [0], [0], [0, 0, 1, 0], [], []>} : vector<16x12xf32>, vector<16x12xf32>, vector<16x16xf32> -> vector<16x16xf32>
    %cst_71 = arith.constant 0.288675129 : f32
    %110 = vector.broadcast %cst_71 : f32 to vector<16x16xf32>
    %111 = arith.mulf %109, %110 : vector<16x16xf32>
    %cst_72 = arith.constant dense<0xFF800000> : vector<16xf32>
    %112 = vector.multi_reduction <maximumf>, %111, %cst_72 [1] : vector<16x16xf32> to vector<16xf32>
    %113 = vector.shape_cast %112 : vector<16xf32> to vector<16x1xf32>
    %114 = vector.broadcast %113 : vector<16x1xf32> to vector<16x16xf32>
    %115 = arith.subf %111, %114 : vector<16x16xf32>
    %116 = math.exp %115 : vector<16x16xf32>
    %cst_73 = arith.constant dense<0.000000e+00> : vector<16xf32>
    %117 = vector.multi_reduction <add>, %116, %cst_73 [1] : vector<16x16xf32> to vector<16xf32>
    %118 = vector.shape_cast %117 : vector<16xf32> to vector<16x1xf32>
    %119 = tpu.reciprocal %118 {approx = true} : vector<16x1xf32> -> vector<16x1xf32>
    %120 = vector.broadcast %119 : vector<16x1xf32> to vector<16x16xf32>
    %121 = arith.mulf %116, %120 : vector<16x16xf32>
    %cst_74 = arith.constant dense<0.000000e+00> : vector<16x12xf32>
    %122 = tpu.matmul %121, %108, %cst_74 {dimension_numbers = #tpu.dot_dimension_numbers<[1], [0], [0], [1], [0, 0, 1, 1], [], []>} : vector<16x16xf32>, vector<16x12xf32>, vector<16x12xf32> -> vector<16x12xf32>
    %123 = vector.extract_strided_slice %71 {offsets = [0, 36], sizes = [16, 12], strides = [1, 1]} : vector<16x288xf32> to vector<16x12xf32>
    %124 = vector.extract_strided_slice %71 {offsets = [0, 132], sizes = [16, 12], strides = [1, 1]} : vector<16x288xf32> to vector<16x12xf32>
    %125 = vector.extract_strided_slice %71 {offsets = [0, 228], sizes = [16, 12], strides = [1, 1]} : vector<16x288xf32> to vector<16x12xf32>
    %cst_75 = arith.constant dense<0.000000e+00> : vector<16x16xf32>
    %126 = tpu.matmul %123, %124, %cst_75 {dimension_numbers = #tpu.dot_dimension_numbers<[1], [1], [0], [0], [0, 0, 1, 0], [], []>} : vector<16x12xf32>, vector<16x12xf32>, vector<16x16xf32> -> vector<16x16xf32>
    %cst_76 = arith.constant 0.288675129 : f32
    %127 = vector.broadcast %cst_76 : f32 to vector<16x16xf32>
    %128 = arith.mulf %126, %127 : vector<16x16xf32>
    %cst_77 = arith.constant dense<0xFF800000> : vector<16xf32>
    %129 = vector.multi_reduction <maximumf>, %128, %cst_77 [1] : vector<16x16xf32> to vector<16xf32>
    %130 = vector.shape_cast %129 : vector<16xf32> to vector<16x1xf32>
    %131 = vector.broadcast %130 : vector<16x1xf32> to vector<16x16xf32>
    %132 = arith.subf %128, %131 : vector<16x16xf32>
    %133 = math.exp %132 : vector<16x16xf32>
    %cst_78 = arith.constant dense<0.000000e+00> : vector<16xf32>
    %134 = vector.multi_reduction <add>, %133, %cst_78 [1] : vector<16x16xf32> to vector<16xf32>
    %135 = vector.shape_cast %134 : vector<16xf32> to vector<16x1xf32>
    %136 = tpu.reciprocal %135 {approx = true} : vector<16x1xf32> -> vector<16x1xf32>
    %137 = vector.broadcast %136 : vector<16x1xf32> to vector<16x16xf32>
    %138 = arith.mulf %133, %137 : vector<16x16xf32>
    %cst_79 = arith.constant dense<0.000000e+00> : vector<16x12xf32>
    %139 = tpu.matmul %138, %125, %cst_79 {dimension_numbers = #tpu.dot_dimension_numbers<[1], [0], [0], [1], [0, 0, 1, 1], [], []>} : vector<16x16xf32>, vector<16x12xf32>, vector<16x12xf32> -> vector<16x12xf32>
    %140 = vector.extract_strided_slice %71 {offsets = [0, 48], sizes = [16, 12], strides = [1, 1]} : vector<16x288xf32> to vector<16x12xf32>
    %141 = vector.extract_strided_slice %71 {offsets = [0, 144], sizes = [16, 12], strides = [1, 1]} : vector<16x288xf32> to vector<16x12xf32>
    %142 = vector.extract_strided_slice %71 {offsets = [0, 240], sizes = [16, 12], strides = [1, 1]} : vector<16x288xf32> to vector<16x12xf32>
    %cst_80 = arith.constant dense<0.000000e+00> : vector<16x16xf32>
    %143 = tpu.matmul %140, %141, %cst_80 {dimension_numbers = #tpu.dot_dimension_numbers<[1], [1], [0], [0], [0, 0, 1, 0], [], []>} : vector<16x12xf32>, vector<16x12xf32>, vector<16x16xf32> -> vector<16x16xf32>
    %cst_81 = arith.constant 0.288675129 : f32
    %144 = vector.broadcast %cst_81 : f32 to vector<16x16xf32>
    %145 = arith.mulf %143, %144 : vector<16x16xf32>
    %cst_82 = arith.constant dense<0xFF800000> : vector<16xf32>
    %146 = vector.multi_reduction <maximumf>, %145, %cst_82 [1] : vector<16x16xf32> to vector<16xf32>
    %147 = vector.shape_cast %146 : vector<16xf32> to vector<16x1xf32>
    %148 = vector.broadcast %147 : vector<16x1xf32> to vector<16x16xf32>
    %149 = arith.subf %145, %148 : vector<16x16xf32>
    %150 = math.exp %149 : vector<16x16xf32>
    %cst_83 = arith.constant dense<0.000000e+00> : vector<16xf32>
    %151 = vector.multi_reduction <add>, %150, %cst_83 [1] : vector<16x16xf32> to vector<16xf32>
    %152 = vector.shape_cast %151 : vector<16xf32> to vector<16x1xf32>
    %153 = tpu.reciprocal %152 {approx = true} : vector<16x1xf32> -> vector<16x1xf32>
    %154 = vector.broadcast %153 : vector<16x1xf32> to vector<16x16xf32>
    %155 = arith.mulf %150, %154 : vector<16x16xf32>
    %cst_84 = arith.constant dense<0.000000e+00> : vector<16x12xf32>
    %156 = tpu.matmul %155, %142, %cst_84 {dimension_numbers = #tpu.dot_dimension_numbers<[1], [0], [0], [1], [0, 0, 1, 1], [], []>} : vector<16x16xf32>, vector<16x12xf32>, vector<16x12xf32> -> vector<16x12xf32>
    %157 = vector.extract_strided_slice %71 {offsets = [0, 60], sizes = [16, 12], strides = [1, 1]} : vector<16x288xf32> to vector<16x12xf32>
    %158 = vector.extract_strided_slice %71 {offsets = [0, 156], sizes = [16, 12], strides = [1, 1]} : vector<16x288xf32> to vector<16x12xf32>
    %159 = vector.extract_strided_slice %71 {offsets = [0, 252], sizes = [16, 12], strides = [1, 1]} : vector<16x288xf32> to vector<16x12xf32>
    %cst_85 = arith.constant dense<0.000000e+00> : vector<16x16xf32>
    %160 = tpu.matmul %157, %158, %cst_85 {dimension_numbers = #tpu.dot_dimension_numbers<[1], [1], [0], [0], [0, 0, 1, 0], [], []>} : vector<16x12xf32>, vector<16x12xf32>, vector<16x16xf32> -> vector<16x16xf32>
    %cst_86 = arith.constant 0.288675129 : f32
    %161 = vector.broadcast %cst_86 : f32 to vector<16x16xf32>
    %162 = arith.mulf %160, %161 : vector<16x16xf32>
    %cst_87 = arith.constant dense<0xFF800000> : vector<16xf32>
    %163 = vector.multi_reduction <maximumf>, %162, %cst_87 [1] : vector<16x16xf32> to vector<16xf32>
    %164 = vector.shape_cast %163 : vector<16xf32> to vector<16x1xf32>
    %165 = vector.broadcast %164 : vector<16x1xf32> to vector<16x16xf32>
    %166 = arith.subf %162, %165 : vector<16x16xf32>
    %167 = math.exp %166 : vector<16x16xf32>
    %cst_88 = arith.constant dense<0.000000e+00> : vector<16xf32>
    %168 = vector.multi_reduction <add>, %167, %cst_88 [1] : vector<16x16xf32> to vector<16xf32>
    %169 = vector.shape_cast %168 : vector<16xf32> to vector<16x1xf32>
    %170 = tpu.reciprocal %169 {approx = true} : vector<16x1xf32> -> vector<16x1xf32>
    %171 = vector.broadcast %170 : vector<16x1xf32> to vector<16x16xf32>
    %172 = arith.mulf %167, %171 : vector<16x16xf32>
    %cst_89 = arith.constant dense<0.000000e+00> : vector<16x12xf32>
    %173 = tpu.matmul %172, %159, %cst_89 {dimension_numbers = #tpu.dot_dimension_numbers<[1], [0], [0], [1], [0, 0, 1, 1], [], []>} : vector<16x16xf32>, vector<16x12xf32>, vector<16x12xf32> -> vector<16x12xf32>
    %174 = vector.extract_strided_slice %71 {offsets = [0, 72], sizes = [16, 12], strides = [1, 1]} : vector<16x288xf32> to vector<16x12xf32>
    %175 = vector.extract_strided_slice %71 {offsets = [0, 168], sizes = [16, 12], strides = [1, 1]} : vector<16x288xf32> to vector<16x12xf32>
    %176 = vector.extract_strided_slice %71 {offsets = [0, 264], sizes = [16, 12], strides = [1, 1]} : vector<16x288xf32> to vector<16x12xf32>
    %cst_90 = arith.constant dense<0.000000e+00> : vector<16x16xf32>
    %177 = tpu.matmul %174, %175, %cst_90 {dimension_numbers = #tpu.dot_dimension_numbers<[1], [1], [0], [0], [0, 0, 1, 0], [], []>} : vector<16x12xf32>, vector<16x12xf32>, vector<16x16xf32> -> vector<16x16xf32>
    %cst_91 = arith.constant 0.288675129 : f32
    %178 = vector.broadcast %cst_91 : f32 to vector<16x16xf32>
    %179 = arith.mulf %177, %178 : vector<16x16xf32>
    %cst_92 = arith.constant dense<0xFF800000> : vector<16xf32>
    %180 = vector.multi_reduction <maximumf>, %179, %cst_92 [1] : vector<16x16xf32> to vector<16xf32>
    %181 = vector.shape_cast %180 : vector<16xf32> to vector<16x1xf32>
    %182 = vector.broadcast %181 : vector<16x1xf32> to vector<16x16xf32>
    %183 = arith.subf %179, %182 : vector<16x16xf32>
    %184 = math.exp %183 : vector<16x16xf32>
    %cst_93 = arith.constant dense<0.000000e+00> : vector<16xf32>
    %185 = vector.multi_reduction <add>, %184, %cst_93 [1] : vector<16x16xf32> to vector<16xf32>
    %186 = vector.shape_cast %185 : vector<16xf32> to vector<16x1xf32>
    %187 = tpu.reciprocal %186 {approx = true} : vector<16x1xf32> -> vector<16x1xf32>
    %188 = vector.broadcast %187 : vector<16x1xf32> to vector<16x16xf32>
    %189 = arith.mulf %184, %188 : vector<16x16xf32>
    %cst_94 = arith.constant dense<0.000000e+00> : vector<16x12xf32>
    %190 = tpu.matmul %189, %176, %cst_94 {dimension_numbers = #tpu.dot_dimension_numbers<[1], [0], [0], [1], [0, 0, 1, 1], [], []>} : vector<16x16xf32>, vector<16x12xf32>, vector<16x12xf32> -> vector<16x12xf32>
    %191 = vector.extract_strided_slice %71 {offsets = [0, 84], sizes = [16, 12], strides = [1, 1]} : vector<16x288xf32> to vector<16x12xf32>
    %192 = vector.extract_strided_slice %71 {offsets = [0, 180], sizes = [16, 12], strides = [1, 1]} : vector<16x288xf32> to vector<16x12xf32>
    %193 = vector.extract_strided_slice %71 {offsets = [0, 276], sizes = [16, 12], strides = [1, 1]} : vector<16x288xf32> to vector<16x12xf32>
    %cst_95 = arith.constant dense<0.000000e+00> : vector<16x16xf32>
    %194 = tpu.matmul %191, %192, %cst_95 {dimension_numbers = #tpu.dot_dimension_numbers<[1], [1], [0], [0], [0, 0, 1, 0], [], []>} : vector<16x12xf32>, vector<16x12xf32>, vector<16x16xf32> -> vector<16x16xf32>
    %cst_96 = arith.constant 0.288675129 : f32
    %195 = vector.broadcast %cst_96 : f32 to vector<16x16xf32>
    %196 = arith.mulf %194, %195 : vector<16x16xf32>
    %cst_97 = arith.constant dense<0xFF800000> : vector<16xf32>
    %197 = vector.multi_reduction <maximumf>, %196, %cst_97 [1] : vector<16x16xf32> to vector<16xf32>
    %198 = vector.shape_cast %197 : vector<16xf32> to vector<16x1xf32>
    %199 = vector.broadcast %198 : vector<16x1xf32> to vector<16x16xf32>
    %200 = arith.subf %196, %199 : vector<16x16xf32>
    %201 = math.exp %200 : vector<16x16xf32>
    %cst_98 = arith.constant dense<0.000000e+00> : vector<16xf32>
    %202 = vector.multi_reduction <add>, %201, %cst_98 [1] : vector<16x16xf32> to vector<16xf32>
    %203 = vector.shape_cast %202 : vector<16xf32> to vector<16x1xf32>
    %204 = tpu.reciprocal %203 {approx = true} : vector<16x1xf32> -> vector<16x1xf32>
    %205 = vector.broadcast %204 : vector<16x1xf32> to vector<16x16xf32>
    %206 = arith.mulf %201, %205 : vector<16x16xf32>
    %cst_99 = arith.constant dense<0.000000e+00> : vector<16x12xf32>
    %207 = tpu.matmul %206, %193, %cst_99 {dimension_numbers = #tpu.dot_dimension_numbers<[1], [0], [0], [1], [0, 0, 1, 1], [], []>} : vector<16x16xf32>, vector<16x12xf32>, vector<16x12xf32> -> vector<16x12xf32>
    %208 = tpu.concatenate %88, %105, %122, %139, %156, %173, %190, %207 in 1 : vector<16x12xf32>, vector<16x12xf32>, vector<16x12xf32>, vector<16x12xf32>, vector<16x12xf32>, vector<16x12xf32>, vector<16x12xf32>, vector<16x12xf32> -> vector<16x96xf32>
    %c0_100 = arith.constant 0 : index
    %c0_101 = arith.constant 0 : index
    %209 = vector.load %arg9[%c0_100, %c0_101] : memref<96x96xf32, #tpu.memory_space<vmem>>, vector<96x96xf32>
    %cst_102 = arith.constant dense<0.000000e+00> : vector<16x96xf32>
    %210 = tpu.matmul %208, %209, %cst_102 {dimension_numbers = #tpu.dot_dimension_numbers<[1], [0], [0], [1], [0, 0, 1, 1], [], []>} : vector<16x96xf32>, vector<96x96xf32>, vector<16x96xf32> -> vector<16x96xf32>
    %c0_103 = arith.constant 0 : index
    %c0_104 = arith.constant 0 : index
    %211 = vector.load %arg10[%c0_103, %c0_104] : memref<1x96xf32, #tpu.memory_space<vmem>>, vector<1x96xf32>
    %212 = vector.broadcast %211 : vector<1x96xf32> to vector<16x96xf32>
    %213 = arith.addf %210, %212 : vector<16x96xf32>
    %214 = arith.addf %213, %42 : vector<16x96xf32>
    %c0_105 = arith.constant 0 : index
    %c0_106 = arith.constant 0 : index
    %215 = vector.load %arg11[%c0_105, %c0_106] : memref<1x96xf32, #tpu.memory_space<vmem>>, vector<1x96xf32>
    %c0_107 = arith.constant 0 : index
    %c0_108 = arith.constant 0 : index
    %216 = vector.load %arg12[%c0_107, %c0_108] : memref<1x96xf32, #tpu.memory_space<vmem>>, vector<1x96xf32>
    %cst_109 = arith.constant dense<0.000000e+00> : vector<16xf32>
    %217 = vector.multi_reduction <add>, %214, %cst_109 [1] : vector<16x96xf32> to vector<16xf32>
    %218 = vector.shape_cast %217 : vector<16xf32> to vector<16x1xf32>
    %cst_110 = arith.constant 9.600000e+01 : f32
    %219 = vector.broadcast %cst_110 : f32 to vector<16x1xf32>
    %220 = arith.divf %218, %219 : vector<16x1xf32>
    %221 = vector.broadcast %220 : vector<16x1xf32> to vector<16x96xf32>
    %222 = arith.subf %214, %221 : vector<16x96xf32>
    %223 = arith.mulf %222, %222 : vector<16x96xf32>
    %cst_111 = arith.constant dense<0.000000e+00> : vector<16xf32>
    %224 = vector.multi_reduction <add>, %223, %cst_111 [1] : vector<16x96xf32> to vector<16xf32>
    %225 = vector.shape_cast %224 : vector<16xf32> to vector<16x1xf32>
    %cst_112 = arith.constant 9.600000e+01 : f32
    %226 = vector.broadcast %cst_112 : f32 to vector<16x1xf32>
    %227 = arith.divf %225, %226 : vector<16x1xf32>
    %228 = vector.broadcast %220 : vector<16x1xf32> to vector<16x96xf32>
    %229 = arith.subf %214, %228 : vector<16x96xf32>
    %cst_113 = arith.constant 9.99999997E-7 : f32
    %230 = vector.broadcast %cst_113 : f32 to vector<16x1xf32>
    %231 = arith.addf %227, %230 : vector<16x1xf32>
    %232 = math.rsqrt %231 : vector<16x1xf32>
    %233 = vector.broadcast %232 : vector<16x1xf32> to vector<16x96xf32>
    %234 = arith.mulf %229, %233 : vector<16x96xf32>
    %235 = vector.broadcast %215 : vector<1x96xf32> to vector<16x96xf32>
    %236 = arith.mulf %234, %235 : vector<16x96xf32>
    %237 = vector.broadcast %216 : vector<1x96xf32> to vector<16x96xf32>
    %238 = arith.addf %236, %237 : vector<16x96xf32>
    %c0_114 = arith.constant 0 : index
    %c0_115 = arith.constant 0 : index
    %239 = vector.load %arg13[%c0_114, %c0_115] : memref<96x384xf32, #tpu.memory_space<vmem>>, vector<96x384xf32>
    %cst_116 = arith.constant dense<0.000000e+00> : vector<16x384xf32>
    %240 = tpu.matmul %238, %239, %cst_116 {dimension_numbers = #tpu.dot_dimension_numbers<[1], [0], [0], [1], [0, 0, 1, 1], [], []>} : vector<16x96xf32>, vector<96x384xf32>, vector<16x384xf32> -> vector<16x384xf32>
    %c0_117 = arith.constant 0 : index
    %c0_118 = arith.constant 0 : index
    %241 = vector.load %arg14[%c0_117, %c0_118] : memref<1x384xf32, #tpu.memory_space<vmem>>, vector<1x384xf32>
    %242 = vector.broadcast %241 : vector<1x384xf32> to vector<16x384xf32>
    %243 = arith.addf %240, %242 : vector<16x384xf32>
    %cst_119 = arith.constant 5.000000e-01 : f32
    %244 = vector.broadcast %cst_119 : f32 to vector<16x384xf32>
    %245 = arith.mulf %244, %243 : vector<16x384xf32>
    %cst_120 = arith.constant 4.471500e-02 : f32
    %246 = vector.broadcast %cst_120 : f32 to vector<16x384xf32>
    %247 = arith.mulf %246, %243 : vector<16x384xf32>
    %248 = arith.mulf %247, %243 : vector<16x384xf32>
    %249 = arith.mulf %248, %243 : vector<16x384xf32>
    %250 = arith.addf %243, %249 : vector<16x384xf32>
    %cst_121 = arith.constant 0.797884583 : f32
    %251 = vector.broadcast %cst_121 : f32 to vector<16x384xf32>
    %252 = arith.mulf %251, %250 : vector<16x384xf32>
    %253 = math.tanh %252 : vector<16x384xf32>
    %cst_122 = arith.constant 1.000000e+00 : f32
    %254 = vector.broadcast %cst_122 : f32 to vector<16x384xf32>
    %255 = arith.addf %254, %253 : vector<16x384xf32>
    %256 = arith.mulf %245, %255 : vector<16x384xf32>
    %c0_123 = arith.constant 0 : index
    %c0_124 = arith.constant 0 : index
    %257 = vector.load %arg15[%c0_123, %c0_124] : memref<384x96xf32, #tpu.memory_space<vmem>>, vector<384x96xf32>
    %cst_125 = arith.constant dense<0.000000e+00> : vector<16x96xf32>
    %258 = tpu.matmul %256, %257, %cst_125 {dimension_numbers = #tpu.dot_dimension_numbers<[1], [0], [0], [1], [0, 0, 1, 1], [], []>} : vector<16x384xf32>, vector<384x96xf32>, vector<16x96xf32> -> vector<16x96xf32>
    %c0_126 = arith.constant 0 : index
    %c0_127 = arith.constant 0 : index
    %259 = vector.load %arg16[%c0_126, %c0_127] : memref<1x96xf32, #tpu.memory_space<vmem>>, vector<1x96xf32>
    %260 = vector.broadcast %259 : vector<1x96xf32> to vector<16x96xf32>
    %261 = arith.addf %258, %260 : vector<16x96xf32>
    %262 = arith.addf %214, %261 : vector<16x96xf32>
    %c0_128 = arith.constant 0 : index
    %c0_129 = arith.constant 0 : index
    %c0_130 = arith.constant 0 : index
    %263 = vector.load %arg17[%c0_128, %c0_129, %c0_130] : memref<1x16x96xf32, #tpu.memory_space<vmem>>, vector<1x16x96xf32>
    %264 = vector.shape_cast %263 : vector<1x16x96xf32> to vector<16x96xf32>
    %265 = vector.shape_cast %262 : vector<16x96xf32> to vector<1x16x96xf32>
    tpu.vector_store %arg17[%c0_128, %c0_129, %c0_130], %265 {strides = array<i32>} : memref<1x16x96xf32, #tpu.memory_space<vmem>>, vector<1x16x96xf32>,
    return
  }
  func.func @transform_0(%arg0: i32) -> (i32, i32, i32) {
    %c0_i32 = arith.constant 0 : i32
    %c0_i32_0 = arith.constant 0 : i32
    %c0_i32_1 = arith.constant 0 : i32
    return %arg0, %c0_i32, %c0_i32_0 : i32, i32, i32
  }
  func.func @transform_1(%arg0: i32) -> (i32, i32, i32) {
    %c0_i32 = arith.constant 0 : i32
    %c0_i32_0 = arith.constant 0 : i32
    %c0_i32_1 = arith.constant 0 : i32
    %c0_i32_2 = arith.constant 0 : i32
    return %c0_i32, %c0_i32_0, %c0_i32_1 : i32, i32, i32
  }
  func.func @transform_2(%arg0: i32) -> (i32, i32) {
    %c0_i32 = arith.constant 0 : i32
    %c0_i32_0 = arith.constant 0 : i32
    %c0_i32_1 = arith.constant 0 : i32
    return %c0_i32, %c0_i32_0 : i32, i32
  }
  func.func @transform_3(%arg0: i32) -> (i32, i32) {
    %c0_i32 = arith.constant 0 : i32
    %c0_i32_0 = arith.constant 0 : i32
    %c0_i32_1 = arith.constant 0 : i32
    return %c0_i32, %c0_i32_0 : i32, i32
  }
  func.func @transform_4(%arg0: i32) -> (i32, i32) {
    %c0_i32 = arith.constant 0 : i32
    %c0_i32_0 = arith.constant 0 : i32
    %c0_i32_1 = arith.constant 0 : i32
    return %c0_i32, %c0_i32_0 : i32, i32
  }
  func.func @transform_5(%arg0: i32) -> (i32, i32) {
    %c0_i32 = arith.constant 0 : i32
    %c0_i32_0 = arith.constant 0 : i32
    %c0_i32_1 = arith.constant 0 : i32
    return %c0_i32, %c0_i32_0 : i32, i32
  }
  func.func @transform_6(%arg0: i32) -> (i32, i32) {
    %c0_i32 = arith.constant 0 : i32
    %c0_i32_0 = arith.constant 0 : i32
    %c0_i32_1 = arith.constant 0 : i32
    return %c0_i32, %c0_i32_0 : i32, i32
  }
  func.func @transform_7(%arg0: i32) -> (i32, i32) {
    %c0_i32 = arith.constant 0 : i32
    %c0_i32_0 = arith.constant 0 : i32
    %c0_i32_1 = arith.constant 0 : i32
    return %c0_i32, %c0_i32_0 : i32, i32
  }
  func.func @transform_8(%arg0: i32) -> (i32, i32) {
    %c0_i32 = arith.constant 0 : i32
    %c0_i32_0 = arith.constant 0 : i32
    %c0_i32_1 = arith.constant 0 : i32
    return %c0_i32, %c0_i32_0 : i32, i32
  }
  func.func @transform_9(%arg0: i32) -> (i32, i32) {
    %c0_i32 = arith.constant 0 : i32
    %c0_i32_0 = arith.constant 0 : i32
    %c0_i32_1 = arith.constant 0 : i32
    return %c0_i32, %c0_i32_0 : i32, i32
  }
  func.func @transform_10(%arg0: i32) -> (i32, i32) {
    %c0_i32 = arith.constant 0 : i32
    %c0_i32_0 = arith.constant 0 : i32
    %c0_i32_1 = arith.constant 0 : i32
    return %c0_i32, %c0_i32_0 : i32, i32
  }
  func.func @transform_11(%arg0: i32) -> (i32, i32) {
    %c0_i32 = arith.constant 0 : i32
    %c0_i32_0 = arith.constant 0 : i32
    %c0_i32_1 = arith.constant 0 : i32
    return %c0_i32, %c0_i32_0 : i32, i32
  }
  func.func @transform_12(%arg0: i32) -> (i32, i32) {
    %c0_i32 = arith.constant 0 : i32
    %c0_i32_0 = arith.constant 0 : i32
    %c0_i32_1 = arith.constant 0 : i32
    return %c0_i32, %c0_i32_0 : i32, i32
  }
  func.func @transform_13(%arg0: i32) -> (i32, i32) {
    %c0_i32 = arith.constant 0 : i32
    %c0_i32_0 = arith.constant 0 : i32
    %c0_i32_1 = arith.constant 0 : i32
    return %c0_i32, %c0_i32_0 : i32, i32
  }
  func.func @transform_14(%arg0: i32) -> (i32, i32) {
    %c0_i32 = arith.constant 0 : i32
    %c0_i32_0 = arith.constant 0 : i32
    %c0_i32_1 = arith.constant 0 : i32
    return %c0_i32, %c0_i32_0 : i32, i32
  }
  func.func @transform_15(%arg0: i32) -> (i32, i32) {
    %c0_i32 = arith.constant 0 : i32
    %c0_i32_0 = arith.constant 0 : i32
    %c0_i32_1 = arith.constant 0 : i32
    return %c0_i32, %c0_i32_0 : i32, i32
  }
  func.func @transform_16(%arg0: i32) -> (i32, i32, i32) {
    %c0_i32 = arith.constant 0 : i32
    %c0_i32_0 = arith.constant 0 : i32
    %c0_i32_1 = arith.constant 0 : i32
    return %arg0, %c0_i32, %c0_i32_0 : i32, i32, i32
  }
}

</mosaic_0001>

<llo_original>
// kernel: ee_block_forward.1
$region0: #{ee_block_forward.1}
  #allocation0 [shape = 'u32[]', space=smem, size = 0x4, offset = 0x4, fixed_abs, tag = 'smem constant byte address 0x4 - core index']
  #allocation1 [shape = 'u32[72,128]{1,0:T(1,128)}', space=vmem, size = 0x9000, scoped, tag = 'internal scratch']
  #allocation2 [shape = 'f32[144,96]{1,0:T(8,128)}', space=vmem, size = 0x12000, scoped, tag = 'scratch operand']
  %s0 = inlined_call_operand.vmem [shape: f32[2,16,64], index: 0, kind: input, shape index: {}]
  %s1 = inlined_call_operand.vmem [shape: f32[9,64,96], index: 1, kind: input, shape index: {}]
  %s2 = inlined_call_operand.vmem [shape: f32[16,144], index: 2, kind: input, shape index: {}]
  %s3 = inlined_call_operand.vmem [shape: f32[16,96], index: 3, kind: input, shape index: {}]
  %s4 = inlined_call_operand.vmem [shape: f32[1,96], index: 4, kind: input, shape index: {}]
  %s5 = inlined_call_operand.vmem [shape: f32[1,96], index: 5, kind: input, shape index: {}]
  %s6 = inlined_call_operand.vmem [shape: f32[96,288], index: 6, kind: input, shape index: {}]
  %s7 = inlined_call_operand.vmem [shape: f32[1,288], index: 7, kind: input, shape index: {}]
  %s8 = inlined_call_operand.vmem [shape: f32[96,96], index: 8, kind: input, shape index: {}]
  %s9 = inlined_call_operand.vmem [shape: f32[1,96], index: 9, kind: input, shape index: {}]
  %s10 = inlined_call_operand.vmem [shape: f32[1,96], index: 10, kind: input, shape index: {}]
  %s11 = inlined_call_operand.vmem [shape: f32[1,96], index: 11, kind: input, shape index: {}]
  %s12 = inlined_call_operand.vmem [shape: f32[96,384], index: 12, kind: input, shape index: {}]
  %s13 = inlined_call_operand.vmem [shape: f32[1,384], index: 13, kind: input, shape index: {}]
  %s14 = inlined_call_operand.vmem [shape: f32[384,96], index: 14, kind: input, shape index: {}]
  %s15 = inlined_call_operand.vmem [shape: f32[1,96], index: 15, kind: input, shape index: {}]
  %s16 = inlined_call_operand.hbm [shape: f32[2,16,96], index: 16, kind: output, shape index: {}]
  %s17 = sld [smem:[#allocation0]]
  $region97: #{ee_block_forward.1} parent=0
    _
  %s19 = ssub.s32 1, %s17
  %s20 = scalar_select 0, %s19, %s17
  $region1: #{ee_block_forward.1} parent=0
    #allocation3 [shape = 'u8[16384]{0}', space=vmem, size = 0x4000, scoped, tag = 'output window, operand 0']
    #allocation4 [shape = 's32[2]{0}', space=sflag, size = 0x8, scoped, tag = 'scoped memory for ee_block_forward.1']
    %21 = vsyncpa [#allocation4], 0
    %s22 = scalar_lea.sflag [#allocation4], 1
    %23 = vsyncpa %s22, 0
    loop: start=0, step=1, limit=4
    $region2: #{ee_block_forward.1} parent=1 // loop_pre_header
      _
    $region3: #{ee_block_forward.1} parent=1 // loop_header
      %s25 = sphi 0, %s29
      %p26 = scmp.ge.s32.totalorder %s25, 4
      %s35 = sphi 0, %s37
      %s38 = sphi 0, %s35
      %s39 = sphi 0, %s38
      %s55 = sphi 0, %s39
      %s59 = sphi 0, %s59
      %s61 = sphi 0, %s59
      %s62 = sphi 0, %s61
      %s76 = sphi 0, %s62
      %s80 = sphi 0, %s80
      %s82 = sphi 0, %s80
      %s83 = sphi 0, %s82
      %s97 = sphi 0, %s83
      %s101 = sphi 0, %s101
      %s103 = sphi 0, %s101
      %s104 = sphi 0, %s103
      %s118 = sphi 0, %s104
      %s122 = sphi 0, %s122
      %s124 = sphi 0, %s122
      %s125 = sphi 0, %s124
      %s139 = sphi 0, %s125
      %s143 = sphi 0, %s143
      %s145 = sphi 0, %s143
      %s146 = sphi 0, %s145
      %s160 = sphi 0, %s146
      %s164 = sphi 0, %s164
      %s166 = sphi 0, %s164
      %s167 = sphi 0, %s166
      %s181 = sphi 0, %s167
      %s185 = sphi 0, %s185
      %s187 = sphi 0, %s185
      %s188 = sphi 0, %s187
      %s202 = sphi 0, %s188
      %s206 = sphi 0, %s206
      %s208 = sphi 0, %s206
      %s209 = sphi 0, %s208
      %s223 = sphi 0, %s209
      %s227 = sphi 0, %s227
      %s229 = sphi 0, %s227
      %s230 = sphi 0, %s229
      %s244 = sphi 0, %s230
      %s248 = sphi 0, %s248
      %s250 = sphi 0, %s248
      %s251 = sphi 0, %s250
      %s265 = sphi 0, %s251
      %s269 = sphi 0, %s269
      %s271 = sphi 0, %s269
      %s272 = sphi 0, %s271
      %s286 = sphi 0, %s272
      %s290 = sphi 0, %s290
      %s292 = sphi 0, %s290
      %s293 = sphi 0, %s292
      %s307 = sphi 0, %s293
      %s311 = sphi 0, %s311
      %s313 = sphi 0, %s311
      %s314 = sphi 0, %s313
      %s328 = sphi 0, %s314
      %s332 = sphi 0, %s332
      %s334 = sphi 0, %s332
      %s335 = sphi 0, %s334
      %s349 = sphi 0, %s335
      %s353 = sphi 0, %s353
      %s355 = sphi 0, %s353
      %s356 = sphi 0, %s355
      %s370 = sphi 0, %s356
      %s376 = sphi 0, %s378
      %s379 = sphi 0, %s376
      %s380 = sphi 0, %s379
      %s396 = sphi 0, %s380
    $region4: #{ee_block_forward.1} parent=1 // loop_header_branch
      %28 = sbr.rel (%p26) target = $region8
    $region5: #{ee_block_forward.1} parent=1 // loop_body
      %s30 = ssub.s32 %s25, 1
      %s31 = ssub.s32 %s25, 2
      %s32 = sadd.s32 %s25, 1
      %s33 = ssub.s32 %s25, %s32
      %p34 = scmp.eq.s32.totalorder %s33, 0
      %s36 = sadd.s32 %s35, 1
      %s37 = scalar_select %p34, %s35, %s36
      %p40 = pneg %p34
      %p41 = scmp.eq.s32.totalorder %s25, 1
      %p42 = por %p40, %p41
      %p43 = scmp.ne.s32.totalorder %s35, %s38
      %p44 = scmp.eq.s32.totalorder %s25, 0
      %p45 = por %p43, %p44
      %p46 = scmp.ne.s32.totalorder %s35, %s38
      %p47 = scmp.eq.s32.totalorder %s30, 1
      %p48 = por %p46, %p47
      %p49 = scmp.ne.s32.totalorder %s38, %s39
      %p50 = scmp.eq.s32.totalorder %s30, 0
      %p51 = por %p49, %p50
      %p52 = scmp.ne.s32.totalorder %s38, %s39
      %p53 = scmp.eq.s32.totalorder %s31, 1
      %p54 = por %p52, %p53
      %p56 = scmp.ne.s32.totalorder %s39, %s55
      %p57 = scmp.eq.s32.totalorder %s31, 0
      %p58 = por %p56, %p57
      %s60 = sadd.s32 %s59, 1
      %p63 = scmp.eq.s32.totalorder %s25, 1
      %p64 = scmp.ne.s32.totalorder %s59, %s61
      %p65 = scmp.eq.s32.totalorder %s25, 0
      %p66 = por %p64, %p65
      %p67 = scmp.ne.s32.totalorder %s59, %s61
      %p68 = scmp.eq.s32.totalorder %s30, 1
      %p69 = por %p67, %p68
      %p70 = scmp.ne.s32.totalorder %s61, %s62
      %p71 = scmp.eq.s32.totalorder %s30, 0
      %p72 = por %p70, %p71
      %p73 = scmp.ne.s32.totalorder %s61, %s62
      %p74 = scmp.eq.s32.totalorder %s31, 1
      %p75 = por %p73, %p74
      %p77 = scmp.ne.s32.totalorder %s62, %s76
      %p78 = scmp.eq.s32.totalorder %s31, 0
      %p79 = por %p77, %p78
      %s81 = sadd.s32 %s80, 1
      %p84 = scmp.eq.s32.totalorder %s25, 1
      %p85 = scmp.ne.s32.totalorder %s80, %s82
      %p86 = scmp.eq.s32.totalorder %s25, 0
      %p87 = por %p85, %p86
      %p88 = scmp.ne.s32.totalorder %s80, %s82
      %p89 = scmp.eq.s32.totalorder %s30, 1
      %p90 = por %p88, %p89
      %p91 = scmp.ne.s32.totalorder %s82, %s83
      %p92 = scmp.eq.s32.totalorder %s30, 0
      %p93 = por %p91, %p92
      %p94 = scmp.ne.s32.totalorder %s82, %s83
      %p95 = scmp.eq.s32.totalorder %s31, 1
      %p96 = por %p94, %p95
      %p98 = scmp.ne.s32.totalorder %s83, %s97
      %p99 = scmp.eq.s32.totalorder %s31, 0
      %p100 = por %p98, %p99
      %s102 = sadd.s32 %s101, 1
      %p105 = scmp.eq.s32.totalorder %s25, 1
      %p106 = scmp.ne.s32.totalorder %s101, %s103
      %p107 = scmp.eq.s32.totalorder %s25, 0
      %p108 = por %p106, %p107
      %p109 = scmp.ne.s32.totalorder %s101, %s103
      %p110 = scmp.eq.s32.totalorder %s30, 1
      %p111 = por %p109, %p110
      %p112 = scmp.ne.s32.totalorder %s103, %s104
      %p113 = scmp.eq.s32.totalorder %s30, 0
      %p114 = por %p112, %p113
      %p115 = scmp.ne.s32.totalorder %s103, %s104
      %p116 = scmp.eq.s32.totalorder %s31, 1
      %p117 = por %p115, %p116
      %p119 = scmp.ne.s32.totalorder %s104, %s118
      %p120 = scmp.eq.s32.totalorder %s31, 0
      %p121 = por %p119, %p120
      %s123 = sadd.s32 %s122, 1
      %p126 = scmp.eq.s32.totalorder %s25, 1
      %p127 = scmp.ne.s32.totalorder %s122, %s124
      %p128 = scmp.eq.s32.totalorder %s25, 0
      %p129 = por %p127, %p128
      %p130 = scmp.ne.s32.totalorder %s122, %s124
      %p131 = scmp.eq.s32.totalorder %s30, 1
      %p132 = por %p130, %p131
      %p133 = scmp.ne.s32.totalorder %s124, %s125
      %p134 = scmp.eq.s32.totalorder %s30, 0
      %p135 = por %p133, %p134
      %p136 = scmp.ne.s32.totalorder %s124, %s125
      %p137 = scmp.eq.s32.totalorder %s31, 1
      %p138 = por %p136, %p137
      %p140 = scmp.ne.s32.totalorder %s125, %s139
      %p141 = scmp.eq.s32.totalorder %s31, 0
      %p142 = por %p140, %p141
      %s144 = sadd.s32 %s143, 1
      %p147 = scmp.eq.s32.totalorder %s25, 1
      %p148 = scmp.ne.s32.totalorder %s143, %s145
      %p149 = scmp.eq.s32.totalorder %s25, 0
      %p150 = por %p148, %p149
      %p151 = scmp.ne.s32.totalorder %s143, %s145
      %p152 = scmp.eq.s32.totalorder %s30, 1
      %p153 = por %p151, %p152
      %p154 = scmp.ne.s32.totalorder %s145, %s146
      %p155 = scmp.eq.s32.totalorder %s30, 0
      %p156 = por %p154, %p155
      %p157 = scmp.ne.s32.totalorder %s145, %s146
      %p158 = scmp.eq.s32.totalorder %s31, 1
      %p159 = por %p157, %p158
      %p161 = scmp.ne.s32.totalorder %s146, %s160
      %p162 = scmp.eq.s32.totalorder %s31, 0
      %p163 = por %p161, %p162
      %s165 = sadd.s32 %s164, 1
      %p168 = scmp.eq.s32.totalorder %s25, 1
      %p169 = scmp.ne.s32.totalorder %s164, %s166
      %p170 = scmp.eq.s32.totalorder %s25, 0
      %p171 = por %p169, %p170
      %p172 = scmp.ne.s32.totalorder %s164, %s166
      %p173 = scmp.eq.s32.totalorder %s30, 1
      %p174 = por %p172, %p173
      %p175 = scmp.ne.s32.totalorder %s166, %s167
      %p176 = scmp.eq.s32.totalorder %s30, 0
      %p177 = por %p175, %p176
      %p178 = scmp.ne.s32.totalorder %s166, %s167
      %p179 = scmp.eq.s32.totalorder %s31, 1
      %p180 = por %p178, %p179
      %p182 = scmp.ne.s32.totalorder %s167, %s181
      %p183 = scmp.eq.s32.totalorder %s31, 0
      %p184 = por %p182, %p183
      %s186 = sadd.s32 %s185, 1
      %p189 = scmp.eq.s32.totalorder %s25, 1
      %p190 = scmp.ne.s32.totalorder %s185, %s187
      %p191 = scmp.eq.s32.totalorder %s25, 0
      %p192 = por %p190, %p191
      %p193 = scmp.ne.s32.totalorder %s185, %s187
      %p194 = scmp.eq.s32.totalorder %s30, 1
      %p195 = por %p193, %p194
      %p196 = scmp.ne.s32.totalorder %s187, %s188
      %p197 = scmp.eq.s32.totalorder %s30, 0
      %p198 = por %p196, %p197
      %p199 = scmp.ne.s32.totalorder %s187, %s188
      %p200 = scmp.eq.s32.totalorder %s31, 1
      %p201 = por %p199, %p200
      %p203 = scmp.ne.s32.totalorder %s188, %s202
      %p204 = scmp.eq.s32.totalorder %s31, 0
      %p205 = por %p203, %p204
      %s207 = sadd.s32 %s206, 1
      %p210 = scmp.eq.s32.totalorder %s25, 1
      %p211 = scmp.ne.s32.totalorder %s206, %s208
      %p212 = scmp.eq.s32.totalorder %s25, 0
      %p213 = por %p211, %p212
      %p214 = scmp.ne.s32.totalorder %s206, %s208
      %p215 = scmp.eq.s32.totalorder %s30, 1
      %p216 = por %p214, %p215
      %p217 = scmp.ne.s32.totalorder %s208, %s209
      %p218 = scmp.eq.s32.totalorder %s30, 0
      %p219 = por %p217, %p218
      %p220 = scmp.ne.s32.totalorder %s208, %s209
      %p221 = scmp.eq.s32.totalorder %s31, 1
      %p222 = por %p220, %p221
      %p224 = scmp.ne.s32.totalorder %s209, %s223
      %p225 = scmp.eq.s32.totalorder %s31, 0
      %p226 = por %p224, %p225
      %s228 = sadd.s32 %s227, 1
      %p231 = scmp.eq.s32.totalorder %s25, 1
      %p232 = scmp.ne.s32.totalorder %s227, %s229
      %p233 = scmp.eq.s32.totalorder %s25, 0
      %p234 = por %p232, %p233
      %p235 = scmp.ne.s32.totalorder %s227, %s229
      %p236 = scmp.eq.s32.totalorder %s30, 1
      %p237 = por %p235, %p236
      %p238 = scmp.ne.s32.totalorder %s229, %s230
      %p239 = scmp.eq.s32.totalorder %s30, 0
      %p240 = por %p238, %p239
      %p241 = scmp.ne.s32.totalorder %s229, %s230
      %p242 = scmp.eq.s32.totalorder %s31, 1
      %p243 = por %p241, %p242
      %p245 = scmp.ne.s32.totalorder %s230, %s244
      %p246 = scmp.eq.s32.totalorder %s31, 0
      %p247 = por %p245, %p246
      %s249 = sadd.s32 %s248, 1
      %p252 = scmp.eq.s32.totalorder %s25, 1
      %p253 = scmp.ne.s32.totalorder %s248, %s250
      %p254 = scmp.eq.s32.totalorder %s25, 0
      %p255 = por %p253, %p254
      %p256 = scmp.ne.s32.totalorder %s248, %s250
      %p257 = scmp.eq.s32.totalorder %s30, 1
      %p258 = por %p256, %p257
      %p259 = scmp.ne.s32.totalorder %s250, %s251
      %p260 = scmp.eq.s32.totalorder %s30, 0
      %p261 = por %p259, %p260
      %p262 = scmp.ne.s32.totalorder %s250, %s251
      %p263 = scmp.eq.s32.totalorder %s31, 1
      %p264 = por %p262, %p263
      %p266 = scmp.ne.s32.totalorder %s251, %s265
      %p267 = scmp.eq.s32.totalorder %s31, 0
      %p268 = por %p266, %p267
      %s270 = sadd.s32 %s269, 1
      %p273 = scmp.eq.s32.totalorder %s25, 1
      %p274 = scmp.ne.s32.totalorder %s269, %s271
      %p275 = scmp.eq.s32.totalorder %s25, 0
      %p276 = por %p274, %p275
      %p277 = scmp.ne.s32.totalorder %s269, %s271
      %p278 = scmp.eq.s32.totalorder %s30, 1
      %p279 = por %p277, %p278
      %p280 = scmp.ne.s32.totalorder %s271, %s272
      %p281 = scmp.eq.s32.totalorder %s30, 0
      %p282 = por %p280, %p281
      %p283 = scmp.ne.s32.totalorder %s271, %s272
      %p284 = scmp.eq.s32.totalorder %s31, 1
      %p285 = por %p283, %p284
      %p287 = scmp.ne.s32.totalorder %s272, %s286
      %p288 = scmp.eq.s32.totalorder %s31, 0
      %p289 = por %p287, %p288
      %s291 = sadd.s32 %s290, 1
      %p294 = scmp.eq.s32.totalorder %s25, 1
      %p295 = scmp.ne.s32.totalorder %s290, %s292
      %p296 = scmp.eq.s32.totalorder %s25, 0
      %p297 = por %p295, %p296
      %p298 = scmp.ne.s32.totalorder %s290, %s292
      %p299 = scmp.eq.s32.totalorder %s30, 1
      %p300 = por %p298, %p299
      %p301 = scmp.ne.s32.totalorder %s292, %s293
      %p302 = scmp.eq.s32.totalorder %s30, 0
      %p303 = por %p301, %p302
      %p304 = scmp.ne.s32.totalorder %s292, %s293
      %p305 = scmp.eq.s32.totalorder %s31, 1
      %p306 = por %p304, %p305
      %p308 = scmp.ne.s32.totalorder %s293, %s307
      %p309 = scmp.eq.s32.totalorder %s31, 0
      %p310 = por %p308, %p309
      %s312 = sadd.s32 %s311, 1
      %p315 = scmp.eq.s32.totalorder %s25, 1
      %p316 = scmp.ne.s32.totalorder %s311, %s313
      %p317 = scmp.eq.s32.totalorder %s25, 0
      %p318 = por %p316, %p317
      %p319 = scmp.ne.s32.totalorder %s311, %s313
      %p320 = scmp.eq.s32.totalorder %s30, 1
      %p321 = por %p319, %p320
      %p322 = scmp.ne.s32.totalorder %s313, %s314
      %p323 = scmp.eq.s32.totalorder %s30, 0
      %p324 = por %p322, %p323
      %p325 = scmp.ne.s32.totalorder %s313, %s314
      %p326 = scmp.eq.s32.totalorder %s31, 1
      %p327 = por %p325, %p326
      %p329 = scmp.ne.s32.totalorder %s314, %s328
      %p330 = scmp.eq.s32.totalorder %s31, 0
      %p331 = por %p329, %p330
      %s333 = sadd.s32 %s332, 1
      %p336 = scmp.eq.s32.totalorder %s25, 1
      %p337 = scmp.ne.s32.totalorder %s332, %s334
      %p338 = scmp.eq.s32.totalorder %s25, 0
      %p339 = por %p337, %p338
      %p340 = scmp.ne.s32.totalorder %s332, %s334
      %p341 = scmp.eq.s32.totalorder %s30, 1
      %p342 = por %p340, %p341
      %p343 = scmp.ne.s32.totalorder %s334, %s335
      %p344 = scmp.eq.s32.totalorder %s30, 0
      %p345 = por %p343, %p344
      %p346 = scmp.ne.s32.totalorder %s334, %s335
      %p347 = scmp.eq.s32.totalorder %s31, 1
      %p348 = por %p346, %p347
      %p350 = scmp.ne.s32.totalorder %s335, %s349
      %p351 = scmp.eq.s32.totalorder %s31, 0
      %p352 = por %p350, %p351
      %s354 = sadd.s32 %s353, 1
      %p357 = scmp.eq.s32.totalorder %s25, 1
      %p358 = scmp.ne.s32.totalorder %s353, %s355
      %p359 = scmp.eq.s32.totalorder %s25, 0
      %p360 = por %p358, %p359
      %p361 = scmp.ne.s32.totalorder %s353, %s355
      %p362 = scmp.eq.s32.totalorder %s30, 1
      %p363 = por %p361, %p362
      %p364 = scmp.ne.s32.totalorder %s355, %s356
      %p365 = scmp.eq.s32.totalorder %s30, 0
      %p366 = por %p364, %p365
      %p367 = scmp.ne.s32.totalorder %s355, %s356
      %p368 = scmp.eq.s32.totalorder %s31, 1
      %p369 = por %p367, %p368
      %p371 = scmp.ne.s32.totalorder %s356, %s370
      %p372 = scmp.eq.s32.totalorder %s31, 0
      %p373 = por %p371, %p372
      %s374 = ssub.s32 %s25, %s32
      %p375 = scmp.eq.s32.totalorder %s374, 0
      %s377 = sadd.s32 %s376, 1
      %s378 = scalar_select %p375, %s376, %s377
      %p381 = pneg %p375
      %p382 = scmp.eq.s32.totalorder %s25, 1
      %p383 = por %p381, %p382
      %p384 = scmp.ne.s32.totalorder %s376, %s379
      %p385 = scmp.eq.s32.totalorder %s25, 0
      %p386 = por %p384, %p385
      %p387 = scmp.ne.s32.totalorder %s376, %s379
      %p388 = scmp.eq.s32.totalorder %s30, 1
      %p389 = por %p387, %p388
      %p390 = scmp.ne.s32.totalorder %s379, %s380
      %p391 = scmp.eq.s32.totalorder %s30, 0
      %p392 = por %p390, %p391
      %p393 = scmp.ne.s32.totalorder %s379, %s380
      %p394 = scmp.eq.s32.totalorder %s31, 1
      %p395 = por %p393, %p394
      %p397 = scmp.ne.s32.totalorder %s380, %s396
      %p398 = scmp.eq.s32.totalorder %s31, 0
      %p399 = por %p397, %p398
      %p400 = scmp.le.s32.totalorder 1, %s25
      %p401 = scmp.lt.s32.totalorder %s25, 3
      %p402 = pnand %p400, %p401
      %p403 = pneg %p402
      // Predicated region
      $region9: #{ee_block_forward.1} parent=5 // pred_check
        _
      $region10: #{ee_block_forward.1} parent=5 // pred_check_branch
        %405 = sbr.rel (%p402) target = $region12
      $region11: #{ee_block_forward.1} parent=5 // pred_region
        %s406 = ssub.s32 %s25, 1
        // Predicated region
        $region13: #{ee_block_forward.1} parent=11 // pred_check
          %p407 = pneg %p72
        $region14: #{ee_block_forward.1} parent=11 // pred_check_branch
          %409 = sbr.rel (%p407) target = $region16
        $region15: #{ee_block_forward.1} parent=11 // pred_region
          _
        $region16: #{ee_block_forward.1} parent=11 // pred_fallthru
          _
        // Predicated region
        $region17: #{ee_block_forward.1} parent=11 // pred_check
          %p410 = pneg %p93
        $region18: #{ee_block_forward.1} parent=11 // pred_check_branch
          %412 = sbr.rel (%p410) target = $region20
        $region19: #{ee_block_forward.1} parent=11 // pred_region
          _
        $region20: #{ee_block_forward.1} parent=11 // pred_fallthru
          _
        // Predicated region
        $region21: #{ee_block_forward.1} parent=11 // pred_check
          %p413 = pneg %p114
        $region22: #{ee_block_forward.1} parent=11 // pred_check_branch
          %415 = sbr.rel (%p413) target = $region24
        $region23: #{ee_block_forward.1} parent=11 // pred_region
          _
        $region24: #{ee_block_forward.1} parent=11 // pred_fallthru
          _
        // Predicated region
        $region25: #{ee_block_forward.1} parent=11 // pred_check
          %p416 = pneg %p135
        $region26: #{ee_block_forward.1} parent=11 // pred_check_branch
          %418 = sbr.rel (%p416) target = $region28
        $region27: #{ee_block_forward.1} parent=11 // pred_region
          _
        $region28: #{ee_block_forward.1} parent=11 // pred_fallthru
          _
        // Predicated region
        $region29: #{ee_block_forward.1} parent=11 // pred_check
          %p419 = pneg %p156
        $region30: #{ee_block_forward.1} parent=11 // pred_check_branch
          %421 = sbr.rel (%p419) target = $region32
        $region31: #{ee_block_forward.1} parent=11 // pred_region
          _
        $region32: #{ee_block_forward.1} parent=11 // pred_fallthru
          _
        // Predicated region
        $region33: #{ee_block_forward.1} parent=11 // pred_check
          %p422 = pneg %p177
        $region34: #{ee_block_forward.1} parent=11 // pred_check_branch
          %424 = sbr.rel (%p422) target = $region36
        $region35: #{ee_block_forward.1} parent=11 // pred_region
          _
        $region36: #{ee_block_forward.1} parent=11 // pred_fallthru
          _
        // Predicated region
        $region37: #{ee_block_forward.1} parent=11 // pred_check
          %p425 = pneg %p198
        $region38: #{ee_block_forward.1} parent=11 // pred_check_branch
          %427 = sbr.rel (%p425) target = $region40
        $region39: #{ee_block_forward.1} parent=11 // pred_region
          _
        $region40: #{ee_block_forward.1} parent=11 // pred_fallthru
          _
        // Predicated region
        $region41: #{ee_block_forward.1} parent=11 // pred_check
          %p428 = pneg %p219
        $region42: #{ee_block_forward.1} parent=11 // pred_check_branch
          %430 = sbr.rel (%p428) target = $region44
        $region43: #{ee_block_forward.1} parent=11 // pred_region
          _
        $region44: #{ee_block_forward.1} parent=11 // pred_fallthru
          _
        // Predicated region
        $region45: #{ee_block_forward.1} parent=11 // pred_check
          %p431 = pneg %p240
        $region46: #{ee_block_forward.1} parent=11 // pred_check_branch
          %433 = sbr.rel (%p431) target = $region48
        $region47: #{ee_block_forward.1} parent=11 // pred_region
          _
        $region48: #{ee_block_forward.1} parent=11 // pred_fallthru
          _
        // Predicated region
        $region49: #{ee_block_forward.1} parent=11 // pred_check
          %p434 = pneg %p261
        $region50: #{ee_block_forward.1} parent=11 // pred_check_branch
          %436 = sbr.rel (%p434) target = $region52
        $region51: #{ee_block_forward.1} parent=11 // pred_region
          _
        $region52: #{ee_block_forward.1} parent=11 // pred_fallthru
          _
        // Predicated region
        $region53: #{ee_block_forward.1} parent=11 // pred_check
          %p437 = pneg %p282
        $region54: #{ee_block_forward.1} parent=11 // pred_check_branch
          %439 = sbr.rel (%p437) target = $region56
        $region55: #{ee_block_forward.1} parent=11 // pred_region
          _
        $region56: #{ee_block_forward.1} parent=11 // pred_fallthru
          _
        // Predicated region
        $region57: #{ee_block_forward.1} parent=11 // pred_check
          %p440 = pneg %p303
        $region58: #{ee_block_forward.1} parent=11 // pred_check_branch
          %442 = sbr.rel (%p440) target = $region60
        $region59: #{ee_block_forward.1} parent=11 // pred_region
          _
        $region60: #{ee_block_forward.1} parent=11 // pred_fallthru
          _
        // Predicated region
        $region61: #{ee_block_forward.1} parent=11 // pred_check
          %p443 = pneg %p324
        $region62: #{ee_block_forward.1} parent=11 // pred_check_branch
          %445 = sbr.rel (%p443) target = $region64
        $region63: #{ee_block_forward.1} parent=11 // pred_region
          _
        $region64: #{ee_block_forward.1} parent=11 // pred_fallthru
          _
        // Predicated region
        $region65: #{ee_block_forward.1} parent=11 // pred_check
          %p446 = pneg %p345
        $region66: #{ee_block_forward.1} parent=11 // pred_check_branch
          %448 = sbr.rel (%p446) target = $region68
        $region67: #{ee_block_forward.1} parent=11 // pred_region
          _
        $region68: #{ee_block_forward.1} parent=11 // pred_fallthru
          _
        // Predicated region
        $region69: #{ee_block_forward.1} parent=11 // pred_check
          %p449 = pneg %p366
        $region70: #{ee_block_forward.1} parent=11 // pred_check_branch
          %451 = sbr.rel (%p449) target = $region72
        $region71: #{ee_block_forward.1} parent=11 // pred_region
          _
        $region72: #{ee_block_forward.1} parent=11 // pred_fallthru
          _
      $region12: #{ee_block_forward.1} parent=5 // pred_fallthru
        _
      %p452 = scmp.lt.s32.totalorder %s25, 2
      // Predicated region
      $region73: #{ee_block_forward.1} parent=5 // pred_check
        %p453 = pneg %p452
      $region74: #{ee_block_forward.1} parent=5 // pred_check_branch
        %455 = sbr.rel (%p453) target = $region76
      $region75: #{ee_block_forward.1} parent=5 // pred_region
        // Predicated region
        $region77: #{ee_block_forward.1} parent=75 // pred_check
          %p456 = pneg %p45
        $region78: #{ee_block_forward.1} parent=75 // pred_check_branch
          %458 = sbr.rel (%p456) target = $region80
        $region79: #{ee_block_forward.1} parent=75 // pred_region
          %p459 = scmp.lt.s32.totalorder %s25, 1
          %s460 = scalar_select %p459, %s25, 1
          %s461 = smul.addr %s460, 2
          %s462 = smul.addr %s461, 8
          %s463 = scalar_lea.vmem %s0, %s462
        $region80: #{ee_block_forward.1} parent=75 // pred_fallthru
          _
      $region76: #{ee_block_forward.1} parent=5 // pred_fallthru
        _
      %p464 = scmp.le.s32.totalorder 1, %s25
      %p465 = scmp.lt.s32.totalorder %s25, 3
      %p466 = pnand %p464, %p465
      %p467 = pneg %p466
      // Predicated region
      $region81: #{ee_block_forward.1} parent=5 // pred_check
        _
      $region82: #{ee_block_forward.1} parent=5 // pred_check_branch
        %469 = sbr.rel (%p466) target = $region84
      $region83: #{ee_block_forward.1} parent=5 // pred_region
        %s470 = ssub.s32 %s25, 1
        %p471 = scmp.lt.s32.totalorder %s30, 1
        %s472 = scalar_select %p471, %s30, 1
        %s473 = smul.addr %s472, 2
        %s474 = smul.addr %s473, 8
        %s475 = scalar_lea.vmem %s0, %s474
        %p476 = pneg %p51
        %p477 = pneg %p48
        %p478 = pneg %p72
        %p479 = pneg %p69
        %p480 = pneg %p93
        %p481 = pneg %p90
        %p482 = pneg %p114
        %p483 = pneg %p111
        %p484 = pneg %p135
        %p485 = pneg %p132
        %p486 = pneg %p156
        %p487 = pneg %p153
        %p488 = pneg %p177
        %p489 = pneg %p174
        %p490 = pneg %p198
        %p491 = pneg %p195
        %p492 = pneg %p219
        %p493 = pneg %p216
        %p494 = pneg %p240
        %p495 = pneg %p237
        %p496 = pneg %p261
        %p497 = pneg %p258
        %p498 = pneg %p282
        %p499 = pneg %p279
        %p500 = pneg %p303
        %p501 = pneg %p300
        %p502 = pneg %p324
        %p503 = pneg %p321
        %p504 = pneg %p345
        %p505 = pneg %p342
        %p506 = pneg %p366
        %p507 = pneg %p363
        %p508 = pneg %p392
        %p509 = pneg %p389
        %s510 = sand.u32 %s379, 1
        %s511 = scalar_lea.sflag [#allocation4], %s510
        %s512 = sand.u32 %s379, 1
        %s513 = smul.addr %s512, 16
        %s514 = scalar_lea.vmem [#allocation3], %s513
        %p515 = scmp.lt.s32.totalorder %s30, 1
        %s516 = scalar_select %p515, %s30, 1
        %s517 = smul.addr %s516, 2
        %s518 = smul.addr %s517, 8
        %s519 = scalar_lea.vmem %s0, %s518
        %v520 = vld [vmem:[%s519] sm:$0xff]
        %v521 = vld [vmem:[%s519 + $0x8] sm:$0xff]
        %v522 = vld [vmem:[%s1] sm:$0xff]
        %v523 = vld [vmem:[%s1 + $0x8] sm:$0xff]
        %v524 = vld [vmem:[%s1 + $0x10] sm:$0xff]
        %v525 = vld [vmem:[%s1 + $0x18] sm:$0xff]
        %v526 = vld [vmem:[%s1 + $0x20] sm:$0xff]
        %v527 = vld [vmem:[%s1 + $0x28] sm:$0xff]
        %v528 = vld [vmem:[%s1 + $0x30] sm:$0xff]
        %v529 = vld [vmem:[%s1 + $0x38] sm:$0xff]
        %vm530 = vcmask 523264
        %v532 = vsel %vm530, %v520, 0
        %v535 = vsel %vm530, %v521, 0
        %537 = vmatpush.msra.mxu0 0.0
        %538 = vmatpush.msra.mxu0 0.0
        %539 = vmatpush.msra.mxu0 0.0
        %540 = vmatpush.msra.mxu0 0.0
        %541 = vmatpush.msra.mxu0 0.0
        %542 = vmatpush.msra.mxu0 0.0
        %543 = vmatpush.msra.mxu0 0.0
        %544 = vmatpush.msra.mxu0 0.0
        %545 = vmatpush.msra.mxu0 %v529
        %546 = vmatpush.msra.mxu0 %v528
        %547 = vmatpush.msra.mxu0 %v527
        %548 = vmatpush.msra.mxu0 %v526
        %549 = vmatpush.msra.mxu0 %v525
        %550 = vmatpush.msra.mxu0 %v524
        %551 = vmatpush.msra.mxu0 %v523
        %552 = vmatpush.msra.mxu0 %v522
        %553 = vmatmul.f32.gmra.mxu0 %v532
        %v554 = vpop.f32.mrf.mxu0
        %v555 = vadd.f32 0.0, %v554
        %556 = vmatmul.f32.gmra.mxu0 %v535
        %v557 = vpop.f32.mrf.mxu0
        %v558 = vadd.f32 0.0, %v557
        %559 = vdwg.mxu0
        %vm560 = vcmask 785408
        %561 = vst.msk [vmem:[#allocation2] sm:$0xff] %vm560, %v555
        %562 = vst.msk [vmem:[#allocation2 + $0x8] sm:$0xff] %vm560, %v558
        %s563 = scalar_lea.vmem %s1, 64
        %v564 = vld [vmem:[%s563] sm:$0xff]
        %v565 = vld [vmem:[%s563 + $0x8] sm:$0xff]
        %v566 = vld [vmem:[%s563 + $0x10] sm:$0xff]
        %v567 = vld [vmem:[%s563 + $0x18] sm:$0xff]
        %v568 = vld [vmem:[%s563 + $0x20] sm:$0xff]
        %v569 = vld [vmem:[%s563 + $0x28] sm:$0xff]
        %v570 = vld [vmem:[%s563 + $0x30] sm:$0xff]
        %v571 = vld [vmem:[%s563 + $0x38] sm:$0xff]
        %572 = vmatpush.msra.mxu0 0.0
        %573 = vmatpush.msra.mxu0 0.0
        %574 = vmatpush.msra.mxu0 0.0
        %575 = vmatpush.msra.mxu0 0.0
        %576 = vmatpush.msra.mxu0 0.0
        %577 = vmatpush.msra.mxu0 0.0
        %578 = vmatpush.msra.mxu0 0.0
        %579 = vmatpush.msra.mxu0 0.0
        %580 = vmatpush.msra.mxu0 %v571
        %581 = vmatpush.msra.mxu0 %v570
        %582 = vmatpush.msra.mxu0 %v569
        %583 = vmatpush.msra.mxu0 %v568
        %584 = vmatpush.msra.mxu0 %v567
        %585 = vmatpush.msra.mxu0 %v566
        %586 = vmatpush.msra.mxu0 %v565
        %587 = vmatpush.msra.mxu0 %v564
        %588 = vmatmul.f32.gmra.mxu0 %v532
        %v589 = vpop.f32.mrf.mxu0
        %v590 = vadd.f32 0.0, %v589
        %591 = vmatmul.f32.gmra.mxu0 %v535
        %v592 = vpop.f32.mrf.mxu0
        %v593 = vadd.f32 0.0, %v592
        %594 = vdwg.mxu0
        %595 = vst.msk [vmem:[#allocation2 + $0x10] sm:$0xff] %vm560, %v590
        %596 = vst.msk [vmem:[#allocation2 + $0x18] sm:$0xff] %vm560, %v593
        %s597 = scalar_lea.vmem %s1, 128
        %v598 = vld [vmem:[%s597] sm:$0xff]
        %v599 = vld [vmem:[%s597 + $0x8] sm:$0xff]
        %v600 = vld [vmem:[%s597 + $0x10] sm:$0xff]
        %v601 = vld [vmem:[%s597 + $0x18] sm:$0xff]
        %v602 = vld [vmem:[%s597 + $0x20] sm:$0xff]
        %v603 = vld [vmem:[%s597 + $0x28] sm:$0xff]
        %v604 = vld [vmem:[%s597 + $0x30] sm:$0xff]
        %v605 = vld [vmem:[%s597 + $0x38] sm:$0xff]
        %606 = vmatpush.msra.mxu0 0.0
        %607 = vmatpush.msra.mxu0 0.0
        %608 = vmatpush.msra.mxu0 0.0
        %609 = vmatpush.msra.mxu0 0.0
        %610 = vmatpush.msra.mxu0 0.0
        %611 = vmatpush.msra.mxu0 0.0
        %612 = vmatpush.msra.mxu0 0.0
        %613 = vmatpush.msra.mxu0 0.0
        %614 = vmatpush.msra.mxu0 %v605
        %615 = vmatpush.msra.mxu0 %v604
        %616 = vmatpush.msra.mxu0 %v603
        %617 = vmatpush.msra.mxu0 %v602
        %618 = vmatpush.msra.mxu0 %v601
        %619 = vmatpush.msra.mxu0 %v600
        %620 = vmatpush.msra.mxu0 %v599
        %621 = vmatpush.msra.mxu0 %v598
        %622 = vmatmul.f32.gmra.mxu0 %v532
        %v623 = vpop.f32.mrf.mxu0
        %v624 = vadd.f32 0.0, %v623
        %625 = vmatmul.f32.gmra.mxu0 %v535
        %v626 = vpop.f32.mrf.mxu0
        %v627 = vadd.f32 0.0, %v626
        %628 = vdwg.mxu0
        %629 = vst.msk [vmem:[#allocation2 + $0x20] sm:$0xff] %vm560, %v624
        %630 = vst.msk [vmem:[#allocation2 + $0x28] sm:$0xff] %vm560, %v627
        %s631 = scalar_lea.vmem %s1, 192
        %v632 = vld [vmem:[%s631] sm:$0xff]
        %v633 = vld [vmem:[%s631 + $0x8] sm:$0xff]
        %v634 = vld [vmem:[%s631 + $0x10] sm:$0xff]
        %v635 = vld [vmem:[%s631 + $0x18] sm:$0xff]
        %v636 = vld [vmem:[%s631 + $0x20] sm:$0xff]
        %v637 = vld [vmem:[%s631 + $0x28] sm:$0xff]
        %v638 = vld [vmem:[%s631 + $0x30] sm:$0xff]
        %v639 = vld [vmem:[%s631 + $0x38] sm:$0xff]
        %640 = vmatpush.msra.mxu0 0.0
        %641 = vmatpush.msra.mxu0 0.0
        %642 = vmatpush.msra.mxu0 0.0
        %643 = vmatpush.msra.mxu0 0.0
        %644 = vmatpush.msra.mxu0 0.0
        %645 = vmatpush.msra.mxu0 0.0
        %646 = vmatpush.msra.mxu0 0.0
        %647 = vmatpush.msra.mxu0 0.0
        %648 = vmatpush.msra.mxu0 %v639
        %649 = vmatpush.msra.mxu0 %v638
        %650 = vmatpush.msra.mxu0 %v637
        %651 = vmatpush.msra.mxu0 %v636
        %652 = vmatpush.msra.mxu0 %v635
        %653 = vmatpush.msra.mxu0 %v634
        %654 = vmatpush.msra.mxu0 %v633
        %655 = vmatpush.msra.mxu0 %v632
        %656 = vmatmul.f32.gmra.mxu0 %v532
        %v657 = vpop.f32.mrf.mxu0
        %v658 = vadd.f32 0.0, %v657
        %659 = vmatmul.f32.gmra.mxu0 %v535
        %v660 = vpop.f32.mrf.mxu0
        %v661 = vadd.f32 0.0, %v660
        %662 = vdwg.mxu0
        %663 = vst.msk [vmem:[#allocation2 + $0x30] sm:$0xff] %vm560, %v658
        %664 = vst.msk [vmem:[#allocation2 + $0x38] sm:$0xff] %vm560, %v661
        %s665 = scalar_lea.vmem %s1, 256
        %v666 = vld [vmem:[%s665] sm:$0xff]
        %v667 = vld [vmem:[%s665 + $0x8] sm:$0xff]
        %v668 = vld [vmem:[%s665 + $0x10] sm:$0xff]
        %v669 = vld [vmem:[%s665 + $0x18] sm:$0xff]
        %v670 = vld [vmem:[%s665 + $0x20] sm:$0xff]
        %v671 = vld [vmem:[%s665 + $0x28] sm:$0xff]
        %v672 = vld [vmem:[%s665 + $0x30] sm:$0xff]
        %v673 = vld [vmem:[%s665 + $0x38] sm:$0xff]
        %674 = vmatpush.msra.mxu0 0.0
        %675 = vmatpush.msra.mxu0 0.0
        %676 = vmatpush.msra.mxu0 0.0
        %677 = vmatpush.msra.mxu0 0.0
        %678 = vmatpush.msra.mxu0 0.0
        %679 = vmatpush.msra.mxu0 0.0
        %680 = vmatpush.msra.mxu0 0.0
        %681 = vmatpush.msra.mxu0 0.0
        %682 = vmatpush.msra.mxu0 %v673
        %683 = vmatpush.msra.mxu0 %v672
        %684 = vmatpush.msra.mxu0 %v671
        %685 = vmatpush.msra.mxu0 %v670
        %686 = vmatpush.msra.mxu0 %v669
        %687 = vmatpush.msra.mxu0 %v668
        %688 = vmatpush.msra.mxu0 %v667
        %689 = vmatpush.msra.mxu0 %v666
        %690 = vmatmul.f32.gmra.mxu0 %v532
        %v691 = vpop.f32.mrf.mxu0
        %v692 = vadd.f32 0.0, %v691
        %693 = vmatmul.f32.gmra.mxu0 %v535
        %v694 = vpop.f32.mrf.mxu0
        %v695 = vadd.f32 0.0, %v694
        %696 = vdwg.mxu0
        %697 = vst.msk [vmem:[#allocation2 + $0x40] sm:$0xff] %vm560, %v692
        %698 = vst.msk [vmem:[#allocation2 + $0x48] sm:$0xff] %vm560, %v695
        %s699 = scalar_lea.vmem %s1, 320
        %v700 = vld [vmem:[%s699] sm:$0xff]
        %v701 = vld [vmem:[%s699 + $0x8] sm:$0xff]
        %v702 = vld [vmem:[%s699 + $0x10] sm:$0xff]
        %v703 = vld [vmem:[%s699 + $0x18] sm:$0xff]
        %v704 = vld [vmem:[%s699 + $0x20] sm:$0xff]
        %v705 = vld [vmem:[%s699 + $0x28] sm:$0xff]
        %v706 = vld [vmem:[%s699 + $0x30] sm:$0xff]
        %v707 = vld [vmem:[%s699 + $0x38] sm:$0xff]
        %708 = vmatpush.msra.mxu0 0.0
        %709 = vmatpush.msra.mxu0 0.0
        %710 = vmatpush.msra.mxu0 0.0
        %711 = vmatpush.msra.mxu0 0.0
        %712 = vmatpush.msra.mxu0 0.0
        %713 = vmatpush.msra.mxu0 0.0
        %714 = vmatpush.msra.mxu0 0.0
        %715 = vmatpush.msra.mxu0 0.0
        %716 = vmatpush.msra.mxu0 %v707
        %717 = vmatpush.msra.mxu0 %v706
        %718 = vmatpush.msra.mxu0 %v705
        %719 = vmatpush.msra.mxu0 %v704
        %720 = vmatpush.msra.mxu0 %v703
        %721 = vmatpush.msra.mxu0 %v702
        %722 = vmatpush.msra.mxu0 %v701
        %723 = vmatpush.msra.mxu0 %v700
        %724 = vmatmul.f32.gmra.mxu0 %v532
        %v725 = vpop.f32.mrf.mxu0
        %v726 = vadd.f32 0.0, %v725
        %727 = vmatmul.f32.gmra.mxu0 %v535
        %v728 = vpop.f32.mrf.mxu0
        %v729 = vadd.f32 0.0, %v728
        %730 = vdwg.mxu0
        %731 = vst.msk [vmem:[#allocation2 + $0x50] sm:$0xff] %vm560, %v726
        %732 = vst.msk [vmem:[#allocation2 + $0x58] sm:$0xff] %vm560, %v729
        %s733 = scalar_lea.vmem %s1, 384
        %v734 = vld [vmem:[%s733] sm:$0xff]
        %v735 = vld [vmem:[%s733 + $0x8] sm:$0xff]
        %v736 = vld [vmem:[%s733 + $0x10] sm:$0xff]
        %v737 = vld [vmem:[%s733 + $0x18] sm:$0xff]
        %v738 = vld [vmem:[%s733 + $0x20] sm:$0xff]
        %v739 = vld [vmem:[%s733 + $0x28] sm:$0xff]
        %v740 = vld [vmem:[%s733 + $0x30] sm:$0xff]
        %v741 = vld [vmem:[%s733 + $0x38] sm:$0xff]
        %742 = vmatpush.msra.mxu0 0.0
        %743 = vmatpush.msra.mxu0 0.0
        %744 = vmatpush.msra.mxu0 0.0
        %745 = vmatpush.msra.mxu0 0.0
        %746 = vmatpush.msra.mxu0 0.0
        %747 = vmatpush.msra.mxu0 0.0
        %748 = vmatpush.msra.mxu0 0.0
        %749 = vmatpush.msra.mxu0 0.0
        %750 = vmatpush.msra.mxu0 %v741
        %751 = vmatpush.msra.mxu0 %v740
        %752 = vmatpush.msra.mxu0 %v739
        %753 = vmatpush.msra.mxu0 %v738
        %754 = vmatpush.msra.mxu0 %v737
        %755 = vmatpush.msra.mxu0 %v736
        %756 = vmatpush.msra.mxu0 %v735
        %757 = vmatpush.msra.mxu0 %v734
        %758 = vmatmul.f32.gmra.mxu0 %v532
        %v759 = vpop.f32.mrf.mxu0
        %v760 = vadd.f32 0.0, %v759
        %761 = vmatmul.f32.gmra.mxu0 %v535
        %v762 = vpop.f32.mrf.mxu0
        %v763 = vadd.f32 0.0, %v762
        %764 = vdwg.mxu0
        %765 = vst.msk [vmem:[#allocation2 + $0x60] sm:$0xff] %vm560, %v760
        %766 = vst.msk [vmem:[#allocation2 + $0x68] sm:$0xff] %vm560, %v763
        %s767 = scalar_lea.vmem %s1, 448
        %v768 = vld [vmem:[%s767] sm:$0xff]
        %v769 = vld [vmem:[%s767 + $0x8] sm:$0xff]
        %v770 = vld [vmem:[%s767 + $0x10] sm:$0xff]
        %v771 = vld [vmem:[%s767 + $0x18] sm:$0xff]
        %v772 = vld [vmem:[%s767 + $0x20] sm:$0xff]
        %v773 = vld [vmem:[%s767 + $0x28] sm:$0xff]
        %v774 = vld [vmem:[%s767 + $0x30] sm:$0xff]
        %v775 = vld [vmem:[%s767 + $0x38] sm:$0xff]
        %776 = vmatpush.msra.mxu0 0.0
        %777 = vmatpush.msra.mxu0 0.0
        %778 = vmatpush.msra.mxu0 0.0
        %779 = vmatpush.msra.mxu0 0.0
        %780 = vmatpush.msra.mxu0 0.0
        %781 = vmatpush.msra.mxu0 0.0
        %782 = vmatpush.msra.mxu0 0.0
        %783 = vmatpush.msra.mxu0 0.0
        %784 = vmatpush.msra.mxu0 %v775
        %785 = vmatpush.msra.mxu0 %v774
        %786 = vmatpush.msra.mxu0 %v773
        %787 = vmatpush.msra.mxu0 %v772
        %788 = vmatpush.msra.mxu0 %v771
        %789 = vmatpush.msra.mxu0 %v770
        %790 = vmatpush.msra.mxu0 %v769
        %791 = vmatpush.msra.mxu0 %v768
        %792 = vmatmul.f32.gmra.mxu0 %v532
        %v793 = vpop.f32.mrf.mxu0
        %v794 = vadd.f32 0.0, %v793
        %795 = vmatmul.f32.gmra.mxu0 %v535
        %v796 = vpop.f32.mrf.mxu0
        %v797 = vadd.f32 0.0, %v796
        %798 = vdwg.mxu0
        %799 = vst.msk [vmem:[#allocation2 + $0x70] sm:$0xff] %vm560, %v794
        %800 = vst.msk [vmem:[#allocation2 + $0x78] sm:$0xff] %vm560, %v797
        %s801 = scalar_lea.vmem %s1, 512
        %v802 = vld [vmem:[%s801] sm:$0xff]
        %v803 = vld [vmem:[%s801 + $0x8] sm:$0xff]
        %v804 = vld [vmem:[%s801 + $0x10] sm:$0xff]
        %v805 = vld [vmem:[%s801 + $0x18] sm:$0xff]
        %v806 = vld [vmem:[%s801 + $0x20] sm:$0xff]
        %v807 = vld [vmem:[%s801 + $0x28] sm:$0xff]
        %v808 = vld [vmem:[%s801 + $0x30] sm:$0xff]
        %v809 = vld [vmem:[%s801 + $0x38] sm:$0xff]
        %810 = vmatpush.msra.mxu0 0.0
        %811 = vmatpush.msra.mxu0 0.0
        %812 = vmatpush.msra.mxu0 0.0
        %813 = vmatpush.msra.mxu0 0.0
        %814 = vmatpush.msra.mxu0 0.0
        %815 = vmatpush.msra.mxu0 0.0
        %816 = vmatpush.msra.mxu0 0.0
        %817 = vmatpush.msra.mxu0 0.0
        %818 = vmatpush.msra.mxu0 %v809
        %819 = vmatpush.msra.mxu0 %v808
        %820 = vmatpush.msra.mxu0 %v807
        %821 = vmatpush.msra.mxu0 %v806
        %822 = vmatpush.msra.mxu0 %v805
        %823 = vmatpush.msra.mxu0 %v804
        %824 = vmatpush.msra.mxu0 %v803
        %825 = vmatpush.msra.mxu0 %v802
        %826 = vmatmul.f32.gmra.mxu0 %v532
        %v827 = vpop.f32.mrf.mxu0
        %v828 = vadd.f32 0.0, %v827
        %829 = vmatmul.f32.gmra.mxu0 %v535
        %v830 = vpop.f32.mrf.mxu0
        %v831 = vadd.f32 0.0, %v830
        %832 = vdwg.mxu0
        %833 = vst.msk [vmem:[#allocation2 + $0x80] sm:$0xff] %vm560, %v828
        %834 = vst.msk [vmem:[#allocation2 + $0x88] sm:$0xff] %vm560, %v831
        %v835 = vld [vmem:[%s2] sm:$0xff]
        %v836 = vld [vmem:[%s2 + $0x8] sm:$0xff]
        %v837 = vld [vmem:[%s2 + $0x10] sm:$0xff]
        %v838 = vld [vmem:[%s2 + $0x18] sm:$0xff]
        %v839 = vld [vmem:[#allocation2] sm:$0xff]
        %v840 = vld [vmem:[#allocation2 + $0x8] sm:$0xff]
        %v841 = vld [vmem:[#allocation2 + $0x10] sm:$0xff]
        %v842 = vld [vmem:[#allocation2 + $0x18] sm:$0xff]
        %v843 = vld [vmem:[#allocation2 + $0x20] sm:$0xff]
        %v844 = vld [vmem:[#allocation2 + $0x28] sm:$0xff]
        %v845 = vld [vmem:[#allocation2 + $0x30] sm:$0xff]
        %v846 = vld [vmem:[#allocation2 + $0x38] sm:$0xff]
        %v847 = vld [vmem:[#allocation2 + $0x40] sm:$0xff]
        %v848 = vld [vmem:[#allocation2 + $0x48] sm:$0xff]
        %v849 = vld [vmem:[#allocation2 + $0x50] sm:$0xff]
        %v850 = vld [vmem:[#allocation2 + $0x58] sm:$0xff]
        %v851 = vld [vmem:[#allocation2 + $0x60] sm:$0xff]
        %v852 = vld [vmem:[#allocation2 + $0x68] sm:$0xff]
        %v853 = vld [vmem:[#allocation2 + $0x70] sm:$0xff]
        %v854 = vld [vmem:[#allocation2 + $0x78] sm:$0xff]
        %v855 = vld [vmem:[#allocation2 + $0x80] sm:$0xff]
        %v856 = vld [vmem:[#allocation2 + $0x88] sm:$0xff]
        %v857 = vld [vmem:[%s3] sm:$0xff]
        %v858 = vld [vmem:[%s3 + $0x8] sm:$0xff]
        %vm859 = vcmask 130048
        %v861 = vsel %vm859, %v836, 0
        %v864 = vsel %vm859, %v838, 0
        %866 = vmatpush.msra.mxu0 %v854
        %867 = vmatpush.msra.mxu0 %v853
        %868 = vmatpush.msra.mxu0 %v852
        %869 = vmatpush.msra.mxu0 %v851
        %870 = vmatpush.msra.mxu0 %v850
        %871 = vmatpush.msra.mxu0 %v849
        %872 = vmatpush.msra.mxu0 %v848
        %873 = vmatpush.msra.mxu0 %v847
        %874 = vmatpush.msra.mxu0 %v846
        %875 = vmatpush.msra.mxu0 %v845
        %876 = vmatpush.msra.mxu0 %v844
        %877 = vmatpush.msra.mxu0 %v843
        %878 = vmatpush.msra.mxu0 %v842
        %879 = vmatpush.msra.mxu0 %v841
        %880 = vmatpush.msra.mxu0 %v840
        %881 = vmatpush.msra.mxu0 %v839
        %882 = vmatmul.f32.gmra.mxu0 %v835
        %v883 = vpop.f32.mrf.mxu0
        %v884 = vadd.f32 %v857, %v883
        %885 = vmatmul.f32.gmra.mxu0 %v837
        %v886 = vpop.f32.mrf.mxu0
        %v887 = vadd.f32 %v858, %v886
        %888 = vdwg.mxu0
        %889 = vmatpush.msra.mxu0 0.0
        %890 = vmatpush.msra.mxu0 0.0
        %891 = vmatpush.msra.mxu0 0.0
        %892 = vmatpush.msra.mxu0 0.0
        %893 = vmatpush.msra.mxu0 0.0
        %894 = vmatpush.msra.mxu0 0.0
        %895 = vmatpush.msra.mxu0 0.0
        %896 = vmatpush.msra.mxu0 0.0
        %897 = vmatpush.msra.mxu0 0.0
        %898 = vmatpush.msra.mxu0 0.0
        %899 = vmatpush.msra.mxu0 0.0
        %900 = vmatpush.msra.mxu0 0.0
        %901 = vmatpush.msra.mxu0 0.0
        %902 = vmatpush.msra.mxu0 0.0
        %903 = vmatpush.msra.mxu0 %v856
        %904 = vmatpush.msra.mxu0 %v855
        %905 = vmatmul.f32.gmra.mxu0 %v861
        %v906 = vpop.f32.mrf.mxu0
        %v907 = vadd.f32 %v884, %v906
        %908 = vmatmul.f32.gmra.mxu0 %v864
        %v909 = vpop.f32.mrf.mxu0
        %v910 = vadd.f32 %v887, %v909
        %911 = vdwg.mxu0
        %v912 = vld [vmem:[%s4] sm:$0x1]
        %v913 = vld [vmem:[%s5] sm:$0x1]
        %v914 = vsel %vm560, %v907, 0.0
        %915 = vadd.xlane.f32.xlu0 %v914
        %v916 = vpop.xlane.xlu0 %915
        %v917 = vsel %vm560, %v910, 0.0
        %918 = vadd.xlane.f32.xlu0 %v917
        %v919 = vpop.xlane.xlu0 %918
        %v920 = vrcp.pop 96.0
        %v921 = vmul.f32 96.0, %v920
        %v922 = vsub.f32 1.0, %v921
        %v923 = vmul.f32 %v920, %v922
        %v924 = vadd.f32 %v920, %v923
        %vm925 = vweird.f32 %v920
        %v926 = vsel %vm925, %v920, %v924
        %v927 = vmul.f32 %v916, %v926
        %v928 = vmul.f32 %v919, %v926
        %v929 = vsub.f32 %v907, %v927
        %v930 = vsub.f32 %v910, %v928
        %v931 = vmul.f32 %v929, %v929
        %v932 = vmul.f32 %v930, %v930
        %v933 = vsel %vm560, %v931, 0.0
        %934 = vadd.xlane.f32.xlu0 %v933
        %v935 = vpop.xlane.xlu0 %934
        %v936 = vsel %vm560, %v932, 0.0
        %937 = vadd.xlane.f32.xlu0 %v936
        %v938 = vpop.xlane.xlu0 %937
        %v939 = vmul.f32 %v935, %v926
        %v940 = vmul.f32 %v938, %v926
        %v941 = vadd.f32 %v939, 1e-06
        %v942 = vadd.f32 %v940, 1e-06
        %v943 = vrsqrt.pop %v941
        %v944 = vmul.f32 %v943, %v941
        %v945 = vmul.f32 %v944, %v943
        %v946 = vmul.f32 0.5, %v945
        %v947 = vsub.f32 1.5, %v946
        %v948 = vmul.f32 %v943, %v947
        %vm949 = vweird.f32 %v941
        %vm950 = vweird.f32 %v943
        %vm951 = vmor %vm949, %vm950
        %v952 = vsel %vm951, %v943, %v948
        %v953 = vrsqrt.pop %v942
        %v954 = vmul.f32 %v953, %v942
        %v955 = vmul.f32 %v954, %v953
        %v956 = vmul.f32 0.5, %v955
        %v957 = vsub.f32 1.5, %v956
        %v958 = vmul.f32 %v953, %v957
        %vm959 = vweird.f32 %v942
        %vm960 = vweird.f32 %v953
        %vm961 = vmor %vm959, %vm960
        %v962 = vsel %vm961, %v953, %v958
        %v963 = vmul.f32 %v929, %v952
        %v964 = vmul.f32 %v930, %v962
        %v966 = vperm.slane %v912, 0
        %v968 = vmul.f32 %v963, %v966
        %v969 = vmul.f32 %v964, %v966
        %v971 = vperm.slane %v913, 0
        %v973 = vadd.f32 %v968, %v971
        %v974 = vadd.f32 %v969, %v971
        %v975 = vld [vmem:[%s6] sm:$0xff]
        %v976 = vld [vmem:[%s6 + $0x8] sm:$0xff]
        %v977 = vld [vmem:[%s6 + $0x10] sm:$0xff]
        %v978 = vld [vmem:[%s6 + $0x18] sm:$0xff]
        %v979 = vld [vmem:[%s6 + $0x20] sm:$0xff]
        %v980 = vld [vmem:[%s6 + $0x28] sm:$0xff]
        %v981 = vld [vmem:[%s6 + $0x30] sm:$0xff]
        %v982 = vld [vmem:[%s6 + $0x38] sm:$0xff]
        %v983 = vld [vmem:[%s6 + $0x40] sm:$0xff]
        %v984 = vld [vmem:[%s6 + $0x48] sm:$0xff]
        %v985 = vld [vmem:[%s6 + $0x50] sm:$0xff]
        %v986 = vld [vmem:[%s6 + $0x58] sm:$0xff]
        %v987 = vld [vmem:[%s6 + $0x60] sm:$0xff]
        %v988 = vld [vmem:[%s6 + $0x68] sm:$0xff]
        %v989 = vld [vmem:[%s6 + $0x70] sm:$0xff]
        %v990 = vld [vmem:[%s6 + $0x78] sm:$0xff]
        %v991 = vld [vmem:[%s6 + $0x80] sm:$0xff]
        %v992 = vld [vmem:[%s6 + $0x88] sm:$0xff]
        %v993 = vld [vmem:[%s6 + $0x90] sm:$0xff]
        %v994 = vld [vmem:[%s6 + $0x98] sm:$0xff]
        %v995 = vld [vmem:[%s6 + $0xa0] sm:$0xff]
        %v996 = vld [vmem:[%s6 + $0xa8] sm:$0xff]
        %v997 = vld [vmem:[%s6 + $0xb0] sm:$0xff]
        %v998 = vld [vmem:[%s6 + $0xb8] sm:$0xff]
        %v999 = vld [vmem:[%s6 + $0xc0] sm:$0xff]
        %v1000 = vld [vmem:[%s6 + $0xc8] sm:$0xff]
        %v1001 = vld [vmem:[%s6 + $0xd0] sm:$0xff]
        %v1002 = vld [vmem:[%s6 + $0xd8] sm:$0xff]
        %v1003 = vld [vmem:[%s6 + $0xe0] sm:$0xff]
        %v1004 = vld [vmem:[%s6 + $0xe8] sm:$0xff]
        %v1005 = vld [vmem:[%s6 + $0xf0] sm:$0xff]
        %v1006 = vld [vmem:[%s6 + $0xf8] sm:$0xff]
        %v1007 = vld [vmem:[%s6 + $0x100] sm:$0xff]
        %v1008 = vld [vmem:[%s6 + $0x108] sm:$0xff]
        %v1009 = vld [vmem:[%s6 + $0x110] sm:$0xff]
        %v1010 = vld [vmem:[%s6 + $0x118] sm:$0xff]
        %v1011 = vld [vmem:[%s7] sm:$0x7]
        %v1013 = vperm.slane %v1011, 0
        %v1014 = vperm.slane %v1011, 1
        %v1015 = vperm.slane %v1011, 2
        %v1020 = vsel %vm560, %v973, 0
        %v1023 = vsel %vm560, %v974, 0
        %1025 = vmatpush.msra.mxu0 0.0
        %1026 = vmatpush.msra.mxu0 0.0
        %1027 = vmatpush.msra.mxu0 0.0
        %1028 = vmatpush.msra.mxu0 0.0
        %1029 = vmatpush.msra.mxu0 %v1008
        %1030 = vmatpush.msra.mxu0 %v1005
        %1031 = vmatpush.msra.mxu0 %v1002
        %1032 = vmatpush.msra.mxu0 %v999
        %1033 = vmatpush.msra.mxu0 %v996
        %1034 = vmatpush.msra.mxu0 %v993
        %1035 = vmatpush.msra.mxu0 %v990
        %1036 = vmatpush.msra.mxu0 %v987
        %1037 = vmatpush.msra.mxu0 %v984
        %1038 = vmatpush.msra.mxu0 %v981
        %1039 = vmatpush.msra.mxu0 %v978
        %1040 = vmatpush.msra.mxu0 %v975
        %1041 = vmatmul.f32.gmra.mxu0 %v1020
        %v1042 = vpop.f32.mrf.mxu0
        %v1043 = vadd.f32 %v1013, %v1042
        %1044 = vmatmul.f32.gmra.mxu0 %v1023
        %v1045 = vpop.f32.mrf.mxu0
        %v1046 = vadd.f32 %v1013, %v1045
        %1047 = vdwg.mxu0
        %1048 = vmatpush.msra.mxu0 0.0
        %1049 = vmatpush.msra.mxu0 0.0
        %1050 = vmatpush.msra.mxu0 0.0
        %1051 = vmatpush.msra.mxu0 0.0
        %1052 = vmatpush.msra.mxu0 %v1009
        %1053 = vmatpush.msra.mxu0 %v1006
        %1054 = vmatpush.msra.mxu0 %v1003
        %1055 = vmatpush.msra.mxu0 %v1000
        %1056 = vmatpush.msra.mxu0 %v997
        %1057 = vmatpush.msra.mxu0 %v994
        %1058 = vmatpush.msra.mxu0 %v991
        %1059 = vmatpush.msra.mxu0 %v988
        %1060 = vmatpush.msra.mxu0 %v985
        %1061 = vmatpush.msra.mxu0 %v982
        %1062 = vmatpush.msra.mxu0 %v979
        %1063 = vmatpush.msra.mxu0 %v976
        %1064 = vmatmul.f32.gmra.mxu0 %v1020
        %v1065 = vpop.f32.mrf.mxu0
        %v1066 = vadd.f32 %v1014, %v1065
        %1067 = vmatmul.f32.gmra.mxu0 %v1023
        %v1068 = vpop.f32.mrf.mxu0
        %v1069 = vadd.f32 %v1014, %v1068
        %1070 = vdwg.mxu0
        %1071 = vmatpush.msra.mxu0 0.0
        %1072 = vmatpush.msra.mxu0 0.0
        %1073 = vmatpush.msra.mxu0 0.0
        %1074 = vmatpush.msra.mxu0 0.0
        %1075 = vmatpush.msra.mxu0 %v1010
        %1076 = vmatpush.msra.mxu0 %v1007
        %1077 = vmatpush.msra.mxu0 %v1004
        %1078 = vmatpush.msra.mxu0 %v1001
        %1079 = vmatpush.msra.mxu0 %v998
        %1080 = vmatpush.msra.mxu0 %v995
        %1081 = vmatpush.msra.mxu0 %v992
        %1082 = vmatpush.msra.mxu0 %v989
        %1083 = vmatpush.msra.mxu0 %v986
        %1084 = vmatpush.msra.mxu0 %v983
        %1085 = vmatpush.msra.mxu0 %v980
        %1086 = vmatpush.msra.mxu0 %v977
        %1087 = vmatmul.f32.gmra.mxu0 %v1020
        %v1088 = vpop.f32.mrf.mxu0
        %v1089 = vadd.f32 %v1015, %v1088
        %1090 = vmatmul.f32.gmra.mxu0 %v1023
        %v1091 = vpop.f32.mrf.mxu0
        %v1092 = vadd.f32 %v1015, %v1091
        %1093 = vdwg.mxu0
        %1096 = vrot.lane.b32.xlu0 %v1043, 32
        %v1097 = vpop.permute.xlu0 %1096
        %1098 = vrot.lane.b32.xlu0 %v1046, 32
        %v1099 = vpop.permute.xlu0 %1098
        %vm1100 = vcmask 97280
        %v1101 = vsel %vm1100, %v1043, 0
        %v1103 = vsel %vm1100, %v1046, 0
        %v1105 = vsel %vm1100, %v1097, 0
        %v1107 = vsel %vm1100, %v1099, 0
        %1109 = vmatpush.xpose.msra.mxu0 0.0
        %1110 = vmatpush.xpose.msra.mxu0 0.0
        %1111 = vmatpush.xpose.msra.mxu0 0.0
        %1112 = vmatpush.xpose.msra.mxu0 0.0
        %1113 = vmatpush.xpose.msra.mxu0 0.0
        %1114 = vmatpush.xpose.msra.mxu0 0.0
        %1115 = vmatpush.xpose.msra.mxu0 0.0
        %1116 = vmatpush.xpose.msra.mxu0 0.0
        %1117 = vmatpush.xpose.msra.mxu0 0.0
        %1118 = vmatpush.xpose.msra.mxu0 0.0
        %1119 = vmatpush.xpose.msra.mxu0 0.0
        %1120 = vmatpush.xpose.msra.mxu0 0.0
        %1121 = vmatpush.xpose.msra.mxu0 0.0
        %1122 = vmatpush.xpose.msra.mxu0 0.0
        %1123 = vmatpush.xpose.msra.mxu0 %v1107
        %1124 = vmatpush.xpose.msra.mxu0 %v1105
        %1125 = vmatmul.f32.gmra.mxu0 %v1101
        %v1126 = vpop.f32.mrf.mxu0
        %v1127 = vadd.f32 0.0, %v1126
        %1128 = vmatmul.f32.gmra.mxu0 %v1103
        %v1129 = vpop.f32.mrf.mxu0
        %v1130 = vadd.f32 0.0, %v1129
        %1131 = vdwg.mxu0
        %v1132 = vmul.f32 %v1127, 0.28867513
        %v1133 = vmul.f32 %v1130, 0.28867513
        %v1134 = vsel %vm859, %v1132, -inf
        %1135 = vmax.xlane.f32.xlu0 %v1134
        %v1136 = vpop.xlane.xlu0 %1135
        %v1137 = vsel %vm859, %v1133, -inf
        %1138 = vmax.xlane.f32.xlu0 %v1137
        %v1139 = vpop.xlane.xlu0 %1138
        %v1140 = vsub.f32 %v1132, %v1136
        %v1141 = vsub.f32 %v1133, %v1139
        %v1142 = vmul.f32 %v1140, 1.442695
        %v1143 = vpow.pop %v1142
        %v1144 = vmul.f32 %v1141, 1.442695
        %v1145 = vpow.pop %v1144
        %v1146 = vsel %vm859, %v1143, 0.0
        %1147 = vadd.xlane.f32.xlu0 %v1146
        %v1148 = vpop.xlane.xlu0 %1147
        %v1149 = vsel %vm859, %v1145, 0.0
        %1150 = vadd.xlane.f32.xlu0 %v1149
        %v1151 = vpop.xlane.xlu0 %1150
        %v1152 = vrcp.pop %v1148
        %v1153 = vrcp.pop %v1151
        %v1154 = vmul.f32 %v1143, %v1152
        %v1155 = vmul.f32 %v1145, %v1153
        %1158 = vrot.lane.b32.xlu0 %v1066, 64
        %v1159 = vpop.permute.xlu0 %1158
        %1160 = vrot.lane.b32.xlu0 %v1069, 64
        %v1161 = vpop.permute.xlu0 %1160
        %v1165 = vsel %vm859, %v1154, 0
        %v1168 = vsel %vm859, %v1155, 0
        %1170 = vmatpush.msra.mxu0 0.0
        %1171 = vmatpush.msra.mxu0 0.0
        %1172 = vmatpush.msra.mxu0 0.0
        %1173 = vmatpush.msra.mxu0 0.0
        %1174 = vmatpush.msra.mxu0 0.0
        %1175 = vmatpush.msra.mxu0 0.0
        %1176 = vmatpush.msra.mxu0 0.0
        %1177 = vmatpush.msra.mxu0 0.0
        %1178 = vmatpush.msra.mxu0 0.0
        %1179 = vmatpush.msra.mxu0 0.0
        %1180 = vmatpush.msra.mxu0 0.0
        %1181 = vmatpush.msra.mxu0 0.0
        %1182 = vmatpush.msra.mxu0 0.0
        %1183 = vmatpush.msra.mxu0 0.0
        %1184 = vmatpush.msra.mxu0 %v1161
        %1185 = vmatpush.msra.mxu0 %v1159
        %1186 = vmatmul.f32.gmra.mxu0 %v1165
        %v1187 = vpop.f32.mrf.mxu0
        %v1188 = vadd.f32 0.0, %v1187
        %1189 = vmatmul.f32.gmra.mxu0 %v1168
        %v1190 = vpop.f32.mrf.mxu0
        %v1191 = vadd.f32 0.0, %v1190
        %1192 = vdwg.mxu0
        %1193 = vrot.lane.b32.xlu0 %v1043, 116
        %v1194 = vpop.permute.xlu0 %1193
        %1195 = vrot.lane.b32.xlu0 %v1046, 116
        %v1196 = vpop.permute.xlu0 %1195
        %1197 = vrot.lane.b32.xlu0 %v1043, 20
        %v1198 = vpop.permute.xlu0 %1197
        %1199 = vrot.lane.b32.xlu0 %v1046, 20
        %v1200 = vpop.permute.xlu0 %1199
        %v1201 = vsel %vm1100, %v1194, 0
        %v1203 = vsel %vm1100, %v1196, 0
        %v1205 = vsel %vm1100, %v1198, 0
        %v1207 = vsel %vm1100, %v1200, 0
        %1209 = vmatpush.xpose.msra.mxu0 0.0
        %1210 = vmatpush.xpose.msra.mxu0 0.0
        %1211 = vmatpush.xpose.msra.mxu0 0.0
        %1212 = vmatpush.xpose.msra.mxu0 0.0
        %1213 = vmatpush.xpose.msra.mxu0 0.0
        %1214 = vmatpush.xpose.msra.mxu0 0.0
        %1215 = vmatpush.xpose.msra.mxu0 0.0
        %1216 = vmatpush.xpose.msra.mxu0 0.0
        %1217 = vmatpush.xpose.msra.mxu0 0.0
        %1218 = vmatpush.xpose.msra.mxu0 0.0
        %1219 = vmatpush.xpose.msra.mxu0 0.0
        %1220 = vmatpush.xpose.msra.mxu0 0.0
        %1221 = vmatpush.xpose.msra.mxu0 0.0
        %1222 = vmatpush.xpose.msra.mxu0 0.0
        %1223 = vmatpush.xpose.msra.mxu0 %v1207
        %1224 = vmatpush.xpose.msra.mxu0 %v1205
        %1225 = vmatmul.f32.gmra.mxu0 %v1201
        %v1226 = vpop.f32.mrf.mxu0
        %v1227 = vadd.f32 0.0, %v1226
        %1228 = vmatmul.f32.gmra.mxu0 %v1203
        %v1229 = vpop.f32.mrf.mxu0
        %v1230 = vadd.f32 0.0, %v1229
        %1231 = vdwg.mxu0
        %v1232 = vmul.f32 %v1227, 0.28867513
        %v1233 = vmul.f32 %v1230, 0.28867513
        %v1234 = vsel %vm859, %v1232, -inf
        %1235 = vmax.xlane.f32.xlu0 %v1234
        %v1236 = vpop.xlane.xlu0 %1235
        %v1237 = vsel %vm859, %v1233, -inf
        %1238 = vmax.xlane.f32.xlu0 %v1237
        %v1239 = vpop.xlane.xlu0 %1238
        %v1240 = vsub.f32 %v1232, %v1236
        %v1241 = vsub.f32 %v1233, %v1239
        %v1242 = vmul.f32 %v1240, 1.442695
        %v1243 = vpow.pop %v1242
        %v1244 = vmul.f32 %v1241, 1.442695
        %v1245 = vpow.pop %v1244
        %v1246 = vsel %vm859, %v1243, 0.0
        %1247 = vadd.xlane.f32.xlu0 %v1246
        %v1248 = vpop.xlane.xlu0 %1247
        %v1249 = vsel %vm859, %v1245, 0.0
        %1250 = vadd.xlane.f32.xlu0 %v1249
        %v1251 = vpop.xlane.xlu0 %1250
        %v1252 = vrcp.pop %v1248
        %v1253 = vrcp.pop %v1251
        %v1254 = vmul.f32 %v1243, %v1252
        %v1255 = vmul.f32 %v1245, %v1253
        %1256 = vrot.lane.b32.xlu0 %v1066, 52
        %v1257 = vpop.permute.xlu0 %1256
        %1258 = vrot.lane.b32.xlu0 %v1069, 52
        %v1259 = vpop.permute.xlu0 %1258
        %v1263 = vsel %vm859, %v1254, 0
        %v1266 = vsel %vm859, %v1255, 0
        %1268 = vmatpush.msra.mxu0 0.0
        %1269 = vmatpush.msra.mxu0 0.0
        %1270 = vmatpush.msra.mxu0 0.0
        %1271 = vmatpush.msra.mxu0 0.0
        %1272 = vmatpush.msra.mxu0 0.0
        %1273 = vmatpush.msra.mxu0 0.0
        %1274 = vmatpush.msra.mxu0 0.0
        %1275 = vmatpush.msra.mxu0 0.0
        %1276 = vmatpush.msra.mxu0 0.0
        %1277 = vmatpush.msra.mxu0 0.0
        %1278 = vmatpush.msra.mxu0 0.0
        %1279 = vmatpush.msra.mxu0 0.0
        %1280 = vmatpush.msra.mxu0 0.0
        %1281 = vmatpush.msra.mxu0 0.0
        %1282 = vmatpush.msra.mxu0 %v1259
        %1283 = vmatpush.msra.mxu0 %v1257
        %1284 = vmatmul.f32.gmra.mxu0 %v1263
        %v1285 = vpop.f32.mrf.mxu0
        %v1286 = vadd.f32 0.0, %v1285
        %1287 = vmatmul.f32.gmra.mxu0 %v1266
        %v1288 = vpop.f32.mrf.mxu0
        %v1289 = vadd.f32 0.0, %v1288
        %1290 = vdwg.mxu0
        %1291 = vrot.lane.b32.xlu0 %v1043, 104
        %v1292 = vpop.permute.xlu0 %1291
        %1293 = vrot.lane.b32.xlu0 %v1046, 104
        %v1294 = vpop.permute.xlu0 %1293
        %1295 = vrot.lane.b32.xlu0 %v1043, 8
        %v1296 = vpop.permute.xlu0 %1295
        %1297 = vrot.lane.b32.xlu0 %v1066, 8
        %v1298 = vpop.permute.xlu0 %1297
        %1299 = vrot.lane.b32.xlu0 %v1046, 8
        %v1300 = vpop.permute.xlu0 %1299
        %1301 = vrot.lane.b32.xlu0 %v1069, 8
        %v1302 = vpop.permute.xlu0 %1301
        %vm1303 = vcmask 64512
        %v1304 = vsel %vm1303, %v1296, %v1298
        %v1305 = vsel %vm1303, %v1300, %v1302
        %v1306 = vsel %vm1100, %v1292, 0
        %v1308 = vsel %vm1100, %v1294, 0
        %v1310 = vsel %vm1100, %v1304, 0
        %v1312 = vsel %vm1100, %v1305, 0
        %1314 = vmatpush.xpose.msra.mxu0 0.0
        %1315 = vmatpush.xpose.msra.mxu0 0.0
        %1316 = vmatpush.xpose.msra.mxu0 0.0
        %1317 = vmatpush.xpose.msra.mxu0 0.0
        %1318 = vmatpush.xpose.msra.mxu0 0.0
        %1319 = vmatpush.xpose.msra.mxu0 0.0
        %1320 = vmatpush.xpose.msra.mxu0 0.0
        %1321 = vmatpush.xpose.msra.mxu0 0.0
        %1322 = vmatpush.xpose.msra.mxu0 0.0
        %1323 = vmatpush.xpose.msra.mxu0 0.0
        %1324 = vmatpush.xpose.msra.mxu0 0.0
        %1325 = vmatpush.xpose.msra.mxu0 0.0
        %1326 = vmatpush.xpose.msra.mxu0 0.0
        %1327 = vmatpush.xpose.msra.mxu0 0.0
        %1328 = vmatpush.xpose.msra.mxu0 %v1312
        %1329 = vmatpush.xpose.msra.mxu0 %v1310
        %1330 = vmatmul.f32.gmra.mxu0 %v1306
        %v1331 = vpop.f32.mrf.mxu0
        %v1332 = vadd.f32 0.0, %v1331
        %1333 = vmatmul.f32.gmra.mxu0 %v1308
        %v1334 = vpop.f32.mrf.mxu0
        %v1335 = vadd.f32 0.0, %v1334
        %1336 = vdwg.mxu0
        %v1337 = vmul.f32 %v1332, 0.28867513
        %v1338 = vmul.f32 %v1335, 0.28867513
        %v1339 = vsel %vm859, %v1337, -inf
        %1340 = vmax.xlane.f32.xlu0 %v1339
        %v1341 = vpop.xlane.xlu0 %1340
        %v1342 = vsel %vm859, %v1338, -inf
        %1343 = vmax.xlane.f32.xlu0 %v1342
        %v1344 = vpop.xlane.xlu0 %1343
        %v1345 = vsub.f32 %v1337, %v1341
        %v1346 = vsub.f32 %v1338, %v1344
        %v1347 = vmul.f32 %v1345, 1.442695
        %v1348 = vpow.pop %v1347
        %v1349 = vmul.f32 %v1346, 1.442695
        %v1350 = vpow.pop %v1349
        %v1351 = vsel %vm859, %v1348, 0.0
        %1352 = vadd.xlane.f32.xlu0 %v1351
        %v1353 = vpop.xlane.xlu0 %1352
        %v1354 = vsel %vm859, %v1350, 0.0
        %1355 = vadd.xlane.f32.xlu0 %v1354
        %v1356 = vpop.xlane.xlu0 %1355
        %v1357 = vrcp.pop %v1353
        %v1358 = vrcp.pop %v1356
        %v1359 = vmul.f32 %v1348, %v1357
        %v1360 = vmul.f32 %v1350, %v1358
        %1361 = vrot.lane.b32.xlu0 %v1066, 40
        %v1362 = vpop.permute.xlu0 %1361
        %1363 = vrot.lane.b32.xlu0 %v1069, 40
        %v1364 = vpop.permute.xlu0 %1363
        %v1368 = vsel %vm859, %v1359, 0
        %v1371 = vsel %vm859, %v1360, 0
        %1373 = vmatpush.msra.mxu0 0.0
        %1374 = vmatpush.msra.mxu0 0.0
        %1375 = vmatpush.msra.mxu0 0.0
        %1376 = vmatpush.msra.mxu0 0.0
        %1377 = vmatpush.msra.mxu0 0.0
        %1378 = vmatpush.msra.mxu0 0.0
        %1379 = vmatpush.msra.mxu0 0.0
        %1380 = vmatpush.msra.mxu0 0.0
        %1381 = vmatpush.msra.mxu0 0.0
        %1382 = vmatpush.msra.mxu0 0.0
        %1383 = vmatpush.msra.mxu0 0.0
        %1384 = vmatpush.msra.mxu0 0.0
        %1385 = vmatpush.msra.mxu0 0.0
        %1386 = vmatpush.msra.mxu0 0.0
        %1387 = vmatpush.msra.mxu0 %v1364
        %1388 = vmatpush.msra.mxu0 %v1362
        %1389 = vmatmul.f32.gmra.mxu0 %v1368
        %v1390 = vpop.f32.mrf.mxu0
        %v1391 = vadd.f32 0.0, %v1390
        %1392 = vmatmul.f32.gmra.mxu0 %v1371
        %v1393 = vpop.f32.mrf.mxu0
        %v1394 = vadd.f32 0.0, %v1393
        %1395 = vdwg.mxu0
        %1396 = vrot.lane.b32.xlu0 %v1043, 92
        %v1397 = vpop.permute.xlu0 %1396
        %1398 = vrot.lane.b32.xlu0 %v1046, 92
        %v1399 = vpop.permute.xlu0 %1398
        %1400 = vrot.lane.b32.xlu0 %v1066, 124
        %v1401 = vpop.permute.xlu0 %1400
        %1402 = vrot.lane.b32.xlu0 %v1069, 124
        %v1403 = vpop.permute.xlu0 %1402
        %v1404 = vsel %vm1100, %v1397, 0
        %v1406 = vsel %vm1100, %v1399, 0
        %v1408 = vsel %vm1100, %v1401, 0
        %v1410 = vsel %vm1100, %v1403, 0
        %1412 = vmatpush.xpose.msra.mxu0 0.0
        %1413 = vmatpush.xpose.msra.mxu0 0.0
        %1414 = vmatpush.xpose.msra.mxu0 0.0
        %1415 = vmatpush.xpose.msra.mxu0 0.0
        %1416 = vmatpush.xpose.msra.mxu0 0.0
        %1417 = vmatpush.xpose.msra.mxu0 0.0
        %1418 = vmatpush.xpose.msra.mxu0 0.0
        %1419 = vmatpush.xpose.msra.mxu0 0.0
        %1420 = vmatpush.xpose.msra.mxu0 0.0
        %1421 = vmatpush.xpose.msra.mxu0 0.0
        %1422 = vmatpush.xpose.msra.mxu0 0.0
        %1423 = vmatpush.xpose.msra.mxu0 0.0
        %1424 = vmatpush.xpose.msra.mxu0 0.0
        %1425 = vmatpush.xpose.msra.mxu0 0.0
        %1426 = vmatpush.xpose.msra.mxu0 %v1410
        %1427 = vmatpush.xpose.msra.mxu0 %v1408
        %1428 = vmatmul.f32.gmra.mxu0 %v1404
        %v1429 = vpop.f32.mrf.mxu0
        %v1430 = vadd.f32 0.0, %v1429
        %1431 = vmatmul.f32.gmra.mxu0 %v1406
        %v1432 = vpop.f32.mrf.mxu0
        %v1433 = vadd.f32 0.0, %v1432
        %1434 = vdwg.mxu0
        %v1435 = vmul.f32 %v1430, 0.28867513
        %v1436 = vmul.f32 %v1433, 0.28867513
        %v1437 = vsel %vm859, %v1435, -inf
        %1438 = vmax.xlane.f32.xlu0 %v1437
        %v1439 = vpop.xlane.xlu0 %1438
        %v1440 = vsel %vm859, %v1436, -inf
        %1441 = vmax.xlane.f32.xlu0 %v1440
        %v1442 = vpop.xlane.xlu0 %1441
        %v1443 = vsub.f32 %v1435, %v1439
        %v1444 = vsub.f32 %v1436, %v1442
        %v1445 = vmul.f32 %v1443, 1.442695
        %v1446 = vpow.pop %v1445
        %v1447 = vmul.f32 %v1444, 1.442695
        %v1448 = vpow.pop %v1447
        %v1449 = vsel %vm859, %v1446, 0.0
        %1450 = vadd.xlane.f32.xlu0 %v1449
        %v1451 = vpop.xlane.xlu0 %1450
        %v1452 = vsel %vm859, %v1448, 0.0
        %1453 = vadd.xlane.f32.xlu0 %v1452
        %v1454 = vpop.xlane.xlu0 %1453
        %v1455 = vrcp.pop %v1451
        %v1456 = vrcp.pop %v1454
        %v1457 = vmul.f32 %v1446, %v1455
        %v1458 = vmul.f32 %v1448, %v1456
        %1459 = vrot.lane.b32.xlu0 %v1066, 28
        %v1460 = vpop.permute.xlu0 %1459
        %1461 = vrot.lane.b32.xlu0 %v1069, 28
        %v1462 = vpop.permute.xlu0 %1461
        %v1466 = vsel %vm859, %v1457, 0
        %v1469 = vsel %vm859, %v1458, 0
        %1471 = vmatpush.msra.mxu0 0.0
        %1472 = vmatpush.msra.mxu0 0.0
        %1473 = vmatpush.msra.mxu0 0.0
        %1474 = vmatpush.msra.mxu0 0.0
        %1475 = vmatpush.msra.mxu0 0.0
        %1476 = vmatpush.msra.mxu0 0.0
        %1477 = vmatpush.msra.mxu0 0.0
        %1478 = vmatpush.msra.mxu0 0.0
        %1479 = vmatpush.msra.mxu0 0.0
        %1480 = vmatpush.msra.mxu0 0.0
        %1481 = vmatpush.msra.mxu0 0.0
        %1482 = vmatpush.msra.mxu0 0.0
        %1483 = vmatpush.msra.mxu0 0.0
        %1484 = vmatpush.msra.mxu0 0.0
        %1485 = vmatpush.msra.mxu0 %v1462
        %1486 = vmatpush.msra.mxu0 %v1460
        %1487 = vmatmul.f32.gmra.mxu0 %v1466
        %v1488 = vpop.f32.mrf.mxu0
        %v1489 = vadd.f32 0.0, %v1488
        %1490 = vmatmul.f32.gmra.mxu0 %v1469
        %v1491 = vpop.f32.mrf.mxu0
        %v1492 = vadd.f32 0.0, %v1491
        %1493 = vdwg.mxu0
        %1494 = vrot.lane.b32.xlu0 %v1043, 80
        %v1495 = vpop.permute.xlu0 %1494
        %1496 = vrot.lane.b32.xlu0 %v1046, 80
        %v1497 = vpop.permute.xlu0 %1496
        %1498 = vrot.lane.b32.xlu0 %v1066, 112
        %v1499 = vpop.permute.xlu0 %1498
        %1500 = vrot.lane.b32.xlu0 %v1069, 112
        %v1501 = vpop.permute.xlu0 %1500
        %v1502 = vsel %vm1100, %v1495, 0
        %v1504 = vsel %vm1100, %v1497, 0
        %v1506 = vsel %vm1100, %v1499, 0
        %v1508 = vsel %vm1100, %v1501, 0
        %1510 = vmatpush.xpose.msra.mxu0 0.0
        %1511 = vmatpush.xpose.msra.mxu0 0.0
        %1512 = vmatpush.xpose.msra.mxu0 0.0
        %1513 = vmatpush.xpose.msra.mxu0 0.0
        %1514 = vmatpush.xpose.msra.mxu0 0.0
        %1515 = vmatpush.xpose.msra.mxu0 0.0
        %1516 = vmatpush.xpose.msra.mxu0 0.0
        %1517 = vmatpush.xpose.msra.mxu0 0.0
        %1518 = vmatpush.xpose.msra.mxu0 0.0
        %1519 = vmatpush.xpose.msra.mxu0 0.0
        %1520 = vmatpush.xpose.msra.mxu0 0.0
        %1521 = vmatpush.xpose.msra.mxu0 0.0
        %1522 = vmatpush.xpose.msra.mxu0 0.0
        %1523 = vmatpush.xpose.msra.mxu0 0.0
        %1524 = vmatpush.xpose.msra.mxu0 %v1508
        %1525 = vmatpush.xpose.msra.mxu0 %v1506
        %1526 = vmatmul.f32.gmra.mxu0 %v1502
        %v1527 = vpop.f32.mrf.mxu0
        %v1528 = vadd.f32 0.0, %v1527
        %1529 = vmatmul.f32.gmra.mxu0 %v1504
        %v1530 = vpop.f32.mrf.mxu0
        %v1531 = vadd.f32 0.0, %v1530
        %1532 = vdwg.mxu0
        %v1533 = vmul.f32 %v1528, 0.28867513
        %v1534 = vmul.f32 %v1531, 0.28867513
        %v1535 = vsel %vm859, %v1533, -inf
        %1536 = vmax.xlane.f32.xlu0 %v1535
        %v1537 = vpop.xlane.xlu0 %1536
        %v1538 = vsel %vm859, %v1534, -inf
        %1539 = vmax.xlane.f32.xlu0 %v1538
        %v1540 = vpop.xlane.xlu0 %1539
        %v1541 = vsub.f32 %v1533, %v1537
        %v1542 = vsub.f32 %v1534, %v1540
        %v1543 = vmul.f32 %v1541, 1.442695
        %v1544 = vpow.pop %v1543
        %v1545 = vmul.f32 %v1542, 1.442695
        %v1546 = vpow.pop %v1545
        %v1547 = vsel %vm859, %v1544, 0.0
        %1548 = vadd.xlane.f32.xlu0 %v1547
        %v1549 = vpop.xlane.xlu0 %1548
        %v1550 = vsel %vm859, %v1546, 0.0
        %1551 = vadd.xlane.f32.xlu0 %v1550
        %v1552 = vpop.xlane.xlu0 %1551
        %v1553 = vrcp.pop %v1549
        %v1554 = vrcp.pop %v1552
        %v1555 = vmul.f32 %v1544, %v1553
        %v1556 = vmul.f32 %v1546, %v1554
        %1557 = vrot.lane.b32.xlu0 %v1066, 16
        %v1558 = vpop.permute.xlu0 %1557
        %1559 = vrot.lane.b32.xlu0 %v1069, 16
        %v1560 = vpop.permute.xlu0 %1559
        %v1564 = vsel %vm859, %v1555, 0
        %v1567 = vsel %vm859, %v1556, 0
        %1569 = vmatpush.msra.mxu0 0.0
        %1570 = vmatpush.msra.mxu0 0.0
        %1571 = vmatpush.msra.mxu0 0.0
        %1572 = vmatpush.msra.mxu0 0.0
        %1573 = vmatpush.msra.mxu0 0.0
        %1574 = vmatpush.msra.mxu0 0.0
        %1575 = vmatpush.msra.mxu0 0.0
        %1576 = vmatpush.msra.mxu0 0.0
        %1577 = vmatpush.msra.mxu0 0.0
        %1578 = vmatpush.msra.mxu0 0.0
        %1579 = vmatpush.msra.mxu0 0.0
        %1580 = vmatpush.msra.mxu0 0.0
        %1581 = vmatpush.msra.mxu0 0.0
        %1582 = vmatpush.msra.mxu0 0.0
        %1583 = vmatpush.msra.mxu0 %v1560
        %1584 = vmatpush.msra.mxu0 %v1558
        %1585 = vmatmul.f32.gmra.mxu0 %v1564
        %v1586 = vpop.f32.mrf.mxu0
        %v1587 = vadd.f32 0.0, %v1586
        %1588 = vmatmul.f32.gmra.mxu0 %v1567
        %v1589 = vpop.f32.mrf.mxu0
        %v1590 = vadd.f32 0.0, %v1589
        %1591 = vdwg.mxu0
        %1592 = vrot.lane.b32.xlu0 %v1043, 68
        %v1593 = vpop.permute.xlu0 %1592
        %1594 = vrot.lane.b32.xlu0 %v1046, 68
        %v1595 = vpop.permute.xlu0 %1594
        %1596 = vrot.lane.b32.xlu0 %v1066, 100
        %v1597 = vpop.permute.xlu0 %1596
        %1598 = vrot.lane.b32.xlu0 %v1069, 100
        %v1599 = vpop.permute.xlu0 %1598
        %v1600 = vsel %vm1100, %v1593, 0
        %v1602 = vsel %vm1100, %v1595, 0
        %v1604 = vsel %vm1100, %v1597, 0
        %v1606 = vsel %vm1100, %v1599, 0
        %1608 = vmatpush.xpose.msra.mxu0 0.0
        %1609 = vmatpush.xpose.msra.mxu0 0.0
        %1610 = vmatpush.xpose.msra.mxu0 0.0
        %1611 = vmatpush.xpose.msra.mxu0 0.0
        %1612 = vmatpush.xpose.msra.mxu0 0.0
        %1613 = vmatpush.xpose.msra.mxu0 0.0
        %1614 = vmatpush.xpose.msra.mxu0 0.0
        %1615 = vmatpush.xpose.msra.mxu0 0.0
        %1616 = vmatpush.xpose.msra.mxu0 0.0
        %1617 = vmatpush.xpose.msra.mxu0 0.0
        %1618 = vmatpush.xpose.msra.mxu0 0.0
        %1619 = vmatpush.xpose.msra.mxu0 0.0
        %1620 = vmatpush.xpose.msra.mxu0 0.0
        %1621 = vmatpush.xpose.msra.mxu0 0.0
        %1622 = vmatpush.xpose.msra.mxu0 %v1606
        %1623 = vmatpush.xpose.msra.mxu0 %v1604
        %1624 = vmatmul.f32.gmra.mxu0 %v1600
        %v1625 = vpop.f32.mrf.mxu0
        %v1626 = vadd.f32 0.0, %v1625
        %1627 = vmatmul.f32.gmra.mxu0 %v1602
        %v1628 = vpop.f32.mrf.mxu0
        %v1629 = vadd.f32 0.0, %v1628
        %1630 = vdwg.mxu0
        %v1631 = vmul.f32 %v1626, 0.28867513
        %v1632 = vmul.f32 %v1629, 0.28867513
        %v1633 = vsel %vm859, %v1631, -inf
        %1634 = vmax.xlane.f32.xlu0 %v1633
        %v1635 = vpop.xlane.xlu0 %1634
        %v1636 = vsel %vm859, %v1632, -inf
        %1637 = vmax.xlane.f32.xlu0 %v1636
        %v1638 = vpop.xlane.xlu0 %1637
        %v1639 = vsub.f32 %v1631, %v1635
        %v1640 = vsub.f32 %v1632, %v1638
        %v1641 = vmul.f32 %v1639, 1.442695
        %v1642 = vpow.pop %v1641
        %v1643 = vmul.f32 %v1640, 1.442695
        %v1644 = vpow.pop %v1643
        %v1645 = vsel %vm859, %v1642, 0.0
        %1646 = vadd.xlane.f32.xlu0 %v1645
        %v1647 = vpop.xlane.xlu0 %1646
        %v1648 = vsel %vm859, %v1644, 0.0
        %1649 = vadd.xlane.f32.xlu0 %v1648
        %v1650 = vpop.xlane.xlu0 %1649
        %v1651 = vrcp.pop %v1647
        %v1652 = vrcp.pop %v1650
        %v1653 = vmul.f32 %v1642, %v1651
        %v1654 = vmul.f32 %v1644, %v1652
        %1657 = vrot.lane.b32.xlu0 %v1066, 4
        %v1658 = vpop.permute.xlu0 %1657
        %1659 = vrot.lane.b32.xlu0 %v1089, 4
        %v1660 = vpop.permute.xlu0 %1659
        %1661 = vrot.lane.b32.xlu0 %v1069, 4
        %v1662 = vpop.permute.xlu0 %1661
        %1663 = vrot.lane.b32.xlu0 %v1092, 4
        %v1664 = vpop.permute.xlu0 %1663
        %vm1665 = vcmask 31744
        %v1666 = vsel %vm1665, %v1658, %v1660
        %v1667 = vsel %vm1665, %v1662, %v1664
        %v1671 = vsel %vm859, %v1653, 0
        %v1674 = vsel %vm859, %v1654, 0
        %1676 = vmatpush.msra.mxu0 0.0
        %1677 = vmatpush.msra.mxu0 0.0
        %1678 = vmatpush.msra.mxu0 0.0
        %1679 = vmatpush.msra.mxu0 0.0
        %1680 = vmatpush.msra.mxu0 0.0
        %1681 = vmatpush.msra.mxu0 0.0
        %1682 = vmatpush.msra.mxu0 0.0
        %1683 = vmatpush.msra.mxu0 0.0
        %1684 = vmatpush.msra.mxu0 0.0
        %1685 = vmatpush.msra.mxu0 0.0
        %1686 = vmatpush.msra.mxu0 0.0
        %1687 = vmatpush.msra.mxu0 0.0
        %1688 = vmatpush.msra.mxu0 0.0
        %1689 = vmatpush.msra.mxu0 0.0
        %1690 = vmatpush.msra.mxu0 %v1667
        %1691 = vmatpush.msra.mxu0 %v1666
        %1692 = vmatmul.f32.gmra.mxu0 %v1671
        %v1693 = vpop.f32.mrf.mxu0
        %v1694 = vadd.f32 0.0, %v1693
        %1695 = vmatmul.f32.gmra.mxu0 %v1674
        %v1696 = vpop.f32.mrf.mxu0
        %v1697 = vadd.f32 0.0, %v1696
        %1698 = vdwg.mxu0
        %1699 = vrot.lane.b32.xlu0 %v1043, 56
        %v1700 = vpop.permute.xlu0 %1699
        %1701 = vrot.lane.b32.xlu0 %v1046, 56
        %v1702 = vpop.permute.xlu0 %1701
        %1703 = vrot.lane.b32.xlu0 %v1066, 88
        %v1704 = vpop.permute.xlu0 %1703
        %1705 = vrot.lane.b32.xlu0 %v1069, 88
        %v1706 = vpop.permute.xlu0 %1705
        %v1707 = vsel %vm1100, %v1700, 0
        %v1709 = vsel %vm1100, %v1702, 0
        %v1711 = vsel %vm1100, %v1704, 0
        %v1713 = vsel %vm1100, %v1706, 0
        %1715 = vmatpush.xpose.msra.mxu0 0.0
        %1716 = vmatpush.xpose.msra.mxu0 0.0
        %1717 = vmatpush.xpose.msra.mxu0 0.0
        %1718 = vmatpush.xpose.msra.mxu0 0.0
        %1719 = vmatpush.xpose.msra.mxu0 0.0
        %1720 = vmatpush.xpose.msra.mxu0 0.0
        %1721 = vmatpush.xpose.msra.mxu0 0.0
        %1722 = vmatpush.xpose.msra.mxu0 0.0
        %1723 = vmatpush.xpose.msra.mxu0 0.0
        %1724 = vmatpush.xpose.msra.mxu0 0.0
        %1725 = vmatpush.xpose.msra.mxu0 0.0
        %1726 = vmatpush.xpose.msra.mxu0 0.0
        %1727 = vmatpush.xpose.msra.mxu0 0.0
        %1728 = vmatpush.xpose.msra.mxu0 0.0
        %1729 = vmatpush.xpose.msra.mxu0 %v1713
        %1730 = vmatpush.xpose.msra.mxu0 %v1711
        %1731 = vmatmul.f32.gmra.mxu0 %v1707
        %v1732 = vpop.f32.mrf.mxu0
        %v1733 = vadd.f32 0.0, %v1732
        %1734 = vmatmul.f32.gmra.mxu0 %v1709
        %v1735 = vpop.f32.mrf.mxu0
        %v1736 = vadd.f32 0.0, %v1735
        %1737 = vdwg.mxu0
        %v1738 = vmul.f32 %v1733, 0.28867513
        %v1739 = vmul.f32 %v1736, 0.28867513
        %v1740 = vsel %vm859, %v1738, -inf
        %1741 = vmax.xlane.f32.xlu0 %v1740
        %v1742 = vpop.xlane.xlu0 %1741
        %v1743 = vsel %vm859, %v1739, -inf
        %1744 = vmax.xlane.f32.xlu0 %v1743
        %v1745 = vpop.xlane.xlu0 %1744
        %v1746 = vsub.f32 %v1738, %v1742
        %v1747 = vsub.f32 %v1739, %v1745
        %v1748 = vmul.f32 %v1746, 1.442695
        %v1749 = vpow.pop %v1748
        %v1750 = vmul.f32 %v1747, 1.442695
        %v1751 = vpow.pop %v1750
        %v1752 = vsel %vm859, %v1749, 0.0
        %1753 = vadd.xlane.f32.xlu0 %v1752
        %v1754 = vpop.xlane.xlu0 %1753
        %v1755 = vsel %vm859, %v1751, 0.0
        %1756 = vadd.xlane.f32.xlu0 %v1755
        %v1757 = vpop.xlane.xlu0 %1756
        %v1758 = vrcp.pop %v1754
        %v1759 = vrcp.pop %v1757
        %v1760 = vmul.f32 %v1749, %v1758
        %v1761 = vmul.f32 %v1751, %v1759
        %1762 = vrot.lane.b32.xlu0 %v1089, 120
        %v1763 = vpop.permute.xlu0 %1762
        %1764 = vrot.lane.b32.xlu0 %v1092, 120
        %v1765 = vpop.permute.xlu0 %1764
        %v1769 = vsel %vm859, %v1760, 0
        %v1772 = vsel %vm859, %v1761, 0
        %1774 = vmatpush.msra.mxu0 0.0
        %1775 = vmatpush.msra.mxu0 0.0
        %1776 = vmatpush.msra.mxu0 0.0
        %1777 = vmatpush.msra.mxu0 0.0
        %1778 = vmatpush.msra.mxu0 0.0
        %1779 = vmatpush.msra.mxu0 0.0
        %1780 = vmatpush.msra.mxu0 0.0
        %1781 = vmatpush.msra.mxu0 0.0
        %1782 = vmatpush.msra.mxu0 0.0
        %1783 = vmatpush.msra.mxu0 0.0
        %1784 = vmatpush.msra.mxu0 0.0
        %1785 = vmatpush.msra.mxu0 0.0
        %1786 = vmatpush.msra.mxu0 0.0
        %1787 = vmatpush.msra.mxu0 0.0
        %1788 = vmatpush.msra.mxu0 %v1765
        %1789 = vmatpush.msra.mxu0 %v1763
        %1790 = vmatmul.f32.gmra.mxu0 %v1769
        %v1791 = vpop.f32.mrf.mxu0
        %v1792 = vadd.f32 0.0, %v1791
        %1793 = vmatmul.f32.gmra.mxu0 %v1772
        %v1794 = vpop.f32.mrf.mxu0
        %v1795 = vadd.f32 0.0, %v1794
        %1796 = vdwg.mxu0
        %1797 = vrot.lane.b32.xlu0 %v1043, 44
        %v1798 = vpop.permute.xlu0 %1797
        %1799 = vrot.lane.b32.xlu0 %v1046, 44
        %v1800 = vpop.permute.xlu0 %1799
        %1801 = vrot.lane.b32.xlu0 %v1066, 76
        %v1802 = vpop.permute.xlu0 %1801
        %1803 = vrot.lane.b32.xlu0 %v1069, 76
        %v1804 = vpop.permute.xlu0 %1803
        %v1805 = vsel %vm1100, %v1798, 0
        %v1807 = vsel %vm1100, %v1800, 0
        %v1809 = vsel %vm1100, %v1802, 0
        %v1811 = vsel %vm1100, %v1804, 0
        %1813 = vmatpush.xpose.msra.mxu0 0.0
        %1814 = vmatpush.xpose.msra.mxu0 0.0
        %1815 = vmatpush.xpose.msra.mxu0 0.0
        %1816 = vmatpush.xpose.msra.mxu0 0.0
        %1817 = vmatpush.xpose.msra.mxu0 0.0
        %1818 = vmatpush.xpose.msra.mxu0 0.0
        %1819 = vmatpush.xpose.msra.mxu0 0.0
        %1820 = vmatpush.xpose.msra.mxu0 0.0
        %1821 = vmatpush.xpose.msra.mxu0 0.0
        %1822 = vmatpush.xpose.msra.mxu0 0.0
        %1823 = vmatpush.xpose.msra.mxu0 0.0
        %1824 = vmatpush.xpose.msra.mxu0 0.0
        %1825 = vmatpush.xpose.msra.mxu0 0.0
        %1826 = vmatpush.xpose.msra.mxu0 0.0
        %1827 = vmatpush.xpose.msra.mxu0 %v1811
        %1828 = vmatpush.xpose.msra.mxu0 %v1809
        %1829 = vmatmul.f32.gmra.mxu0 %v1805
        %v1830 = vpop.f32.mrf.mxu0
        %v1831 = vadd.f32 0.0, %v1830
        %1832 = vmatmul.f32.gmra.mxu0 %v1807
        %v1833 = vpop.f32.mrf.mxu0
        %v1834 = vadd.f32 0.0, %v1833
        %1835 = vdwg.mxu0
        %v1836 = vmul.f32 %v1831, 0.28867513
        %v1837 = vmul.f32 %v1834, 0.28867513
        %v1838 = vsel %vm859, %v1836, -inf
        %1839 = vmax.xlane.f32.xlu0 %v1838
        %v1840 = vpop.xlane.xlu0 %1839
        %v1841 = vsel %vm859, %v1837, -inf
        %1842 = vmax.xlane.f32.xlu0 %v1841
        %v1843 = vpop.xlane.xlu0 %1842
        %v1844 = vsub.f32 %v1836, %v1840
        %v1845 = vsub.f32 %v1837, %v1843
        %v1846 = vmul.f32 %v1844, 1.442695
        %v1847 = vpow.pop %v1846
        %v1848 = vmul.f32 %v1845, 1.442695
        %v1849 = vpow.pop %v1848
        %v1850 = vsel %vm859, %v1847, 0.0
        %1851 = vadd.xlane.f32.xlu0 %v1850
        %v1852 = vpop.xlane.xlu0 %1851
        %v1853 = vsel %vm859, %v1849, 0.0
        %1854 = vadd.xlane.f32.xlu0 %v1853
        %v1855 = vpop.xlane.xlu0 %1854
        %v1856 = vrcp.pop %v1852
        %v1857 = vrcp.pop %v1855
        %v1858 = vmul.f32 %v1847, %v1856
        %v1859 = vmul.f32 %v1849, %v1857
        %1860 = vrot.lane.b32.xlu0 %v1089, 108
        %v1861 = vpop.permute.xlu0 %1860
        %1862 = vrot.lane.b32.xlu0 %v1092, 108
        %v1863 = vpop.permute.xlu0 %1862
        %v1867 = vsel %vm859, %v1858, 0
        %v1870 = vsel %vm859, %v1859, 0
        %1872 = vmatpush.msra.mxu0 0.0
        %1873 = vmatpush.msra.mxu0 0.0
        %1874 = vmatpush.msra.mxu0 0.0
        %1875 = vmatpush.msra.mxu0 0.0
        %1876 = vmatpush.msra.mxu0 0.0
        %1877 = vmatpush.msra.mxu0 0.0
        %1878 = vmatpush.msra.mxu0 0.0
        %1879 = vmatpush.msra.mxu0 0.0
        %1880 = vmatpush.msra.mxu0 0.0
        %1881 = vmatpush.msra.mxu0 0.0
        %1882 = vmatpush.msra.mxu0 0.0
        %1883 = vmatpush.msra.mxu0 0.0
        %1884 = vmatpush.msra.mxu0 0.0
        %1885 = vmatpush.msra.mxu0 0.0
        %1886 = vmatpush.msra.mxu0 %v1863
        %1887 = vmatpush.msra.mxu0 %v1861
        %1888 = vmatmul.f32.gmra.mxu0 %v1867
        %v1889 = vpop.f32.mrf.mxu0
        %v1890 = vadd.f32 0.0, %v1889
        %1891 = vmatmul.f32.gmra.mxu0 %v1870
        %v1892 = vpop.f32.mrf.mxu0
        %v1893 = vadd.f32 0.0, %v1892
        %1894 = vdwg.mxu0
        %1897 = vrot.lane.b32.xlu0 %v1286, 12
        %v1898 = vpop.permute.xlu0 %1897
        %1899 = vrot.lane.b32.xlu0 %v1289, 12
        %v1900 = vpop.permute.xlu0 %1899
        %1905 = vrot.lane.b32.xlu0 %v1391, 24
        %v1906 = vpop.permute.xlu0 %1905
        %1907 = vrot.lane.b32.xlu0 %v1394, 24
        %v1908 = vpop.permute.xlu0 %1907
        %1913 = vrot.lane.b32.xlu0 %v1489, 36
        %v1914 = vpop.permute.xlu0 %1913
        %1915 = vrot.lane.b32.xlu0 %v1492, 36
        %v1916 = vpop.permute.xlu0 %1915
        %1921 = vrot.lane.b32.xlu0 %v1587, 48
        %v1922 = vpop.permute.xlu0 %1921
        %1923 = vrot.lane.b32.xlu0 %v1590, 48
        %v1924 = vpop.permute.xlu0 %1923
        %1929 = vrot.lane.b32.xlu0 %v1694, 60
        %v1930 = vpop.permute.xlu0 %1929
        %1931 = vrot.lane.b32.xlu0 %v1697, 60
        %v1932 = vpop.permute.xlu0 %1931
        %1937 = vrot.lane.b32.xlu0 %v1792, 72
        %v1938 = vpop.permute.xlu0 %1937
        %1939 = vrot.lane.b32.xlu0 %v1795, 72
        %v1940 = vpop.permute.xlu0 %1939
        %1945 = vrot.lane.b32.xlu0 %v1890, 84
        %v1946 = vpop.permute.xlu0 %1945
        %1947 = vrot.lane.b32.xlu0 %v1893, 84
        %v1948 = vpop.permute.xlu0 %1947
        %v1951 = vsel %vm1100, %v1188, %v1898
        %v1952 = vsel %vm1100, %v1191, %v1900
        %vm1953 = vcmask 195584
        %v1954 = vsel %vm1953, %v1951, %v1906
        %v1955 = vsel %vm1953, %v1952, %v1908
        %vm1956 = vcmask 293888
        %v1957 = vsel %vm1956, %v1954, %v1914
        %v1958 = vsel %vm1956, %v1955, %v1916
        %vm1959 = vcmask 392192
        %v1960 = vsel %vm1959, %v1957, %v1922
        %v1961 = vsel %vm1959, %v1958, %v1924
        %vm1962 = vcmask 490496
        %v1963 = vsel %vm1962, %v1960, %v1930
        %v1964 = vsel %vm1962, %v1961, %v1932
        %vm1965 = vcmask 588800
        %v1966 = vsel %vm1965, %v1963, %v1938
        %v1967 = vsel %vm1965, %v1964, %v1940
        %vm1968 = vcmask 687104
        %v1969 = vsel %vm1968, %v1966, %v1946
        %v1970 = vsel %vm1968, %v1967, %v1948
        %v1971 = vld [vmem:[%s8] sm:$0xff]
        %v1972 = vld [vmem:[%s8 + $0x8] sm:$0xff]
        %v1973 = vld [vmem:[%s8 + $0x10] sm:$0xff]
        %v1974 = vld [vmem:[%s8 + $0x18] sm:$0xff]
        %v1975 = vld [vmem:[%s8 + $0x20] sm:$0xff]
        %v1976 = vld [vmem:[%s8 + $0x28] sm:$0xff]
        %v1977 = vld [vmem:[%s8 + $0x30] sm:$0xff]
        %v1978 = vld [vmem:[%s8 + $0x38] sm:$0xff]
        %v1979 = vld [vmem:[%s8 + $0x40] sm:$0xff]
        %v1980 = vld [vmem:[%s8 + $0x48] sm:$0xff]
        %v1981 = vld [vmem:[%s8 + $0x50] sm:$0xff]
        %v1982 = vld [vmem:[%s8 + $0x58] sm:$0xff]
        %v1983 = vld [vmem:[%s9] sm:$0x1]
        %v1985 = vperm.slane %v1983, 0
        %v1988 = vsel %vm560, %v1969, 0
        %v1991 = vsel %vm560, %v1970, 0
        %1993 = vmatpush.msra.mxu0 0.0
        %1994 = vmatpush.msra.mxu0 0.0
        %1995 = vmatpush.msra.mxu0 0.0
        %1996 = vmatpush.msra.mxu0 0.0
        %1997 = vmatpush.msra.mxu0 %v1982
        %1998 = vmatpush.msra.mxu0 %v1981
        %1999 = vmatpush.msra.mxu0 %v1980
        %2000 = vmatpush.msra.mxu0 %v1979
        %2001 = vmatpush.msra.mxu0 %v1978
        %2002 = vmatpush.msra.mxu0 %v1977
        %2003 = vmatpush.msra.mxu0 %v1976
        %2004 = vmatpush.msra.mxu0 %v1975
        %2005 = vmatpush.msra.mxu0 %v1974
        %2006 = vmatpush.msra.mxu0 %v1973
        %2007 = vmatpush.msra.mxu0 %v1972
        %2008 = vmatpush.msra.mxu0 %v1971
        %2009 = vmatmul.f32.gmra.mxu0 %v1988
        %v2010 = vpop.f32.mrf.mxu0
        %v2011 = vadd.f32 %v1985, %v2010
        %2012 = vmatmul.f32.gmra.mxu0 %v1991
        %v2013 = vpop.f32.mrf.mxu0
        %v2014 = vadd.f32 %v1985, %v2013
        %2015 = vdwg.mxu0
        %v2016 = vadd.f32 %v2011, %v907
        %v2017 = vadd.f32 %v2014, %v910
        %v2018 = vld [vmem:[%s10] sm:$0x1]
        %v2019 = vld [vmem:[%s11] sm:$0x1]
        %v2020 = vsel %vm560, %v2016, 0.0
        %2021 = vadd.xlane.f32.xlu0 %v2020
        %v2022 = vpop.xlane.xlu0 %2021
        %v2023 = vsel %vm560, %v2017, 0.0
        %2024 = vadd.xlane.f32.xlu0 %v2023
        %v2025 = vpop.xlane.xlu0 %2024
        %v2026 = vmul.f32 %v2022, %v926
        %v2027 = vmul.f32 %v2025, %v926
        %v2028 = vsub.f32 %v2016, %v2026
        %v2029 = vsub.f32 %v2017, %v2027
        %v2030 = vmul.f32 %v2028, %v2028
        %v2031 = vmul.f32 %v2029, %v2029
        %v2032 = vsel %vm560, %v2030, 0.0
        %2033 = vadd.xlane.f32.xlu0 %v2032
        %v2034 = vpop.xlane.xlu0 %2033
        %v2035 = vsel %vm560, %v2031, 0.0
        %2036 = vadd.xlane.f32.xlu0 %v2035
        %v2037 = vpop.xlane.xlu0 %2036
        %v2038 = vmul.f32 %v2034, %v926
        %v2039 = vmul.f32 %v2037, %v926
        %v2040 = vadd.f32 %v2038, 1e-06
        %v2041 = vadd.f32 %v2039, 1e-06
        %v2042 = vrsqrt.pop %v2040
        %v2043 = vmul.f32 %v2042, %v2040
        %v2044 = vmul.f32 %v2043, %v2042
        %v2045 = vmul.f32 0.5, %v2044
        %v2046 = vsub.f32 1.5, %v2045
        %v2047 = vmul.f32 %v2042, %v2046
        %vm2048 = vweird.f32 %v2040
        %vm2049 = vweird.f32 %v2042
        %vm2050 = vmor %vm2048, %vm2049
        %v2051 = vsel %vm2050, %v2042, %v2047
        %v2052 = vrsqrt.pop %v2041
        %v2053 = vmul.f32 %v2052, %v2041
        %v2054 = vmul.f32 %v2053, %v2052
        %v2055 = vmul.f32 0.5, %v2054
        %v2056 = vsub.f32 1.5, %v2055
        %v2057 = vmul.f32 %v2052, %v2056
        %vm2058 = vweird.f32 %v2041
        %vm2059 = vweird.f32 %v2052
        %vm2060 = vmor %vm2058, %vm2059
        %v2061 = vsel %vm2060, %v2052, %v2057
        %v2062 = vmul.f32 %v2028, %v2051
        %v2063 = vmul.f32 %v2029, %v2061
        %v2065 = vperm.slane %v2018, 0
        %v2067 = vmul.f32 %v2062, %v2065
        %v2068 = vmul.f32 %v2063, %v2065
        %v2070 = vperm.slane %v2019, 0
        %v2072 = vadd.f32 %v2067, %v2070
        %v2073 = vadd.f32 %v2068, %v2070
        %v2074 = vld [vmem:[%s12] sm:$0xff]
        %v2075 = vld [vmem:[%s12 + $0x8] sm:$0xff]
        %v2076 = vld [vmem:[%s12 + $0x10] sm:$0xff]
        %v2077 = vld [vmem:[%s12 + $0x18] sm:$0xff]
        %v2078 = vld [vmem:[%s12 + $0x20] sm:$0xff]
        %v2079 = vld [vmem:[%s12 + $0x28] sm:$0xff]
        %v2080 = vld [vmem:[%s12 + $0x30] sm:$0xff]
        %v2081 = vld [vmem:[%s12 + $0x38] sm:$0xff]
        %v2082 = vld [vmem:[%s12 + $0x40] sm:$0xff]
        %v2083 = vld [vmem:[%s12 + $0x48] sm:$0xff]
        %v2084 = vld [vmem:[%s12 + $0x50] sm:$0xff]
        %v2085 = vld [vmem:[%s12 + $0x58] sm:$0xff]
        %v2086 = vld [vmem:[%s12 + $0x60] sm:$0xff]
        %v2087 = vld [vmem:[%s12 + $0x68] sm:$0xff]
        %v2088 = vld [vmem:[%s12 + $0x70] sm:$0xff]
        %v2089 = vld [vmem:[%s12 + $0x78] sm:$0xff]
        %v2090 = vld [vmem:[%s12 + $0x80] sm:$0xff]
        %v2091 = vld [vmem:[%s12 + $0x88] sm:$0xff]
        %v2092 = vld [vmem:[%s12 + $0x90] sm:$0xff]
        %v2093 = vld [vmem:[%s12 + $0x98] sm:$0xff]
        %v2094 = vld [vmem:[%s12 + $0xa0] sm:$0xff]
        %v2095 = vld [vmem:[%s12 + $0xa8] sm:$0xff]
        %v2096 = vld [vmem:[%s12 + $0xb0] sm:$0xff]
        %v2097 = vld [vmem:[%s12 + $0xb8] sm:$0xff]
        %v2098 = vld [vmem:[%s12 + $0xc0] sm:$0xff]
        %v2099 = vld [vmem:[%s12 + $0xc8] sm:$0xff]
        %v2100 = vld [vmem:[%s12 + $0xd0] sm:$0xff]
        %v2101 = vld [vmem:[%s12 + $0xd8] sm:$0xff]
        %v2102 = vld [vmem:[%s12 + $0xe0] sm:$0xff]
        %v2103 = vld [vmem:[%s12 + $0xe8] sm:$0xff]
        %v2104 = vld [vmem:[%s12 + $0xf0] sm:$0xff]
        %v2105 = vld [vmem:[%s12 + $0xf8] sm:$0xff]
        %v2106 = vld [vmem:[%s12 + $0x100] sm:$0xff]
        %v2107 = vld [vmem:[%s12 + $0x108] sm:$0xff]
        %v2108 = vld [vmem:[%s12 + $0x110] sm:$0xff]
        %v2109 = vld [vmem:[%s12 + $0x118] sm:$0xff]
        %v2110 = vld [vmem:[%s13] sm:$0x7]
        %v2112 = vperm.slane %v2110, 0
        %v2113 = vperm.slane %v2110, 1
        %v2114 = vperm.slane %v2110, 2
        %v2119 = vsel %vm560, %v2072, 0
        %v2122 = vsel %vm560, %v2073, 0
        %2124 = vmatpush.msra.mxu0 0.0
        %2125 = vmatpush.msra.mxu0 0.0
        %2126 = vmatpush.msra.mxu0 0.0
        %2127 = vmatpush.msra.mxu0 0.0
        %2128 = vmatpush.msra.mxu0 %v2107
        %2129 = vmatpush.msra.mxu0 %v2104
        %2130 = vmatpush.msra.mxu0 %v2101
        %2131 = vmatpush.msra.mxu0 %v2098
        %2132 = vmatpush.msra.mxu0 %v2095
        %2133 = vmatpush.msra.mxu0 %v2092
        %2134 = vmatpush.msra.mxu0 %v2089
        %2135 = vmatpush.msra.mxu0 %v2086
        %2136 = vmatpush.msra.mxu0 %v2083
        %2137 = vmatpush.msra.mxu0 %v2080
        %2138 = vmatpush.msra.mxu0 %v2077
        %2139 = vmatpush.msra.mxu0 %v2074
        %2140 = vmatmul.f32.gmra.mxu0 %v2119
        %v2141 = vpop.f32.mrf.mxu0
        %v2142 = vadd.f32 %v2112, %v2141
        %2143 = vmatmul.f32.gmra.mxu0 %v2122
        %v2144 = vpop.f32.mrf.mxu0
        %v2145 = vadd.f32 %v2112, %v2144
        %2146 = vdwg.mxu0
        %2147 = vmatpush.msra.mxu0 0.0
        %2148 = vmatpush.msra.mxu0 0.0
        %2149 = vmatpush.msra.mxu0 0.0
        %2150 = vmatpush.msra.mxu0 0.0
        %2151 = vmatpush.msra.mxu0 %v2108
        %2152 = vmatpush.msra.mxu0 %v2105
        %2153 = vmatpush.msra.mxu0 %v2102
        %2154 = vmatpush.msra.mxu0 %v2099
        %2155 = vmatpush.msra.mxu0 %v2096
        %2156 = vmatpush.msra.mxu0 %v2093
        %2157 = vmatpush.msra.mxu0 %v2090
        %2158 = vmatpush.msra.mxu0 %v2087
        %2159 = vmatpush.msra.mxu0 %v2084
        %2160 = vmatpush.msra.mxu0 %v2081
        %2161 = vmatpush.msra.mxu0 %v2078
        %2162 = vmatpush.msra.mxu0 %v2075
        %2163 = vmatmul.f32.gmra.mxu0 %v2119
        %v2164 = vpop.f32.mrf.mxu0
        %v2165 = vadd.f32 %v2113, %v2164
        %2166 = vmatmul.f32.gmra.mxu0 %v2122
        %v2167 = vpop.f32.mrf.mxu0
        %v2168 = vadd.f32 %v2113, %v2167
        %2169 = vdwg.mxu0
        %2170 = vmatpush.msra.mxu0 0.0
        %2171 = vmatpush.msra.mxu0 0.0
        %2172 = vmatpush.msra.mxu0 0.0
        %2173 = vmatpush.msra.mxu0 0.0
        %2174 = vmatpush.msra.mxu0 %v2109
        %2175 = vmatpush.msra.mxu0 %v2106
        %2176 = vmatpush.msra.mxu0 %v2103
        %2177 = vmatpush.msra.mxu0 %v2100
        %2178 = vmatpush.msra.mxu0 %v2097
        %2179 = vmatpush.msra.mxu0 %v2094
        %2180 = vmatpush.msra.mxu0 %v2091
        %2181 = vmatpush.msra.mxu0 %v2088
        %2182 = vmatpush.msra.mxu0 %v2085
        %2183 = vmatpush.msra.mxu0 %v2082
        %2184 = vmatpush.msra.mxu0 %v2079
        %2185 = vmatpush.msra.mxu0 %v2076
        %2186 = vmatmul.f32.gmra.mxu0 %v2119
        %v2187 = vpop.f32.mrf.mxu0
        %v2188 = vadd.f32 %v2114, %v2187
        %2189 = vmatmul.f32.gmra.mxu0 %v2122
        %v2190 = vpop.f32.mrf.mxu0
        %v2191 = vadd.f32 %v2114, %v2190
        %2192 = vdwg.mxu0
        %v2193 = vmul.f32 %v2142, 0.5
        %v2194 = vmul.f32 %v2165, 0.5
        %v2195 = vmul.f32 %v2188, 0.5
        %v2196 = vmul.f32 %v2145, 0.5
        %v2197 = vmul.f32 %v2168, 0.5
        %v2198 = vmul.f32 %v2191, 0.5
        %v2199 = vmul.f32 %v2142, 0.044715
        %v2200 = vmul.f32 %v2165, 0.044715
        %v2201 = vmul.f32 %v2188, 0.044715
        %v2202 = vmul.f32 %v2145, 0.044715
        %v2203 = vmul.f32 %v2168, 0.044715
        %v2204 = vmul.f32 %v2191, 0.044715
        %v2205 = vmul.f32 %v2199, %v2142
        %v2206 = vmul.f32 %v2200, %v2165
        %v2207 = vmul.f32 %v2201, %v2188
        %v2208 = vmul.f32 %v2202, %v2145
        %v2209 = vmul.f32 %v2203, %v2168
        %v2210 = vmul.f32 %v2204, %v2191
        %v2211 = vmul.f32 %v2205, %v2142
        %v2212 = vmul.f32 %v2206, %v2165
        %v2213 = vmul.f32 %v2207, %v2188
        %v2214 = vmul.f32 %v2208, %v2145
        %v2215 = vmul.f32 %v2209, %v2168
        %v2216 = vmul.f32 %v2210, %v2191
        %v2217 = vadd.f32 %v2142, %v2211
        %v2218 = vadd.f32 %v2165, %v2212
        %v2219 = vadd.f32 %v2188, %v2213
        %v2220 = vadd.f32 %v2145, %v2214
        %v2221 = vadd.f32 %v2168, %v2215
        %v2222 = vadd.f32 %v2191, %v2216
        %v2223 = vmul.f32 %v2217, 0.7978846
        %v2224 = vmul.f32 %v2218, 0.7978846
        %v2225 = vmul.f32 %v2219, 0.7978846
        %v2226 = vmul.f32 %v2220, 0.7978846
        %v2227 = vmul.f32 %v2221, 0.7978846
        %v2228 = vmul.f32 %v2222, 0.7978846
        %v2229 = vtanh.pop %v2223
        %v2230 = vtanh.pop %v2224
        %v2231 = vtanh.pop %v2225
        %v2232 = vtanh.pop %v2226
        %v2233 = vtanh.pop %v2227
        %v2234 = vtanh.pop %v2228
        %v2235 = vadd.f32 %v2229, 1.0
        %v2236 = vadd.f32 %v2230, 1.0
        %v2237 = vadd.f32 %v2231, 1.0
        %v2238 = vadd.f32 %v2232, 1.0
        %v2239 = vadd.f32 %v2233, 1.0
        %v2240 = vadd.f32 %v2234, 1.0
        %v2241 = vmul.f32 %v2193, %v2235
        %v2242 = vmul.f32 %v2194, %v2236
        %v2243 = vmul.f32 %v2195, %v2237
        %v2244 = vmul.f32 %v2196, %v2238
        %v2245 = vmul.f32 %v2197, %v2239
        %v2246 = vmul.f32 %v2198, %v2240
        %v2247 = vld [vmem:[%s14] sm:$0xff]
        %v2248 = vld [vmem:[%s14 + $0x8] sm:$0xff]
        %v2249 = vld [vmem:[%s14 + $0x10] sm:$0xff]
        %v2250 = vld [vmem:[%s14 + $0x18] sm:$0xff]
        %v2251 = vld [vmem:[%s14 + $0x20] sm:$0xff]
        %v2252 = vld [vmem:[%s14 + $0x28] sm:$0xff]
        %v2253 = vld [vmem:[%s14 + $0x30] sm:$0xff]
        %v2254 = vld [vmem:[%s14 + $0x38] sm:$0xff]
        %v2255 = vld [vmem:[%s14 + $0x40] sm:$0xff]
        %v2256 = vld [vmem:[%s14 + $0x48] sm:$0xff]
        %v2257 = vld [vmem:[%s14 + $0x50] sm:$0xff]
        %v2258 = vld [vmem:[%s14 + $0x58] sm:$0xff]
        %v2259 = vld [vmem:[%s14 + $0x60] sm:$0xff]
        %v2260 = vld [vmem:[%s14 + $0x68] sm:$0xff]
        %v2261 = vld [vmem:[%s14 + $0x70] sm:$0xff]
        %v2262 = vld [vmem:[%s14 + $0x78] sm:$0xff]
        %v2263 = vld [vmem:[%s14 + $0x80] sm:$0xff]
        %v2264 = vld [vmem:[%s14 + $0x88] sm:$0xff]
        %v2265 = vld [vmem:[%s14 + $0x90] sm:$0xff]
        %v2266 = vld [vmem:[%s14 + $0x98] sm:$0xff]
        %v2267 = vld [vmem:[%s14 + $0xa0] sm:$0xff]
        %v2268 = vld [vmem:[%s14 + $0xa8] sm:$0xff]
        %v2269 = vld [vmem:[%s14 + $0xb0] sm:$0xff]
        %v2270 = vld [vmem:[%s14 + $0xb8] sm:$0xff]
        %v2271 = vld [vmem:[%s14 + $0xc0] sm:$0xff]
        %v2272 = vld [vmem:[%s14 + $0xc8] sm:$0xff]
        %v2273 = vld [vmem:[%s14 + $0xd0] sm:$0xff]
        %v2274 = vld [vmem:[%s14 + $0xd8] sm:$0xff]
        %v2275 = vld [vmem:[%s14 + $0xe0] sm:$0xff]
        %v2276 = vld [vmem:[%s14 + $0xe8] sm:$0xff]
        %v2277 = vld [vmem:[%s14 + $0xf0] sm:$0xff]
        %v2278 = vld [vmem:[%s14 + $0xf8] sm:$0xff]
        %v2279 = vld [vmem:[%s14 + $0x100] sm:$0xff]
        %v2280 = vld [vmem:[%s14 + $0x108] sm:$0xff]
        %v2281 = vld [vmem:[%s14 + $0x110] sm:$0xff]
        %v2282 = vld [vmem:[%s14 + $0x118] sm:$0xff]
        %v2283 = vld [vmem:[%s14 + $0x120] sm:$0xff]
        %v2284 = vld [vmem:[%s14 + $0x128] sm:$0xff]
        %v2285 = vld [vmem:[%s14 + $0x130] sm:$0xff]
        %v2286 = vld [vmem:[%s14 + $0x138] sm:$0xff]
        %v2287 = vld [vmem:[%s14 + $0x140] sm:$0xff]
        %v2288 = vld [vmem:[%s14 + $0x148] sm:$0xff]
        %v2289 = vld [vmem:[%s14 + $0x150] sm:$0xff]
        %v2290 = vld [vmem:[%s14 + $0x158] sm:$0xff]
        %v2291 = vld [vmem:[%s14 + $0x160] sm:$0xff]
        %v2292 = vld [vmem:[%s14 + $0x168] sm:$0xff]
        %v2293 = vld [vmem:[%s14 + $0x170] sm:$0xff]
        %v2294 = vld [vmem:[%s14 + $0x178] sm:$0xff]
        %v2295 = vld [vmem:[%s15] sm:$0x1]
        %v2297 = vperm.slane %v2295, 0
        %2299 = vmatpush.msra.mxu0 %v2262
        %2300 = vmatpush.msra.mxu0 %v2261
        %2301 = vmatpush.msra.mxu0 %v2260
        %2302 = vmatpush.msra.mxu0 %v2259
        %2303 = vmatpush.msra.mxu0 %v2258
        %2304 = vmatpush.msra.mxu0 %v2257
        %2305 = vmatpush.msra.mxu0 %v2256
        %2306 = vmatpush.msra.mxu0 %v2255
        %2307 = vmatpush.msra.mxu0 %v2254
        %2308 = vmatpush.msra.mxu0 %v2253
        %2309 = vmatpush.msra.mxu0 %v2252
        %2310 = vmatpush.msra.mxu0 %v2251
        %2311 = vmatpush.msra.mxu0 %v2250
        %2312 = vmatpush.msra.mxu0 %v2249
        %2313 = vmatpush.msra.mxu0 %v2248
        %2314 = vmatpush.msra.mxu0 %v2247
        %2315 = vmatmul.f32.gmra.mxu0 %v2241
        %v2316 = vpop.f32.mrf.mxu0
        %v2317 = vadd.f32 %v2297, %v2316
        %2318 = vmatmul.f32.gmra.mxu0 %v2244
        %v2319 = vpop.f32.mrf.mxu0
        %v2320 = vadd.f32 %v2297, %v2319
        %2321 = vdwg.mxu0
        %2322 = vmatpush.msra.mxu0 %v2278
        %2323 = vmatpush.msra.mxu0 %v2277
        %2324 = vmatpush.msra.mxu0 %v2276
        %2325 = vmatpush.msra.mxu0 %v2275
        %2326 = vmatpush.msra.mxu0 %v2274
        %2327 = vmatpush.msra.mxu0 %v2273
        %2328 = vmatpush.msra.mxu0 %v2272
        %2329 = vmatpush.msra.mxu0 %v2271
        %2330 = vmatpush.msra.mxu0 %v2270
        %2331 = vmatpush.msra.mxu0 %v2269
        %2332 = vmatpush.msra.mxu0 %v2268
        %2333 = vmatpush.msra.mxu0 %v2267
        %2334 = vmatpush.msra.mxu0 %v2266
        %2335 = vmatpush.msra.mxu0 %v2265
        %2336 = vmatpush.msra.mxu0 %v2264
        %2337 = vmatpush.msra.mxu0 %v2263
        %2338 = vmatmul.f32.gmra.mxu0 %v2242
        %v2339 = vpop.f32.mrf.mxu0
        %v2340 = vadd.f32 %v2317, %v2339
        %2341 = vmatmul.f32.gmra.mxu0 %v2245
        %v2342 = vpop.f32.mrf.mxu0
        %v2343 = vadd.f32 %v2320, %v2342
        %2344 = vdwg.mxu0
        %2345 = vmatpush.msra.mxu0 %v2294
        %2346 = vmatpush.msra.mxu0 %v2293
        %2347 = vmatpush.msra.mxu0 %v2292
        %2348 = vmatpush.msra.mxu0 %v2291
        %2349 = vmatpush.msra.mxu0 %v2290
        %2350 = vmatpush.msra.mxu0 %v2289
        %2351 = vmatpush.msra.mxu0 %v2288
        %2352 = vmatpush.msra.mxu0 %v2287
        %2353 = vmatpush.msra.mxu0 %v2286
        %2354 = vmatpush.msra.mxu0 %v2285
        %2355 = vmatpush.msra.mxu0 %v2284
        %2356 = vmatpush.msra.mxu0 %v2283
        %2357 = vmatpush.msra.mxu0 %v2282
        %2358 = vmatpush.msra.mxu0 %v2281
        %2359 = vmatpush.msra.mxu0 %v2280
        %2360 = vmatpush.msra.mxu0 %v2279
        %2361 = vmatmul.f32.gmra.mxu0 %v2243
        %v2362 = vpop.f32.mrf.mxu0
        %v2363 = vadd.f32 %v2340, %v2362
        %2364 = vmatmul.f32.gmra.mxu0 %v2246
        %v2365 = vpop.f32.mrf.mxu0
        %v2366 = vadd.f32 %v2343, %v2365
        %2367 = vdwg.mxu0
        %v2368 = vadd.f32 %v2016, %v2363
        %v2369 = vadd.f32 %v2017, %v2366
        %2370 = vst.msk [vmem:[%s514] sm:$0xff] %vm560, %v2368
        %2371 = vst.msk [vmem:[%s514 + $0x8] sm:$0xff] %vm560, %v2369
        %s2372 = sand.u32 %s379, 1
        %s2373 = scalar_lea.sflag [#allocation4], %s2372
        %s2374 = sand.u32 %s379, 1
        %s2375 = smul.addr %s2374, 16
        %s2376 = scalar_lea.vmem [#allocation3], %s2375
        // Predicated region
        $region85: #{ee_block_forward.1} parent=83 // pred_check
          %p2377 = pneg %p389
        $region86: #{ee_block_forward.1} parent=83 // pred_check_branch
          %2379 = sbr.rel (%p2377) target = $region88
        $region87: #{ee_block_forward.1} parent=83 // pred_region
          %2381 = vsyncadd %s2373, 0
          %s2382 = smul.addr %s30, 2
          %s2383 = smul.addr %s2382, 8
          %s2384 = scalar_lea.hbm %s16, %s2383
          %s2385 = sshll.u32 %s2376, 4
          %s2386 = int_to_ptr.vmem [resolvable:$true] %s2385
          %s2387 = sshll.u32 %s2384, 4
          %s2388 = int_to_ptr.hbm [resolvable:$true] %s2387
          %2393 = dma.vmem_to_hbm [thread:$0]  %s2386, 256, %s2388, %s2373, 128, 128, 8
        $region88: #{ee_block_forward.1} parent=83 // pred_fallthru
          _
      $region84: #{ee_block_forward.1} parent=5 // pred_fallthru
        _
      %p2394 = scmp.le.s32.totalorder 2, %s25
      // Predicated region
      $region89: #{ee_block_forward.1} parent=5 // pred_check
        %p2395 = pneg %p2394
      $region90: #{ee_block_forward.1} parent=5 // pred_check_branch
        %2397 = sbr.rel (%p2395) target = $region92
      $region91: #{ee_block_forward.1} parent=5 // pred_region
        %s2398 = ssub.s32 %s25, 2
        // Predicated region
        $region93: #{ee_block_forward.1} parent=91 // pred_check
          %p2399 = pneg %p395
        $region94: #{ee_block_forward.1} parent=91 // pred_check_branch
          %2401 = sbr.rel (%p2399) target = $region96
        $region95: #{ee_block_forward.1} parent=91 // pred_region
          %s2402 = sand.u32 %s380, 1
          %s2403 = scalar_lea.sflag [#allocation4], %s2402
          %s2404 = sand.u32 %s380, 1
          %s2405 = smul.addr %s2404, 16
          %s2406 = scalar_lea.vmem [#allocation3], %s2405
          %2408 = dma.done %s2403, 256
        $region96: #{ee_block_forward.1} parent=91 // pred_fallthru
          _
      $region92: #{ee_block_forward.1} parent=5 // pred_fallthru
        _
    $region6: #{ee_block_forward.1} parent=1 // loop_footer
      %s29 = sadd.s32 1, %s25
    $region7: #{ee_block_forward.1} parent=1 // loop_footer_branch
      %24 = sbr.rel target = $region3
    $region8: #{ee_block_forward.1} parent=1 // loop_exit
      _
    %2409 = vsyncpa [#allocation4], 1
    %s2410 = scalar_lea.sflag [#allocation4], 1
    %2411 = vsyncpa %s2410, 1

</llo_original>
